<compile_context>
chip_gen: v7x
topology: tpu7x:2x2x1
jax: 0.10.0
libtpu: 0.0.40
codegen_flags: <defaults>
</compile_context>

<pallas_src>
import jax
import jax.numpy as jnp
from jax.experimental import pallas as pl
from jax.experimental.pallas import tpu as pltpu

EPS = 1e-8


def _round_up(n, m):
    return ((n + m - 1) // m) * m


# ----------------------------- VMEM accounting ------------------------------ #

def _vmem_limit_bytes():
    try:
        cap = int(pltpu.get_tpu_info().vmem_capacity_bytes)
    except Exception:
        cap = 0
    if cap <= 0:
        cap = 64 * 1024 * 1024          # conservative (v7x-sized) fallback
    # leave headroom for Mosaic-internal scratch / compiler temporaries
    return min(cap * 3 // 4, 112 * 1024 * 1024)


def _buf_bytes(shape, dtype):
    # Padded VMEM footprint of ONE buffer of `shape` under (8,128)-style tiling.
    itemsize = jnp.dtype(dtype).itemsize
    sub = {4: 8, 2: 16, 1: 32}.get(itemsize, 8)
    dims = tuple(shape) if len(shape) >= 2 else (1,) * (2 - len(shape)) + tuple(shape)
    lead = 1
    for d in dims[:-2]:
        lead *= int(d)
    return lead * _round_up(int(dims[-2]), sub) * _round_up(int(dims[-1]), 128) * itemsize


def _conv_vmem_footprint(th, iw, cin, fp, x_dtype, out_dtype, fuse_rgb, has_prev, o):
    tot = 0
    tot += 2 * _buf_bytes((th, iw + 2, cin), x_dtype)           # main row window
    tot += 2 * 2 * _buf_bytes((1, iw + 2, cin), x_dtype)        # two 1-row halo blocks
    tot += 2 * _buf_bytes((9, cin, fp), jnp.bfloat16)           # conv taps (bf16)
    tot += 2 * _buf_bytes((cin, 1), jnp.float32)                # style
    tot += 2 * _buf_bytes((th, iw), jnp.float32)                # noise map
    tot += 2 * 2 * _buf_bytes((1, fp), jnp.float32)             # noise w / b
    tot += 2 * _buf_bytes((th * iw, fp), out_dtype)             # conv output
    if fuse_rgb:
        tot += 2 * _buf_bytes((fp, o), jnp.bfloat16)            # rgb weight
        tot += 2 * _buf_bytes((fp, 1), jnp.float32)             # rgb style
        tot += 2 * _buf_bytes((th * iw, o), jnp.float32)        # rgb output
        if has_prev:
            tot += 2 * _buf_bytes((th * iw, o), jnp.float32)    # prev rgb
    tot += _buf_bytes((9 * cin, fp), jnp.bfloat16)              # wmod scratch (single)
    tot += _buf_bytes((th * iw, 9 * cin), jnp.bfloat16)         # im2col scratch (single)
    return tot


def _pick_row_tile(h, iw, cin, fp, x_dtype, out_dtype, fuse_rgb, has_prev, o, budget):
    cands = [t for t in range(h, 0, -1) if h % t == 0 and (t == h or t % 8 == 0)]
    for t in cands:
        if _conv_vmem_footprint(t, iw, cin, fp, x_dtype, out_dtype,
                                fuse_rgb, has_prev, o) <= budget:
            return t
    return cands[-1]


# ----------------------------- Pallas kernel -------------------------------- #

def _make_conv_kernel(th, iw, cin, fp, fuse_rgb, has_prev):
    def kernel(*refs):
        xa, xb0, xb1, w_ref, style_ref, nmap_ref, nw_ref, nb_ref = refs[:8]
        rest = list(refs[8:])
        if fuse_rgb:
            rgbw_ref = rest.pop(0)
            rgbs_ref = rest.pop(0)
            prev_ref = rest.pop(0) if has_prev else None
            out_ref = rest.pop(0)
            rgb_ref = rest.pop(0)
        else:
            out_ref = rest.pop(0)
            rgb_ref = None
        wmod_ref, col_ref = rest

        t = pl.program_id(1)

        # Modulate + demodulate the conv weights once per batch sample (row tile 0);
        # the bf16 result persists in VMEM scratch across the remaining row tiles.
        @pl.when(t == 0)
        def _():
            wm = w_ref[...].astype(jnp.float32) * (style_ref[...] + 1.0)  # (9,cin,fp)
            sq = jnp.sum(wm * wm, axis=0)                                 # (cin,fp)
            d = jax.lax.rsqrt(jnp.sum(sq, axis=0, keepdims=True) + EPS)   # (1,fp)
            wmb = (wm * d).astype(jnp.bfloat16)
            for k in range(9):
                wmod_ref[k * cin:(k + 1) * cin, :] = wmb[k]

        # im2col fold: bf16 (th*iw, 9*cin) columns from the halo'd window
        # [xa ; xb0 ; xb1] — one cast per element, single MXU pass with K = 9*cin.
        for k in range(9):
            kh, kw = divmod(k, 3)
            lo, hi = k * cin, (k + 1) * cin
            if th - kh > 0:
                top = xa[kh:th, kw:kw + iw, :].reshape((th - kh) * iw, cin)
                col_ref[0:(th - kh) * iw, lo:hi] = top.astype(jnp.bfloat16)
            if kh >= 1:
                col_ref[(th - kh) * iw:(th - kh + 1) * iw, lo:hi] = (
                    xb0[0, kw:kw + iw, :].astype(jnp.bfloat16))
            if kh == 2:
                col_ref[(th - 1) * iw:th * iw, lo:hi] = (
                    xb1[0, kw:kw + iw, :].astype(jnp.bfloat16))

        acc = jnp.dot(col_ref[...], wmod_ref[...],
                      preferred_element_type=jnp.float32)                 # (th*iw, fp)

        # Fused noise projection (VPU, f32): noise = nmap * w_noise + b_noise.
        noise = (nmap_ref[...][:, :, None] * nw_ref[...][None]
                 + nb_ref[...][None])                                     # (th,iw,fp)
        acc = acc + noise.reshape(th * iw, fp)
        acc = jnp.where(acc >= 0.0, acc, 0.2 * acc)                       # LeakyReLU(0.2)
        out_ref[...] = acc.astype(out_ref.dtype)

        if fuse_rgb:
            # RGB 1x1 modulated conv (no demod) as an epilogue on the resident tile.
            wrgb = (rgbw_ref[...].astype(jnp.float32)
                    * (rgbs_ref[...] + 1.0)).astype(jnp.bfloat16)         # (fp, o)
            rgb = jnp.dot(acc.astype(jnp.bfloat16), wrgb,
                          preferred_element_type=jnp.float32)
            if has_prev:
                rgb = rgb + prev_ref[...]
            rgb_ref[...] = rgb.astype(rgb_ref.dtype)

    return kernel


# ----------------------------- Pallas wrapper -------------------------------- #

def mod_conv3x3(x_nhwc, w_oihw, style, nmap_hw, noise_w, noise_b,
                rgb_w=None, rgb_style=None, prev_rgb=None,
                out_dtype=jnp.float32, row_tile=None):
    """Modulated+demodulated 3x3 'same' conv fused with noise add + LeakyReLU(0.2),
    optionally fused with the modulated (no-demod) 1x1 to-RGB conv and prev_rgb add.

    x_nhwc:  (b, h, w, cin)  — cin may exceed the weight's in-channels; extra channels
                               must be exactly zero (used for lane padding).
    Returns (b, h, w, fp) [fp = round_up(f, 128), channels >= f are exactly 0], and
    when rgb_w is given also (b, h, w, o) f32.
    """
    b, h, iw, cin = x_nhwc.shape
    f, cin_w = int(w_oihw.shape[0]), int(w_oihw.shape[1])
    fp = _round_up(f, 128)
    fuse_rgb = rgb_w is not None
    has_prev = prev_rgb is not None
    o = int(rgb_w.shape[0]) if fuse_rgb else 0

    # conv taps -> (9, cin, fp) bf16 with tap index k = kh*3 + kw; zero-pad channels
    # (padded lanes stay exactly zero so demod / noise keep them at zero).
    w9 = jnp.transpose(w_oihw, (2, 3, 1, 0)).reshape(9, cin_w, f)
    w9 = jnp.pad(w9, ((0, 0), (0, cin - cin_w), (0, fp - f))).astype(jnp.bfloat16)
    s = jnp.pad(style, ((0, 0), (0, cin - cin_w)))[..., None].astype(jnp.float32)
    nw = jnp.pad(noise_w, (0, fp - f)).reshape(1, fp).astype(jnp.float32)
    nb = jnp.pad(noise_b, (0, fp - f)).reshape(1, fp).astype(jnp.float32)

    # zero halo for "same" padding.
    # TODO(synk): halo pad kept as a (fusable) XLA op instead of an in-kernel prologue.
    xp = jnp.pad(x_nhwc, ((0, 0), (1, 1), (1, 1), (0, 0)))

    limit = _vmem_limit_bytes()
    budget = max(limit - 6 * 2 ** 20, 4 * 2 ** 20)
    if row_tile is None:
        th = _pick_row_tile(h, iw, cin, fp, x_nhwc.dtype, out_dtype,
                            fuse_rgb, has_prev, o, budget)
    else:
        th = int(row_tile)
        assert h % th == 0 and (th == h or th % 8 == 0), "invalid row_tile"
    nt = h // th

    in_specs = [
        # main th-row window of the zero-padded activation (disjoint blocks)
        pl.BlockSpec((None, th, iw + 2, cin), lambda i, t: (i, t, 0, 0)),
        # two single-row bottom-halo windows: padded rows (t+1)*th and (t+1)*th + 1
        pl.BlockSpec((None, 1, iw + 2, cin), lambda i, t: (i, (t + 1) * th, 0, 0)),
        pl.BlockSpec((None, 1, iw + 2, cin), lambda i, t: (i, (t + 1) * th + 1, 0, 0)),
        pl.BlockSpec((9, cin, fp), lambda i, t: (0, 0, 0)),
        pl.BlockSpec((None, cin, 1), lambda i, t: (i, 0, 0)),
        pl.BlockSpec((None, th, iw), lambda i, t: (i, t, 0)),
        pl.BlockSpec((1, fp), lambda i, t: (0, 0)),
        pl.BlockSpec((1, fp), lambda i, t: (0, 0)),
    ]
    operands = [xp, xp, xp, w9, s, nmap_hw.astype(jnp.float32), nw, nb]

    out_shapes = [jax.ShapeDtypeStruct((b, h * iw, fp), out_dtype)]
    out_specs = [pl.BlockSpec((None, th * iw, fp), lambda i, t: (i, t, 0))]

    if fuse_rgb:
        wrgb = jnp.pad(rgb_w[:, :, 0, 0].T, ((0, fp - f), (0, 0))).astype(jnp.bfloat16)
        srgb = jnp.pad(rgb_style, ((0, 0), (0, fp - f)))[..., None].astype(jnp.float32)
        in_specs += [pl.BlockSpec((fp, o), lambda i, t: (0, 0)),
                     pl.BlockSpec((None, fp, 1), lambda i, t: (i, 0, 0))]
        operands += [wrgb, srgb]
        if has_prev:
            prev_flat = jnp.transpose(prev_rgb, (0, 2, 3, 1)).reshape(b, h * iw, o)
            in_specs.append(pl.BlockSpec((None, th * iw, o), lambda i, t: (i, t, 0)))
            operands.append(prev_flat.astype(jnp.float32))
        out_shapes.append(jax.ShapeDtypeStruct((b, h * iw, o), jnp.float32))
        out_specs.append(pl.BlockSpec((None, th * iw, o), lambda i, t: (i, t, 0)))

    kernel = _make_conv_kernel(th, iw, cin, fp, fuse_rgb, has_prev)
    outs = pl.pallas_call(
        kernel,
        out_shape=tuple(out_shapes) if fuse_rgb else out_shapes[0],
        grid=(b, nt),
        in_specs=in_specs,
        out_specs=tuple(out_specs) if fuse_rgb else out_specs[0],
        scratch_shapes=[pltpu.VMEM((9 * cin, fp), jnp.bfloat16),      # modulated weights
                        pltpu.VMEM((th * iw, 9 * cin), jnp.bfloat16)],  # im2col columns
        compiler_params=pltpu.CompilerParams(
            # batch is independent (v7x megacore); row-tile axis carries the per-sample
            # wmod scratch so it must stay sequential ("arbitrary").
            dimension_semantics=("parallel", "arbitrary"),
            vmem_limit_bytes=limit),
    )(*operands)

    if fuse_rgb:
        y, rgb = outs
        return y.reshape(b, h, iw, fp), rgb.reshape(b, h, iw, o)
    return outs.reshape(b, h, iw, fp)


# ------------------------------- JAX glue ------------------------------------ #

def upsample_bilinear_2x_nhwc(x):
    # TODO(synk): bilinear 2x upsample (align_corners=False) kept in plain JAX (NHWC).
    b, h, w, c = x.shape

    def idx(n_in, n_out):
        out = jnp.arange(n_out, dtype=jnp.float32)
        src = jnp.maximum((out + 0.5) * (n_in / n_out) - 0.5, 0.0)
        i0 = jnp.minimum(jnp.floor(src).astype(jnp.int32), n_in - 1)
        i1 = jnp.minimum(i0 + 1, n_in - 1)
        return i0, i1, src - i0.astype(jnp.float32)

    h0, h1, fh = idx(h, 2 * h)
    w0, w1, fw = idx(w, 2 * w)
    xh = x[:, h0] * (1.0 - fh)[None, :, None, None] + x[:, h1] * fh[None, :, None, None]
    return (xh[:, :, w0] * (1.0 - fw)[None, None, :, None]
            + xh[:, :, w1] * fw[None, None, :, None])


# Pure-JAX references mirroring the kernel math (same bf16 quantization points).
def _ref_mod_conv3x3(x_nhwc, w_bf, style, nmap_hw, noise_w, noise_b):
    b, h, iw, _ = x_nhwc.shape
    wf = w_bf.astype(jnp.float32)
    wm = wf[None] * (style[:, None, :, None, None] + 1.0)                 # (b,F,C,3,3)
    d = jax.lax.rsqrt(jnp.sum(wm * wm, axis=(2, 3, 4), keepdims=True) + EPS)
    wmod = (wm * d).astype(jnp.bfloat16)
    xpad = jnp.pad(x_nhwc, ((0, 0), (1, 1), (1, 1), (0, 0))).astype(jnp.bfloat16)
    acc = nmap_hw[..., None] * noise_w + noise_b                          # (b,h,w,F)
    for kh in range(3):
        for kw in range(3):
            acc = acc + jnp.einsum("bhwc,bfc->bhwf",
                                   xpad[:, kh:kh + h, kw:kw + iw, :],
                                   wmod[..., kh, kw],
                                   preferred_element_type=jnp.float32)
    return jnp.where(acc >= 0.0, acc, 0.2 * acc)


def _ref_rgb_conv1x1(x_nhwc, w_of_bf, style, prev_nchw):
    wmod = (w_of_bf.astype(jnp.float32)[None]
            * (style[:, None, :] + 1.0)).astype(jnp.bfloat16)             # (b, O, F)
    y = jnp.einsum("bhwf,bof->bhwo", x_nhwc.astype(jnp.bfloat16), wmod,
                   preferred_element_type=jnp.float32)
    if prev_nchw is not None:
        y = y + jnp.transpose(prev_nchw, (0, 2, 3, 1)).astype(jnp.float32)
    return y


def generator_block_forward(params, x, prev_rgb, istyle, inoise,
                            upsample=True, upsample_rgb=True,
                            row_tile=None, use_pallas=True):
    # NHWC end-to-end; NCHW only at the module's external interface.
    x_nhwc = jnp.transpose(x, (0, 2, 3, 1))
    if upsample:
        x_nhwc = upsample_bilinear_2x_nhwc(x_nhwc)
    b, h, w, _ = x_nhwc.shape
    filters = params["conv1_w"].shape[0]

    # Tiny style / noise projections stay in plain JAX.
    style1 = istyle @ params["to_style1_w"].T + params["to_style1_b"]
    style2 = istyle @ params["to_style2_w"].T + params["to_style2_b"]
    style_rgb = istyle @ params["rgb_style_w"].T + params["rgb_style_b"]

    # PyTorch permute((0,3,2,1)) spatially swaps H/W before the noise add.
    nmap = jnp.transpose(inoise[:, :h, :w, 0], (0, 2, 1))                 # (b, h, w)
    nw1, nb1 = params["to_noise1_w"][:, 0], params["to_noise1_b"]
    nw2, nb2 = params["to_noise2_w"][:, 0], params["to_noise2_b"]

    # bf16 conv weights (MXU operands); kernel and reference modulate the same
    # quantized values so numerics match.
    w1 = params["conv1_w"].astype(jnp.bfloat16)
    w2 = params["conv2_w"].astype(jnp.bfloat16)
    wrgb = params["rgb_conv_w"].astype(jnp.bfloat16)

    if use_pallas:
        y1 = mod_conv3x3(x_nhwc, w1, style1, nmap, nw1, nb1,
                         out_dtype=jnp.bfloat16, row_tile=row_tile)       # bf16 intermediate
        y2, rgb_nhwc = mod_conv3x3(y1, w2, style2, nmap, nw2, nb2,
                                   rgb_w=wrgb, rgb_style=style_rgb, prev_rgb=prev_rgb,
                                   out_dtype=jnp.float32, row_tile=row_tile)
        x2_nhwc = y2[..., :filters]                                       # drop lane padding
    else:
        y1 = _ref_mod_conv3x3(x_nhwc, w1, style1, nmap, nw1, nb1).astype(jnp.bfloat16)
        y2 = _ref_mod_conv3x3(y1, w2, style2, nmap, nw2, nb2)
        rgb_nhwc = _ref_rgb_conv1x1(y2, wrgb[:, :, 0, 0], style_rgb, prev_rgb)
        x2_nhwc = y2

    x2 = jnp.transpose(x2_nhwc, (0, 3, 1, 2)).astype(jnp.float32)         # NCHW
    if upsample_rgb:
        rgb_nhwc = upsample_bilinear_2x_nhwc(rgb_nhwc)
    rgb = jnp.transpose(rgb_nhwc, (0, 3, 1, 2))                           # NCHW
    return x2, rgb


# ---------------------------- deterministic init ----------------------------- #

def init_params(key, latent_dim, input_channels, filters, rgba=False):
    out_rgb = 4 if rgba else 3
    ks = jax.random.split(key, 12)

    def linear(kw, kb, out_f, in_f):
        bound = 1.0 / (in_f ** 0.5)
        w = jax.random.uniform(kw, (out_f, in_f), jnp.float32, -bound, bound)
        b = jax.random.uniform(kb, (out_f,), jnp.float32, -bound, bound)
        return w, b

    def conv_w(k, out_c, in_c, ksz):
        fan_in = in_c * ksz * ksz
        std = (2.0 / fan_in) ** 0.5        # kaiming_normal_, fan_in, leaky_relu
        return jax.random.normal(k, (out_c, in_c, ksz, ksz), jnp.float32) * std

    p = {}
    p["to_style1_w"], p["to_style1_b"] = linear(ks[0], ks[1], input_channels, latent_dim)
    p["to_noise1_w"], p["to_noise1_b"] = linear(ks[2], ks[3], filters, 1)
    p["conv1_w"] = conv_w(ks[4], filters, input_channels, 3)
    p["to_style2_w"], p["to_style2_b"] = linear(ks[5], ks[6], filters, latent_dim)
    p["to_noise2_w"], p["to_noise2_b"] = linear(ks[7], ks[8], filters, 1)
    p["conv2_w"] = conv_w(ks[9], filters, filters, 3)
    p["rgb_style_w"], p["rgb_style_b"] = linear(ks[10], ks[11], filters, latent_dim)
    p["rgb_conv_w"] = conv_w(jax.random.fold_in(key, 99), out_rgb, filters, 1)
    return p


# ----------------------------------- main ------------------------------------ #

if __name__ == "__main__":
    key = jax.random.PRNGKey(0)
    latent_dim, in_ch, filters = 32, 4, 8
    b, h0, w0 = 2, 8, 8

    params = init_params(jax.random.fold_in(key, 1), latent_dim, in_ch, filters)
    kx, ksy, kn, kp = jax.random.split(jax.random.fold_in(key, 2), 4)
    x = jax.random.normal(kx, (b, in_ch, h0, w0), jnp.float32)
    istyle = jax.random.normal(ksy, (b, latent_dim), jnp.float32)
    inoise = jax.random.uniform(kn, (b, 2 * h0, 2 * w0, 1), jnp.float32)

    # First block: no previous RGB; row tile chosen by the VMEM-aware picker
    # (whole-image tile for this size), exercising the fused conv+RGB kernel.
    x_out, rgb_out = generator_block_forward(params, x, None, istyle, inoise)
    x_out = jax.block_until_ready(x_out)
    rgb_out = jax.block_until_ready(rgb_out)

    x_ref, rgb_ref = generator_block_forward(params, x, None, istyle, inoise,
                                             use_pallas=False)
    assert x_out.shape == (b, filters, 2 * h0, 2 * w0)
    assert rgb_out.shape == (b, 3, 4 * h0, 4 * w0)
    assert jnp.allclose(x_out, x_ref, rtol=5e-3, atol=5e-3)
    assert jnp.allclose(rgb_out, rgb_ref, rtol=5e-3, atol=5e-3)

    # Later block: with a previous RGB, no RGB upsample; row_tile=8 forces 2 row tiles
    # per image to exercise halo blocks + the per-sample wmod scratch reuse path.
    prev_rgb = jax.random.normal(kp, (b, 3, 2 * h0, 2 * w0), jnp.float32)
    x_out2, rgb_out2 = generator_block_forward(params, x, prev_rgb, istyle, inoise,
                                               upsample_rgb=False, row_tile=8)
    rgb_out2 = jax.block_until_ready(rgb_out2)
    x_ref2, rgb_ref2 = generator_block_forward(params, x, prev_rgb, istyle, inoise,
                                               upsample_rgb=False, use_pallas=False)
    assert jnp.allclose(x_out2, x_ref2, rtol=5e-3, atol=5e-3)
    assert jnp.allclose(rgb_out2, rgb_ref2, rtol=5e-3, atol=5e-3)

    print("KERNEL_OK")
</pallas_src>

<mosaic_0001>
module attributes {stable_mosaic.version = 11 : i64} {
  func.func @kernel(%arg0: i32, %arg1: i32, %arg2: memref<1x16x18x4xf32, #tpu.memory_space<vmem>>, %arg3: memref<1x1x18x4xf32, #tpu.memory_space<vmem>>, %arg4: memref<1x1x18x4xf32, #tpu.memory_space<vmem>>, %arg5: memref<9x4x128xbf16, #tpu.memory_space<vmem>>, %arg6: memref<1x4x1xf32, #tpu.memory_space<vmem>>, %arg7: memref<1x16x16xf32, #tpu.memory_space<vmem>>, %arg8: memref<1x128xf32, #tpu.memory_space<vmem>>, %arg9: memref<1x128xf32, #tpu.memory_space<vmem>>, %arg10: memref<1x256x128xbf16, #tpu.memory_space<vmem>>, %arg11: memref<36x128xbf16, #tpu.memory_space<vmem>>, %arg12: memref<256x36xbf16, #tpu.memory_space<vmem>>) attributes {dimension_semantics = [#tpu.dimension_semantics<parallel>, #tpu.dimension_semantics<arbitrary>], iteration_bounds = array<i64: 2, 1>, scalar_prefetch = 0 : i64, scratch_operands = 2 : i64, tpu.core_type = #tpu.core_type<tc>, window_params = [{transform_indices = @transform_0, window_bounds = array<i64: 1, 16, 18, 4>}, {transform_indices = @transform_1, window_bounds = array<i64: 1, 1, 18, 4>}, {transform_indices = @transform_2, window_bounds = array<i64: 1, 1, 18, 4>}, {pipeline_mode = #tpu.pipeline_mode<synchronous>, transform_indices = @transform_3, window_bounds = array<i64: 9, 4, 128>}, {transform_indices = @transform_4, window_bounds = array<i64: 1, 4, 1>}, {transform_indices = @transform_5, window_bounds = array<i64: 1, 16, 16>}, {pipeline_mode = #tpu.pipeline_mode<synchronous>, transform_indices = @transform_6, window_bounds = array<i64: 1, 128>}, {pipeline_mode = #tpu.pipeline_mode<synchronous>, transform_indices = @transform_7, window_bounds = array<i64: 1, 128>}, {transform_indices = @transform_8, window_bounds = array<i64: 1, 256, 128>}]} {
    %c0_i32 = arith.constant 0 : i32
    %0 = arith.cmpi eq, %arg1, %c0_i32 : i32
    %1 = arith.extui %0 : i1 to i32
    %c0_i32_0 = arith.constant 0 : i32
    %2 = arith.cmpi ne, %1, %c0_i32_0 : i32
    scf.if %2 {
      %c0_112 = arith.constant 0 : index
      %c0_113 = arith.constant 0 : index
      %c0_114 = arith.constant 0 : index
      %110 = vector.load %arg5[%c0_112, %c0_113, %c0_114] : memref<9x4x128xbf16, #tpu.memory_space<vmem>>, vector<9x4x128xbf16>
      %111 = arith.extf %110 : vector<9x4x128xbf16> to vector<9x4x128xf32>
      %c0_115 = arith.constant 0 : index
      %c0_116 = arith.constant 0 : index
      %c0_117 = arith.constant 0 : index
      %112 = vector.load %arg6[%c0_115, %c0_116, %c0_117] : memref<1x4x1xf32, #tpu.memory_space<vmem>>, vector<1x4x1xf32>
      %113 = vector.shape_cast %112 : vector<1x4x1xf32> to vector<4x1xf32>
      %cst_118 = arith.constant 1.000000e+00 : f32
      %114 = vector.broadcast %cst_118 : f32 to vector<4x1xf32>
      %115 = arith.addf %113, %114 : vector<4x1xf32>
      %116 = vector.shape_cast %115 : vector<4x1xf32> to vector<1x4x1xf32>
      %117 = vector.broadcast %116 : vector<1x4x1xf32> to vector<9x4x128xf32>
      %118 = arith.mulf %111, %117 : vector<9x4x128xf32>
      %119 = arith.mulf %118, %118 : vector<9x4x128xf32>
      %cst_119 = arith.constant dense<0.000000e+00> : vector<4x128xf32>
      %120 = vector.multi_reduction <add>, %119, %cst_119 [0] : vector<9x4x128xf32> to vector<4x128xf32>
      %cst_120 = arith.constant dense<0.000000e+00> : vector<128xf32>
      %121 = vector.multi_reduction <add>, %120, %cst_120 [0] : vector<4x128xf32> to vector<128xf32>
      %122 = vector.shape_cast %121 : vector<128xf32> to vector<1x128xf32>
      %cst_121 = arith.constant 9.99999993E-9 : f32
      %123 = vector.broadcast %cst_121 : f32 to vector<1x128xf32>
      %124 = arith.addf %122, %123 : vector<1x128xf32>
      %125 = math.rsqrt %124 : vector<1x128xf32>
      %126 = vector.shape_cast %125 : vector<1x128xf32> to vector<1x1x128xf32>
      %127 = vector.broadcast %126 : vector<1x1x128xf32> to vector<9x4x128xf32>
      %128 = arith.mulf %118, %127 : vector<9x4x128xf32>
      %129 = arith.truncf %128 : vector<9x4x128xf32> to vector<9x4x128xbf16>
      %130 = vector.extract_strided_slice %129 {offsets = [0, 0, 0], sizes = [1, 4, 128], strides = [1, 1, 1]} : vector<9x4x128xbf16> to vector<1x4x128xbf16>
      %131 = vector.shape_cast %130 : vector<1x4x128xbf16> to vector<4x128xbf16>
      %c0_122 = arith.constant 0 : index
      %c0_123 = arith.constant 0 : index
      %132 = vector.load %arg11[%c0_122, %c0_123] : memref<36x128xbf16, #tpu.memory_space<vmem>>, vector<4x128xbf16>
      tpu.vector_store %arg11[%c0_122, %c0_123], %131 {strides = array<i32>} : memref<36x128xbf16, #tpu.memory_space<vmem>>, vector<4x128xbf16>,
      %133 = vector.extract_strided_slice %129 {offsets = [1, 0, 0], sizes = [1, 4, 128], strides = [1, 1, 1]} : vector<9x4x128xbf16> to vector<1x4x128xbf16>
      %134 = vector.shape_cast %133 : vector<1x4x128xbf16> to vector<4x128xbf16>
      %c4_124 = arith.constant 4 : index
      %c0_125 = arith.constant 0 : index
      %135 = vector.load %arg11[%c4_124, %c0_125] : memref<36x128xbf16, #tpu.memory_space<vmem>>, vector<4x128xbf16>
      tpu.vector_store %arg11[%c4_124, %c0_125], %134 {strides = array<i32>} : memref<36x128xbf16, #tpu.memory_space<vmem>>, vector<4x128xbf16>,
      %136 = vector.extract_strided_slice %129 {offsets = [2, 0, 0], sizes = [1, 4, 128], strides = [1, 1, 1]} : vector<9x4x128xbf16> to vector<1x4x128xbf16>
      %137 = vector.shape_cast %136 : vector<1x4x128xbf16> to vector<4x128xbf16>
      %c8_126 = arith.constant 8 : index
      %c0_127 = arith.constant 0 : index
      %138 = vector.load %arg11[%c8_126, %c0_127] : memref<36x128xbf16, #tpu.memory_space<vmem>>, vector<4x128xbf16>
      tpu.vector_store %arg11[%c8_126, %c0_127], %137 {strides = array<i32>} : memref<36x128xbf16, #tpu.memory_space<vmem>>, vector<4x128xbf16>,
      %139 = vector.extract_strided_slice %129 {offsets = [3, 0, 0], sizes = [1, 4, 128], strides = [1, 1, 1]} : vector<9x4x128xbf16> to vector<1x4x128xbf16>
      %140 = vector.shape_cast %139 : vector<1x4x128xbf16> to vector<4x128xbf16>
      %c12_128 = arith.constant 12 : index
      %c0_129 = arith.constant 0 : index
      %141 = vector.load %arg11[%c12_128, %c0_129] : memref<36x128xbf16, #tpu.memory_space<vmem>>, vector<4x128xbf16>
      tpu.vector_store %arg11[%c12_128, %c0_129], %140 {strides = array<i32>} : memref<36x128xbf16, #tpu.memory_space<vmem>>, vector<4x128xbf16>,
      %142 = vector.extract_strided_slice %129 {offsets = [4, 0, 0], sizes = [1, 4, 128], strides = [1, 1, 1]} : vector<9x4x128xbf16> to vector<1x4x128xbf16>
      %143 = vector.shape_cast %142 : vector<1x4x128xbf16> to vector<4x128xbf16>
      %c16_130 = arith.constant 16 : index
      %c0_131 = arith.constant 0 : index
      %144 = vector.load %arg11[%c16_130, %c0_131] : memref<36x128xbf16, #tpu.memory_space<vmem>>, vector<4x128xbf16>
      tpu.vector_store %arg11[%c16_130, %c0_131], %143 {strides = array<i32>} : memref<36x128xbf16, #tpu.memory_space<vmem>>, vector<4x128xbf16>,
      %145 = vector.extract_strided_slice %129 {offsets = [5, 0, 0], sizes = [1, 4, 128], strides = [1, 1, 1]} : vector<9x4x128xbf16> to vector<1x4x128xbf16>
      %146 = vector.shape_cast %145 : vector<1x4x128xbf16> to vector<4x128xbf16>
      %c20_132 = arith.constant 20 : index
      %c0_133 = arith.constant 0 : index
      %147 = vector.load %arg11[%c20_132, %c0_133] : memref<36x128xbf16, #tpu.memory_space<vmem>>, vector<4x128xbf16>
      tpu.vector_store %arg11[%c20_132, %c0_133], %146 {strides = array<i32>} : memref<36x128xbf16, #tpu.memory_space<vmem>>, vector<4x128xbf16>,
      %148 = vector.extract_strided_slice %129 {offsets = [6, 0, 0], sizes = [1, 4, 128], strides = [1, 1, 1]} : vector<9x4x128xbf16> to vector<1x4x128xbf16>
      %149 = vector.shape_cast %148 : vector<1x4x128xbf16> to vector<4x128xbf16>
      %c24_134 = arith.constant 24 : index
      %c0_135 = arith.constant 0 : index
      %150 = vector.load %arg11[%c24_134, %c0_135] : memref<36x128xbf16, #tpu.memory_space<vmem>>, vector<4x128xbf16>
      tpu.vector_store %arg11[%c24_134, %c0_135], %149 {strides = array<i32>} : memref<36x128xbf16, #tpu.memory_space<vmem>>, vector<4x128xbf16>,
      %151 = vector.extract_strided_slice %129 {offsets = [7, 0, 0], sizes = [1, 4, 128], strides = [1, 1, 1]} : vector<9x4x128xbf16> to vector<1x4x128xbf16>
      %152 = vector.shape_cast %151 : vector<1x4x128xbf16> to vector<4x128xbf16>
      %c28_136 = arith.constant 28 : index
      %c0_137 = arith.constant 0 : index
      %153 = vector.load %arg11[%c28_136, %c0_137] : memref<36x128xbf16, #tpu.memory_space<vmem>>, vector<4x128xbf16>
      tpu.vector_store %arg11[%c28_136, %c0_137], %152 {strides = array<i32>} : memref<36x128xbf16, #tpu.memory_space<vmem>>, vector<4x128xbf16>,
      %154 = vector.extract_strided_slice %129 {offsets = [8, 0, 0], sizes = [1, 4, 128], strides = [1, 1, 1]} : vector<9x4x128xbf16> to vector<1x4x128xbf16>
      %155 = vector.shape_cast %154 : vector<1x4x128xbf16> to vector<4x128xbf16>
      %c32_138 = arith.constant 32 : index
      %c0_139 = arith.constant 0 : index
      %156 = vector.load %arg11[%c32_138, %c0_139] : memref<36x128xbf16, #tpu.memory_space<vmem>>, vector<4x128xbf16>
      tpu.vector_store %arg11[%c32_138, %c0_139], %155 {strides = array<i32>} : memref<36x128xbf16, #tpu.memory_space<vmem>>, vector<4x128xbf16>,
    } else {
    }
    %c0 = arith.constant 0 : index
    %c0_1 = arith.constant 0 : index
    %c0_2 = arith.constant 0 : index
    %c0_3 = arith.constant 0 : index
    %3 = vector.load %arg2[%c0, %c0_1, %c0_2, %c0_3] : memref<1x16x18x4xf32, #tpu.memory_space<vmem>>, vector<1x16x16x4xf32>
    %4 = vector.shape_cast %3 : vector<1x16x16x4xf32> to vector<16x16x4xf32>
    %5 = vector.shape_cast %4 : vector<16x16x4xf32> to vector<256x4xf32>
    %6 = arith.truncf %5 : vector<256x4xf32> to vector<256x4xbf16>
    %c0_4 = arith.constant 0 : index
    %c0_5 = arith.constant 0 : index
    %7 = vector.load %arg12[%c0_4, %c0_5] : memref<256x36xbf16, #tpu.memory_space<vmem>>, vector<256x4xbf16>
    tpu.vector_store %arg12[%c0_4, %c0_5], %6 {strides = array<i32>} : memref<256x36xbf16, #tpu.memory_space<vmem>>, vector<256x4xbf16>,
    %c0_6 = arith.constant 0 : index
    %c0_7 = arith.constant 0 : index
    %c1 = arith.constant 1 : index
    %c0_8 = arith.constant 0 : index
    %8 = vector.load %arg2[%c0_6, %c0_7, %c1, %c0_8] : memref<1x16x18x4xf32, #tpu.memory_space<vmem>>, vector<1x16x16x4xf32>
    %9 = vector.shape_cast %8 : vector<1x16x16x4xf32> to vector<16x16x4xf32>
    %10 = vector.shape_cast %9 : vector<16x16x4xf32> to vector<256x4xf32>
    %11 = arith.truncf %10 : vector<256x4xf32> to vector<256x4xbf16>
    %c0_9 = arith.constant 0 : index
    %c4 = arith.constant 4 : index
    %12 = vector.load %arg12[%c0_9, %c4] : memref<256x36xbf16, #tpu.memory_space<vmem>>, vector<256x4xbf16>
    tpu.vector_store %arg12[%c0_9, %c4], %11 {strides = array<i32>} : memref<256x36xbf16, #tpu.memory_space<vmem>>, vector<256x4xbf16>,
    %c0_10 = arith.constant 0 : index
    %c0_11 = arith.constant 0 : index
    %c2 = arith.constant 2 : index
    %c0_12 = arith.constant 0 : index
    %13 = vector.load %arg2[%c0_10, %c0_11, %c2, %c0_12] : memref<1x16x18x4xf32, #tpu.memory_space<vmem>>, vector<1x16x16x4xf32>
    %14 = vector.shape_cast %13 : vector<1x16x16x4xf32> to vector<16x16x4xf32>
    %15 = vector.shape_cast %14 : vector<16x16x4xf32> to vector<256x4xf32>
    %16 = arith.truncf %15 : vector<256x4xf32> to vector<256x4xbf16>
    %c0_13 = arith.constant 0 : index
    %c8 = arith.constant 8 : index
    %17 = vector.load %arg12[%c0_13, %c8] : memref<256x36xbf16, #tpu.memory_space<vmem>>, vector<256x4xbf16>
    tpu.vector_store %arg12[%c0_13, %c8], %16 {strides = array<i32>} : memref<256x36xbf16, #tpu.memory_space<vmem>>, vector<256x4xbf16>,
    %c0_14 = arith.constant 0 : index
    %c1_15 = arith.constant 1 : index
    %c0_16 = arith.constant 0 : index
    %c0_17 = arith.constant 0 : index
    %18 = vector.load %arg2[%c0_14, %c1_15, %c0_16, %c0_17] : memref<1x16x18x4xf32, #tpu.memory_space<vmem>>, vector<1x15x16x4xf32>
    %19 = vector.shape_cast %18 : vector<1x15x16x4xf32> to vector<15x16x4xf32>
    %20 = vector.shape_cast %19 : vector<15x16x4xf32> to vector<240x4xf32>
    %21 = arith.truncf %20 : vector<240x4xf32> to vector<240x4xbf16>
    %c0_18 = arith.constant 0 : index
    %c12 = arith.constant 12 : index
    %22 = vector.load %arg12[%c0_18, %c12] : memref<256x36xbf16, #tpu.memory_space<vmem>>, vector<240x4xbf16>
    tpu.vector_store %arg12[%c0_18, %c12], %21 {strides = array<i32>} : memref<256x36xbf16, #tpu.memory_space<vmem>>, vector<240x4xbf16>,
    %c0_19 = arith.constant 0 : index
    %c0_20 = arith.constant 0 : index
    %c0_21 = arith.constant 0 : index
    %c0_22 = arith.constant 0 : index
    %23 = vector.load %arg3[%c0_19, %c0_20, %c0_21, %c0_22] : memref<1x1x18x4xf32, #tpu.memory_space<vmem>>, vector<1x1x16x4xf32>
    %24 = vector.shape_cast %23 : vector<1x1x16x4xf32> to vector<16x4xf32>
    %25 = arith.truncf %24 : vector<16x4xf32> to vector<16x4xbf16>
    %c240 = arith.constant 240 : index
    %c12_23 = arith.constant 12 : index
    %26 = vector.load %arg12[%c240, %c12_23] : memref<256x36xbf16, #tpu.memory_space<vmem>>, vector<16x4xbf16>
    tpu.vector_store %arg12[%c240, %c12_23], %25 {strides = array<i32>} : memref<256x36xbf16, #tpu.memory_space<vmem>>, vector<16x4xbf16>,
    %c0_24 = arith.constant 0 : index
    %c1_25 = arith.constant 1 : index
    %c1_26 = arith.constant 1 : index
    %c0_27 = arith.constant 0 : index
    %27 = vector.load %arg2[%c0_24, %c1_25, %c1_26, %c0_27] : memref<1x16x18x4xf32, #tpu.memory_space<vmem>>, vector<1x15x16x4xf32>
    %28 = vector.shape_cast %27 : vector<1x15x16x4xf32> to vector<15x16x4xf32>
    %29 = vector.shape_cast %28 : vector<15x16x4xf32> to vector<240x4xf32>
    %30 = arith.truncf %29 : vector<240x4xf32> to vector<240x4xbf16>
    %c0_28 = arith.constant 0 : index
    %c16 = arith.constant 16 : index
    %31 = vector.load %arg12[%c0_28, %c16] : memref<256x36xbf16, #tpu.memory_space<vmem>>, vector<240x4xbf16>
    tpu.vector_store %arg12[%c0_28, %c16], %30 {strides = array<i32>} : memref<256x36xbf16, #tpu.memory_space<vmem>>, vector<240x4xbf16>,
    %c0_29 = arith.constant 0 : index
    %c0_30 = arith.constant 0 : index
    %c1_31 = arith.constant 1 : index
    %c0_32 = arith.constant 0 : index
    %32 = vector.load %arg3[%c0_29, %c0_30, %c1_31, %c0_32] : memref<1x1x18x4xf32, #tpu.memory_space<vmem>>, vector<1x1x16x4xf32>
    %33 = vector.shape_cast %32 : vector<1x1x16x4xf32> to vector<16x4xf32>
    %34 = arith.truncf %33 : vector<16x4xf32> to vector<16x4xbf16>
    %c240_33 = arith.constant 240 : index
    %c16_34 = arith.constant 16 : index
    %35 = vector.load %arg12[%c240_33, %c16_34] : memref<256x36xbf16, #tpu.memory_space<vmem>>, vector<16x4xbf16>
    tpu.vector_store %arg12[%c240_33, %c16_34], %34 {strides = array<i32>} : memref<256x36xbf16, #tpu.memory_space<vmem>>, vector<16x4xbf16>,
    %c0_35 = arith.constant 0 : index
    %c1_36 = arith.constant 1 : index
    %c2_37 = arith.constant 2 : index
    %c0_38 = arith.constant 0 : index
    %36 = vector.load %arg2[%c0_35, %c1_36, %c2_37, %c0_38] : memref<1x16x18x4xf32, #tpu.memory_space<vmem>>, vector<1x15x16x4xf32>
    %37 = vector.shape_cast %36 : vector<1x15x16x4xf32> to vector<15x16x4xf32>
    %38 = vector.shape_cast %37 : vector<15x16x4xf32> to vector<240x4xf32>
    %39 = arith.truncf %38 : vector<240x4xf32> to vector<240x4xbf16>
    %c0_39 = arith.constant 0 : index
    %c20 = arith.constant 20 : index
    %40 = vector.load %arg12[%c0_39, %c20] : memref<256x36xbf16, #tpu.memory_space<vmem>>, vector<240x4xbf16>
    tpu.vector_store %arg12[%c0_39, %c20], %39 {strides = array<i32>} : memref<256x36xbf16, #tpu.memory_space<vmem>>, vector<240x4xbf16>,
    %c0_40 = arith.constant 0 : index
    %c0_41 = arith.constant 0 : index
    %c2_42 = arith.constant 2 : index
    %c0_43 = arith.constant 0 : index
    %41 = vector.load %arg3[%c0_40, %c0_41, %c2_42, %c0_43] : memref<1x1x18x4xf32, #tpu.memory_space<vmem>>, vector<1x1x16x4xf32>
    %42 = vector.shape_cast %41 : vector<1x1x16x4xf32> to vector<16x4xf32>
    %43 = arith.truncf %42 : vector<16x4xf32> to vector<16x4xbf16>
    %c240_44 = arith.constant 240 : index
    %c20_45 = arith.constant 20 : index
    %44 = vector.load %arg12[%c240_44, %c20_45] : memref<256x36xbf16, #tpu.memory_space<vmem>>, vector<16x4xbf16>
    tpu.vector_store %arg12[%c240_44, %c20_45], %43 {strides = array<i32>} : memref<256x36xbf16, #tpu.memory_space<vmem>>, vector<16x4xbf16>,
    %c0_46 = arith.constant 0 : index
    %c2_47 = arith.constant 2 : index
    %c0_48 = arith.constant 0 : index
    %c0_49 = arith.constant 0 : index
    %45 = vector.load %arg2[%c0_46, %c2_47, %c0_48, %c0_49] : memref<1x16x18x4xf32, #tpu.memory_space<vmem>>, vector<1x14x16x4xf32>
    %46 = vector.shape_cast %45 : vector<1x14x16x4xf32> to vector<14x16x4xf32>
    %47 = vector.shape_cast %46 : vector<14x16x4xf32> to vector<224x4xf32>
    %48 = arith.truncf %47 : vector<224x4xf32> to vector<224x4xbf16>
    %c0_50 = arith.constant 0 : index
    %c24 = arith.constant 24 : index
    %49 = vector.load %arg12[%c0_50, %c24] : memref<256x36xbf16, #tpu.memory_space<vmem>>, vector<224x4xbf16>
    tpu.vector_store %arg12[%c0_50, %c24], %48 {strides = array<i32>} : memref<256x36xbf16, #tpu.memory_space<vmem>>, vector<224x4xbf16>,
    %c0_51 = arith.constant 0 : index
    %c0_52 = arith.constant 0 : index
    %c0_53 = arith.constant 0 : index
    %c0_54 = arith.constant 0 : index
    %50 = vector.load %arg3[%c0_51, %c0_52, %c0_53, %c0_54] : memref<1x1x18x4xf32, #tpu.memory_space<vmem>>, vector<1x1x16x4xf32>
    %51 = vector.shape_cast %50 : vector<1x1x16x4xf32> to vector<16x4xf32>
    %52 = arith.truncf %51 : vector<16x4xf32> to vector<16x4xbf16>
    %c224 = arith.constant 224 : index
    %c24_55 = arith.constant 24 : index
    %53 = vector.load %arg12[%c224, %c24_55] : memref<256x36xbf16, #tpu.memory_space<vmem>>, vector<16x4xbf16>
    tpu.vector_store %arg12[%c224, %c24_55], %52 {strides = array<i32>} : memref<256x36xbf16, #tpu.memory_space<vmem>>, vector<16x4xbf16>,
    %c0_56 = arith.constant 0 : index
    %c0_57 = arith.constant 0 : index
    %c0_58 = arith.constant 0 : index
    %c0_59 = arith.constant 0 : index
    %54 = vector.load %arg4[%c0_56, %c0_57, %c0_58, %c0_59] : memref<1x1x18x4xf32, #tpu.memory_space<vmem>>, vector<1x1x16x4xf32>
    %55 = vector.shape_cast %54 : vector<1x1x16x4xf32> to vector<16x4xf32>
    %56 = arith.truncf %55 : vector<16x4xf32> to vector<16x4xbf16>
    %c240_60 = arith.constant 240 : index
    %c24_61 = arith.constant 24 : index
    %57 = vector.load %arg12[%c240_60, %c24_61] : memref<256x36xbf16, #tpu.memory_space<vmem>>, vector<16x4xbf16>
    tpu.vector_store %arg12[%c240_60, %c24_61], %56 {strides = array<i32>} : memref<256x36xbf16, #tpu.memory_space<vmem>>, vector<16x4xbf16>,
    %c0_62 = arith.constant 0 : index
    %c2_63 = arith.constant 2 : index
    %c1_64 = arith.constant 1 : index
    %c0_65 = arith.constant 0 : index
    %58 = vector.load %arg2[%c0_62, %c2_63, %c1_64, %c0_65] : memref<1x16x18x4xf32, #tpu.memory_space<vmem>>, vector<1x14x16x4xf32>
    %59 = vector.shape_cast %58 : vector<1x14x16x4xf32> to vector<14x16x4xf32>
    %60 = vector.shape_cast %59 : vector<14x16x4xf32> to vector<224x4xf32>
    %61 = arith.truncf %60 : vector<224x4xf32> to vector<224x4xbf16>
    %c0_66 = arith.constant 0 : index
    %c28 = arith.constant 28 : index
    %62 = vector.load %arg12[%c0_66, %c28] : memref<256x36xbf16, #tpu.memory_space<vmem>>, vector<224x4xbf16>
    tpu.vector_store %arg12[%c0_66, %c28], %61 {strides = array<i32>} : memref<256x36xbf16, #tpu.memory_space<vmem>>, vector<224x4xbf16>,
    %c0_67 = arith.constant 0 : index
    %c0_68 = arith.constant 0 : index
    %c1_69 = arith.constant 1 : index
    %c0_70 = arith.constant 0 : index
    %63 = vector.load %arg3[%c0_67, %c0_68, %c1_69, %c0_70] : memref<1x1x18x4xf32, #tpu.memory_space<vmem>>, vector<1x1x16x4xf32>
    %64 = vector.shape_cast %63 : vector<1x1x16x4xf32> to vector<16x4xf32>
    %65 = arith.truncf %64 : vector<16x4xf32> to vector<16x4xbf16>
    %c224_71 = arith.constant 224 : index
    %c28_72 = arith.constant 28 : index
    %66 = vector.load %arg12[%c224_71, %c28_72] : memref<256x36xbf16, #tpu.memory_space<vmem>>, vector<16x4xbf16>
    tpu.vector_store %arg12[%c224_71, %c28_72], %65 {strides = array<i32>} : memref<256x36xbf16, #tpu.memory_space<vmem>>, vector<16x4xbf16>,
    %c0_73 = arith.constant 0 : index
    %c0_74 = arith.constant 0 : index
    %c1_75 = arith.constant 1 : index
    %c0_76 = arith.constant 0 : index
    %67 = vector.load %arg4[%c0_73, %c0_74, %c1_75, %c0_76] : memref<1x1x18x4xf32, #tpu.memory_space<vmem>>, vector<1x1x16x4xf32>
    %68 = vector.shape_cast %67 : vector<1x1x16x4xf32> to vector<16x4xf32>
    %69 = arith.truncf %68 : vector<16x4xf32> to vector<16x4xbf16>
    %c240_77 = arith.constant 240 : index
    %c28_78 = arith.constant 28 : index
    %70 = vector.load %arg12[%c240_77, %c28_78] : memref<256x36xbf16, #tpu.memory_space<vmem>>, vector<16x4xbf16>
    tpu.vector_store %arg12[%c240_77, %c28_78], %69 {strides = array<i32>} : memref<256x36xbf16, #tpu.memory_space<vmem>>, vector<16x4xbf16>,
    %c0_79 = arith.constant 0 : index
    %c2_80 = arith.constant 2 : index
    %c2_81 = arith.constant 2 : index
    %c0_82 = arith.constant 0 : index
    %71 = vector.load %arg2[%c0_79, %c2_80, %c2_81, %c0_82] : memref<1x16x18x4xf32, #tpu.memory_space<vmem>>, vector<1x14x16x4xf32>
    %72 = vector.shape_cast %71 : vector<1x14x16x4xf32> to vector<14x16x4xf32>
    %73 = vector.shape_cast %72 : vector<14x16x4xf32> to vector<224x4xf32>
    %74 = arith.truncf %73 : vector<224x4xf32> to vector<224x4xbf16>
    %c0_83 = arith.constant 0 : index
    %c32 = arith.constant 32 : index
    %75 = vector.load %arg12[%c0_83, %c32] : memref<256x36xbf16, #tpu.memory_space<vmem>>, vector<224x4xbf16>
    tpu.vector_store %arg12[%c0_83, %c32], %74 {strides = array<i32>} : memref<256x36xbf16, #tpu.memory_space<vmem>>, vector<224x4xbf16>,
    %c0_84 = arith.constant 0 : index
    %c0_85 = arith.constant 0 : index
    %c2_86 = arith.constant 2 : index
    %c0_87 = arith.constant 0 : index
    %76 = vector.load %arg3[%c0_84, %c0_85, %c2_86, %c0_87] : memref<1x1x18x4xf32, #tpu.memory_space<vmem>>, vector<1x1x16x4xf32>
    %77 = vector.shape_cast %76 : vector<1x1x16x4xf32> to vector<16x4xf32>
    %78 = arith.truncf %77 : vector<16x4xf32> to vector<16x4xbf16>
    %c224_88 = arith.constant 224 : index
    %c32_89 = arith.constant 32 : index
    %79 = vector.load %arg12[%c224_88, %c32_89] : memref<256x36xbf16, #tpu.memory_space<vmem>>, vector<16x4xbf16>
    tpu.vector_store %arg12[%c224_88, %c32_89], %78 {strides = array<i32>} : memref<256x36xbf16, #tpu.memory_space<vmem>>, vector<16x4xbf16>,
    %c0_90 = arith.constant 0 : index
    %c0_91 = arith.constant 0 : index
    %c2_92 = arith.constant 2 : index
    %c0_93 = arith.constant 0 : index
    %80 = vector.load %arg4[%c0_90, %c0_91, %c2_92, %c0_93] : memref<1x1x18x4xf32, #tpu.memory_space<vmem>>, vector<1x1x16x4xf32>
    %81 = vector.shape_cast %80 : vector<1x1x16x4xf32> to vector<16x4xf32>
    %82 = arith.truncf %81 : vector<16x4xf32> to vector<16x4xbf16>
    %c240_94 = arith.constant 240 : index
    %c32_95 = arith.constant 32 : index
    %83 = vector.load %arg12[%c240_94, %c32_95] : memref<256x36xbf16, #tpu.memory_space<vmem>>, vector<16x4xbf16>
    tpu.vector_store %arg12[%c240_94, %c32_95], %82 {strides = array<i32>} : memref<256x36xbf16, #tpu.memory_space<vmem>>, vector<16x4xbf16>,
    %c0_96 = arith.constant 0 : index
    %c0_97 = arith.constant 0 : index
    %84 = vector.load %arg12[%c0_96, %c0_97] : memref<256x36xbf16, #tpu.memory_space<vmem>>, vector<256x36xbf16>
    %c0_98 = arith.constant 0 : index
    %c0_99 = arith.constant 0 : index
    %85 = vector.load %arg11[%c0_98, %c0_99] : memref<36x128xbf16, #tpu.memory_space<vmem>>, vector<36x128xbf16>
    %cst = arith.constant dense<0.000000e+00> : vector<256x128xf32>
    %86 = tpu.matmul %84, %85, %cst {dimension_numbers = #tpu.dot_dimension_numbers<[1], [0], [0], [1], [0, 0, 1, 1], [], []>} : vector<256x36xbf16>, vector<36x128xbf16>, vector<256x128xf32> -> vector<256x128xf32>
    %c0_100 = arith.constant 0 : index
    %c0_101 = arith.constant 0 : index
    %c0_102 = arith.constant 0 : index
    %87 = vector.load %arg7[%c0_100, %c0_101, %c0_102] : memref<1x16x16xf32, #tpu.memory_space<vmem>>, vector<1x16x16xf32>
    %88 = vector.shape_cast %87 : vector<1x16x16xf32> to vector<16x16xf32>
    %89 = vector.shape_cast %88 : vector<16x16xf32> to vector<16x16x1xf32>
    %c0_103 = arith.constant 0 : index
    %c0_104 = arith.constant 0 : index
    %90 = vector.load %arg8[%c0_103, %c0_104] : memref<1x128xf32, #tpu.memory_space<vmem>>, vector<1x128xf32>
    %91 = vector.shape_cast %90 : vector<1x128xf32> to vector<1x1x128xf32>
    %92 = vector.broadcast %89 : vector<16x16x1xf32> to vector<16x16x128xf32>
    %93 = vector.broadcast %91 : vector<1x1x128xf32> to vector<16x16x128xf32>
    %94 = arith.mulf %92, %93 : vector<16x16x128xf32>
    %c0_105 = arith.constant 0 : index
    %c0_106 = arith.constant 0 : index
    %95 = vector.load %arg9[%c0_105, %c0_106] : memref<1x128xf32, #tpu.memory_space<vmem>>, vector<1x128xf32>
    %96 = vector.shape_cast %95 : vector<1x128xf32> to vector<1x1x128xf32>
    %97 = vector.broadcast %96 : vector<1x1x128xf32> to vector<16x16x128xf32>
    %98 = arith.addf %94, %97 : vector<16x16x128xf32>
    %99 = vector.shape_cast %98 : vector<16x16x128xf32> to vector<256x128xf32>
    %100 = arith.addf %86, %99 : vector<256x128xf32>
    %cst_107 = arith.constant 0.000000e+00 : f32
    %101 = vector.broadcast %cst_107 : f32 to vector<256x128xf32>
    %102 = arith.cmpf oge, %100, %101 : vector<256x128xf32>
    %cst_108 = arith.constant 2.000000e-01 : f32
    %103 = vector.broadcast %cst_108 : f32 to vector<256x128xf32>
    %104 = arith.mulf %103, %100 : vector<256x128xf32>
    %105 = arith.select %102, %100, %104 : vector<256x128xi1>, vector<256x128xf32>
    %106 = arith.truncf %105 : vector<256x128xf32> to vector<256x128xbf16>
    %c0_109 = arith.constant 0 : index
    %c0_110 = arith.constant 0 : index
    %c0_111 = arith.constant 0 : index
    %107 = vector.load %arg10[%c0_109, %c0_110, %c0_111] : memref<1x256x128xbf16, #tpu.memory_space<vmem>>, vector<1x256x128xbf16>
    %108 = vector.shape_cast %107 : vector<1x256x128xbf16> to vector<256x128xbf16>
    %109 = vector.shape_cast %106 : vector<256x128xbf16> to vector<1x256x128xbf16>
    tpu.vector_store %arg10[%c0_109, %c0_110, %c0_111], %109 {strides = array<i32>} : memref<1x256x128xbf16, #tpu.memory_space<vmem>>, vector<1x256x128xbf16>,
    return
  }
  func.func @transform_0(%arg0: i32, %arg1: i32) -> (i32, i32, i32, i32) {
    %c0_i32 = arith.constant 0 : i32
    %c0_i32_0 = arith.constant 0 : i32
    %c0_i32_1 = arith.constant 0 : i32
    return %arg0, %arg1, %c0_i32, %c0_i32_0 : i32, i32, i32, i32
  }
  func.func @transform_1(%arg0: i32, %arg1: i32) -> (i32, i32, i32, i32) {
    %c1_i32 = arith.constant 1 : i32
    %0 = arith.addi %arg1, %c1_i32 : i32
    %c16_i32 = arith.constant 16 : i32
    %1 = arith.muli %0, %c16_i32 : i32
    %c0_i32 = arith.constant 0 : i32
    %c0_i32_0 = arith.constant 0 : i32
    %c0_i32_1 = arith.constant 0 : i32
    return %arg0, %1, %c0_i32, %c0_i32_0 : i32, i32, i32, i32
  }
  func.func @transform_2(%arg0: i32, %arg1: i32) -> (i32, i32, i32, i32) {
    %c1_i32 = arith.constant 1 : i32
    %0 = arith.addi %arg1, %c1_i32 : i32
    %c16_i32 = arith.constant 16 : i32
    %1 = arith.muli %0, %c16_i32 : i32
    %c1_i32_0 = arith.constant 1 : i32
    %2 = arith.addi %1, %c1_i32_0 : i32
    %c0_i32 = arith.constant 0 : i32
    %c0_i32_1 = arith.constant 0 : i32
    %c0_i32_2 = arith.constant 0 : i32
    return %arg0, %2, %c0_i32, %c0_i32_1 : i32, i32, i32, i32
  }
  func.func @transform_3(%arg0: i32, %arg1: i32) -> (i32, i32, i32) {
    %c0_i32 = arith.constant 0 : i32
    %c0_i32_0 = arith.constant 0 : i32
    %c0_i32_1 = arith.constant 0 : i32
    %c0_i32_2 = arith.constant 0 : i32
    return %c0_i32, %c0_i32_0, %c0_i32_1 : i32, i32, i32
  }
  func.func @transform_4(%arg0: i32, %arg1: i32) -> (i32, i32, i32) {
    %c0_i32 = arith.constant 0 : i32
    %c0_i32_0 = arith.constant 0 : i32
    %c0_i32_1 = arith.constant 0 : i32
    return %arg0, %c0_i32, %c0_i32_0 : i32, i32, i32
  }
  func.func @transform_5(%arg0: i32, %arg1: i32) -> (i32, i32, i32) {
    %c0_i32 = arith.constant 0 : i32
    %c0_i32_0 = arith.constant 0 : i32
    return %arg0, %arg1, %c0_i32 : i32, i32, i32
  }
  func.func @transform_6(%arg0: i32, %arg1: i32) -> (i32, i32) {
    %c0_i32 = arith.constant 0 : i32
    %c0_i32_0 = arith.constant 0 : i32
    %c0_i32_1 = arith.constant 0 : i32
    return %c0_i32, %c0_i32_0 : i32, i32
  }
  func.func @transform_7(%arg0: i32, %arg1: i32) -> (i32, i32) {
    %c0_i32 = arith.constant 0 : i32
    %c0_i32_0 = arith.constant 0 : i32
    %c0_i32_1 = arith.constant 0 : i32
    return %c0_i32, %c0_i32_0 : i32, i32
  }
  func.func @transform_8(%arg0: i32, %arg1: i32) -> (i32, i32, i32) {
    %c0_i32 = arith.constant 0 : i32
    %c0_i32_0 = arith.constant 0 : i32
    return %arg0, %arg1, %c0_i32 : i32, i32, i32
  }
}

</mosaic_0001>

<llo_original>
// kernel: tpu_custom_call.1
$region0: #{tpu_custom_call.1}
  #allocation0 [shape = 'u32[]', space=smem, size = 0x4, offset = 0x4, fixed_abs, tag = 'smem constant byte address 0x4 - core index']
  #allocation1 [shape = 'u32[144,128]{1,0:T(1,128)}', space=vmem, size = 0x12000, scoped, tag = 'internal scratch']
  #allocation2 [shape = 'bf16[36,128]{1,0:T(8,128)(2,1)}', space=vmem, size = 0x2800, scoped, tag = 'scratch operand']
  #allocation3 [shape = 'bf16[256,36]{1,0:T(16,128)(2,1)}', space=vmem, size = 0x10000, scoped, tag = 'scratch operand']
  %s0 = inlined_call_operand.vmem [shape: f32[2,18,18,4], index: 0, kind: input, shape index: {}]
  %s1 = inlined_call_operand.vmem [shape: f32[2,18,18,4], index: 1, kind: input, shape index: {}]
  %s2 = inlined_call_operand.vmem [shape: f32[2,18,18,4], index: 2, kind: input, shape index: {}]
  %s3 = inlined_call_operand.vmem [shape: bf16[9,4,128], index: 3, kind: input, shape index: {}]
  %s4 = inlined_call_operand.vmem [shape: f32[2,4,1], index: 4, kind: input, shape index: {}]
  %s5 = inlined_call_operand.vmem [shape: f32[2,16,16], index: 5, kind: input, shape index: {}]
  %s6 = inlined_call_operand.vmem [shape: f32[1,128], index: 6, kind: input, shape index: {}]
  %s7 = inlined_call_operand.vmem [shape: f32[1,128], index: 7, kind: input, shape index: {}]
  %s8 = inlined_call_operand.hbm [shape: bf16[2,256,128], index: 8, kind: output, shape index: {}]
  %s9 = sld [smem:[#allocation0]]
  $region69: #{tpu_custom_call.1} parent=0
    _
  %s11 = ssub.s32 1, %s9
  %s12 = scalar_select 0, %s11, %s9
  $region1: #{tpu_custom_call.1} parent=0
    #allocation4 [shape = 'u8[131072]{0}', space=vmem, size = 0x20000, scoped, tag = 'output window, operand 0']
    #allocation5 [shape = 's32[2]{0}', space=sflag, size = 0x8, scoped, tag = 'scoped memory for tpu_custom_call.1']
    %13 = vsyncpa [#allocation5], 0
    %s14 = scalar_lea.sflag [#allocation5], 1
    %15 = vsyncpa %s14, 0
    loop: start=0, step=1, limit=4
    $region2: #{tpu_custom_call.1} parent=1 // loop_pre_header
      _
    $region3: #{tpu_custom_call.1} parent=1 // loop_header
      %s17 = sphi 0, %s21
      %p18 = scmp.ge.s32.totalorder %s17, 4
      %s24 = sphi 0, %s36
      %s25 = sphi 0, %s32
      %s26 = sphi 0, %s24
      %s27 = sphi 0, %s25
      %s28 = sphi 0, %s26
      %s29 = sphi 0, %s27
      %s41 = sphi 0, %s43
      %s44 = sphi 0, %s41
      %s45 = sphi 0, %s44
      %s61 = sphi 0, %s45
      %s73 = sphi 0, %s75
      %s76 = sphi 0, %s73
      %s77 = sphi 0, %s76
      %s93 = sphi 0, %s77
      %s107 = sphi 0, %s109
      %s110 = sphi 0, %s107
      %s111 = sphi 0, %s110
      %s127 = sphi 0, %s111
      %s131 = sphi 0, %s131
      %s133 = sphi 0, %s131
      %s134 = sphi 0, %s133
      %s148 = sphi 0, %s134
      %s154 = sphi 0, %s156
      %s157 = sphi 0, %s154
      %s158 = sphi 0, %s157
      %s174 = sphi 0, %s158
      %s182 = sphi 0, %s184
      %s185 = sphi 0, %s182
      %s186 = sphi 0, %s185
      %s202 = sphi 0, %s186
      %s206 = sphi 0, %s206
      %s208 = sphi 0, %s206
      %s209 = sphi 0, %s208
      %s223 = sphi 0, %s209
      %s227 = sphi 0, %s227
      %s229 = sphi 0, %s227
      %s230 = sphi 0, %s229
      %s244 = sphi 0, %s230
      %s252 = sphi 0, %s254
      %s255 = sphi 0, %s252
      %s256 = sphi 0, %s255
      %s272 = sphi 0, %s256
    $region4: #{tpu_custom_call.1} parent=1 // loop_header_branch
      %20 = sbr.rel (%p18) target = $region8
    $region5: #{tpu_custom_call.1} parent=1 // loop_body
      %s22 = ssub.s32 %s17, 1
      %s23 = ssub.s32 %s17, 2
      %s30 = sadd.s32 1, %s25
      %p31 = scmp.ge.s32.totalorder %s30, 1
      %s32 = scalar_select %p31, 0, %s30
      %s33 = sadd.s32 1, %s24
      %s34 = scalar_select %p31, %s33, %s24
      %p35 = scmp.ge.s32.totalorder %s34, 2
      %s36 = scalar_select %p35, 0, %s34
      %s37 = ssub.s32 %s24, %s36
      %s38 = ssub.s32 %s25, %s32
      %s39 = sor.u32 %s37, %s38
      %p40 = scmp.eq.s32.totalorder %s39, 0
      %s42 = sadd.s32 %s41, 1
      %s43 = scalar_select %p40, %s41, %s42
      %p46 = pneg %p40
      %p47 = scmp.eq.s32.totalorder %s17, 1
      %p48 = por %p46, %p47
      %p49 = scmp.ne.s32.totalorder %s41, %s44
      %p50 = scmp.eq.s32.totalorder %s17, 0
      %p51 = por %p49, %p50
      %p52 = scmp.ne.s32.totalorder %s41, %s44
      %p53 = scmp.eq.s32.totalorder %s22, 1
      %p54 = por %p52, %p53
      %p55 = scmp.ne.s32.totalorder %s44, %s45
      %p56 = scmp.eq.s32.totalorder %s22, 0
      %p57 = por %p55, %p56
      %p58 = scmp.ne.s32.totalorder %s44, %s45
      %p59 = scmp.eq.s32.totalorder %s23, 1
      %p60 = por %p58, %p59
      %p62 = scmp.ne.s32.totalorder %s45, %s61
      %p63 = scmp.eq.s32.totalorder %s23, 0
      %p64 = por %p62, %p63
      %s65 = sadd.s32 %s25, 1
      %s66 = smul.u32 %s65, 16
      %s67 = sadd.s32 %s32, 1
      %s68 = smul.u32 %s67, 16
      %s69 = ssub.s32 %s24, %s36
      %s70 = ssub.s32 %s66, %s68
      %s71 = sor.u32 %s69, %s70
      %p72 = scmp.eq.s32.totalorder %s71, 0
      %s74 = sadd.s32 %s73, 1
      %s75 = scalar_select %p72, %s73, %s74
      %p78 = pneg %p72
      %p79 = scmp.eq.s32.totalorder %s17, 1
      %p80 = por %p78, %p79
      %p81 = scmp.ne.s32.totalorder %s73, %s76
      %p82 = scmp.eq.s32.totalorder %s17, 0
      %p83 = por %p81, %p82
      %p84 = scmp.ne.s32.totalorder %s73, %s76
      %p85 = scmp.eq.s32.totalorder %s22, 1
      %p86 = por %p84, %p85
      %p87 = scmp.ne.s32.totalorder %s76, %s77
      %p88 = scmp.eq.s32.totalorder %s22, 0
      %p89 = por %p87, %p88
      %p90 = scmp.ne.s32.totalorder %s76, %s77
      %p91 = scmp.eq.s32.totalorder %s23, 1
      %p92 = por %p90, %p91
      %p94 = scmp.ne.s32.totalorder %s77, %s93
      %p95 = scmp.eq.s32.totalorder %s23, 0
      %p96 = por %p94, %p95
      %s97 = sadd.s32 %s25, 1
      %s98 = smul.u32 %s97, 16
      %s99 = sadd.s32 %s98, 1
      %s100 = sadd.s32 %s32, 1
      %s101 = smul.u32 %s100, 16
      %s102 = sadd.s32 %s101, 1
      %s103 = ssub.s32 %s24, %s36
      %s104 = ssub.s32 %s99, %s102
      %s105 = sor.u32 %s103, %s104
      %p106 = scmp.eq.s32.totalorder %s105, 0
      %s108 = sadd.s32 %s107, 1
      %s109 = scalar_select %p106, %s107, %s108
      %p112 = pneg %p106
      %p113 = scmp.eq.s32.totalorder %s17, 1
      %p114 = por %p112, %p113
      %p115 = scmp.ne.s32.totalorder %s107, %s110
      %p116 = scmp.eq.s32.totalorder %s17, 0
      %p117 = por %p115, %p116
      %p118 = scmp.ne.s32.totalorder %s107, %s110
      %p119 = scmp.eq.s32.totalorder %s22, 1
      %p120 = por %p118, %p119
      %p121 = scmp.ne.s32.totalorder %s110, %s111
      %p122 = scmp.eq.s32.totalorder %s22, 0
      %p123 = por %p121, %p122
      %p124 = scmp.ne.s32.totalorder %s110, %s111
      %p125 = scmp.eq.s32.totalorder %s23, 1
      %p126 = por %p124, %p125
      %p128 = scmp.ne.s32.totalorder %s111, %s127
      %p129 = scmp.eq.s32.totalorder %s23, 0
      %p130 = por %p128, %p129
      %s132 = sadd.s32 %s131, 1
      %p135 = scmp.eq.s32.totalorder %s17, 1
      %p136 = scmp.ne.s32.totalorder %s131, %s133
      %p137 = scmp.eq.s32.totalorder %s17, 0
      %p138 = por %p136, %p137
      %p139 = scmp.ne.s32.totalorder %s131, %s133
      %p140 = scmp.eq.s32.totalorder %s22, 1
      %p141 = por %p139, %p140
      %p142 = scmp.ne.s32.totalorder %s133, %s134
      %p143 = scmp.eq.s32.totalorder %s22, 0
      %p144 = por %p142, %p143
      %p145 = scmp.ne.s32.totalorder %s133, %s134
      %p146 = scmp.eq.s32.totalorder %s23, 1
      %p147 = por %p145, %p146
      %p149 = scmp.ne.s32.totalorder %s134, %s148
      %p150 = scmp.eq.s32.totalorder %s23, 0
      %p151 = por %p149, %p150
      %s152 = ssub.s32 %s24, %s36
      %p153 = scmp.eq.s32.totalorder %s152, 0
      %s155 = sadd.s32 %s154, 1
      %s156 = scalar_select %p153, %s154, %s155
      %p159 = pneg %p153
      %p160 = scmp.eq.s32.totalorder %s17, 1
      %p161 = por %p159, %p160
      %p162 = scmp.ne.s32.totalorder %s154, %s157
      %p163 = scmp.eq.s32.totalorder %s17, 0
      %p164 = por %p162, %p163
      %p165 = scmp.ne.s32.totalorder %s154, %s157
      %p166 = scmp.eq.s32.totalorder %s22, 1
      %p167 = por %p165, %p166
      %p168 = scmp.ne.s32.totalorder %s157, %s158
      %p169 = scmp.eq.s32.totalorder %s22, 0
      %p170 = por %p168, %p169
      %p171 = scmp.ne.s32.totalorder %s157, %s158
      %p172 = scmp.eq.s32.totalorder %s23, 1
      %p173 = por %p171, %p172
      %p175 = scmp.ne.s32.totalorder %s158, %s174
      %p176 = scmp.eq.s32.totalorder %s23, 0
      %p177 = por %p175, %p176
      %s178 = ssub.s32 %s24, %s36
      %s179 = ssub.s32 %s25, %s32
      %s180 = sor.u32 %s178, %s179
      %p181 = scmp.eq.s32.totalorder %s180, 0
      %s183 = sadd.s32 %s182, 1
      %s184 = scalar_select %p181, %s182, %s183
      %p187 = pneg %p181
      %p188 = scmp.eq.s32.totalorder %s17, 1
      %p189 = por %p187, %p188
      %p190 = scmp.ne.s32.totalorder %s182, %s185
      %p191 = scmp.eq.s32.totalorder %s17, 0
      %p192 = por %p190, %p191
      %p193 = scmp.ne.s32.totalorder %s182, %s185
      %p194 = scmp.eq.s32.totalorder %s22, 1
      %p195 = por %p193, %p194
      %p196 = scmp.ne.s32.totalorder %s185, %s186
      %p197 = scmp.eq.s32.totalorder %s22, 0
      %p198 = por %p196, %p197
      %p199 = scmp.ne.s32.totalorder %s185, %s186
      %p200 = scmp.eq.s32.totalorder %s23, 1
      %p201 = por %p199, %p200
      %p203 = scmp.ne.s32.totalorder %s186, %s202
      %p204 = scmp.eq.s32.totalorder %s23, 0
      %p205 = por %p203, %p204
      %s207 = sadd.s32 %s206, 1
      %p210 = scmp.eq.s32.totalorder %s17, 1
      %p211 = scmp.ne.s32.totalorder %s206, %s208
      %p212 = scmp.eq.s32.totalorder %s17, 0
      %p213 = por %p211, %p212
      %p214 = scmp.ne.s32.totalorder %s206, %s208
      %p215 = scmp.eq.s32.totalorder %s22, 1
      %p216 = por %p214, %p215
      %p217 = scmp.ne.s32.totalorder %s208, %s209
      %p218 = scmp.eq.s32.totalorder %s22, 0
      %p219 = por %p217, %p218
      %p220 = scmp.ne.s32.totalorder %s208, %s209
      %p221 = scmp.eq.s32.totalorder %s23, 1
      %p222 = por %p220, %p221
      %p224 = scmp.ne.s32.totalorder %s209, %s223
      %p225 = scmp.eq.s32.totalorder %s23, 0
      %p226 = por %p224, %p225
      %s228 = sadd.s32 %s227, 1
      %p231 = scmp.eq.s32.totalorder %s17, 1
      %p232 = scmp.ne.s32.totalorder %s227, %s229
      %p233 = scmp.eq.s32.totalorder %s17, 0
      %p234 = por %p232, %p233
      %p235 = scmp.ne.s32.totalorder %s227, %s229
      %p236 = scmp.eq.s32.totalorder %s22, 1
      %p237 = por %p235, %p236
      %p238 = scmp.ne.s32.totalorder %s229, %s230
      %p239 = scmp.eq.s32.totalorder %s22, 0
      %p240 = por %p238, %p239
      %p241 = scmp.ne.s32.totalorder %s229, %s230
      %p242 = scmp.eq.s32.totalorder %s23, 1
      %p243 = por %p241, %p242
      %p245 = scmp.ne.s32.totalorder %s230, %s244
      %p246 = scmp.eq.s32.totalorder %s23, 0
      %p247 = por %p245, %p246
      %s248 = ssub.s32 %s24, %s36
      %s249 = ssub.s32 %s25, %s32
      %s250 = sor.u32 %s248, %s249
      %p251 = scmp.eq.s32.totalorder %s250, 0
      %s253 = sadd.s32 %s252, 1
      %s254 = scalar_select %p251, %s252, %s253
      %p257 = pneg %p251
      %p258 = scmp.eq.s32.totalorder %s17, 1
      %p259 = por %p257, %p258
      %p260 = scmp.ne.s32.totalorder %s252, %s255
      %p261 = scmp.eq.s32.totalorder %s17, 0
      %p262 = por %p260, %p261
      %p263 = scmp.ne.s32.totalorder %s252, %s255
      %p264 = scmp.eq.s32.totalorder %s22, 1
      %p265 = por %p263, %p264
      %p266 = scmp.ne.s32.totalorder %s255, %s256
      %p267 = scmp.eq.s32.totalorder %s22, 0
      %p268 = por %p266, %p267
      %p269 = scmp.ne.s32.totalorder %s255, %s256
      %p270 = scmp.eq.s32.totalorder %s23, 1
      %p271 = por %p269, %p270
      %p273 = scmp.ne.s32.totalorder %s256, %s272
      %p274 = scmp.eq.s32.totalorder %s23, 0
      %p275 = por %p273, %p274
      %p276 = scmp.le.s32.totalorder 1, %s17
      %p277 = scmp.lt.s32.totalorder %s17, 3
      %p278 = pnand %p276, %p277
      %p279 = pneg %p278
      // Predicated region
      $region9: #{tpu_custom_call.1} parent=5 // pred_check
        _
      $region10: #{tpu_custom_call.1} parent=5 // pred_check_branch
        %281 = sbr.rel (%p278) target = $region12
      $region11: #{tpu_custom_call.1} parent=5 // pred_region
        %s282 = ssub.s32 %s17, 1
        // Predicated region
        $region13: #{tpu_custom_call.1} parent=11 // pred_check
          %p283 = pneg %p144
        $region14: #{tpu_custom_call.1} parent=11 // pred_check_branch
          %285 = sbr.rel (%p283) target = $region16
        $region15: #{tpu_custom_call.1} parent=11 // pred_region
          _
        $region16: #{tpu_custom_call.1} parent=11 // pred_fallthru
          _
        // Predicated region
        $region17: #{tpu_custom_call.1} parent=11 // pred_check
          %p286 = pneg %p219
        $region18: #{tpu_custom_call.1} parent=11 // pred_check_branch
          %288 = sbr.rel (%p286) target = $region20
        $region19: #{tpu_custom_call.1} parent=11 // pred_region
          _
        $region20: #{tpu_custom_call.1} parent=11 // pred_fallthru
          _
        // Predicated region
        $region21: #{tpu_custom_call.1} parent=11 // pred_check
          %p289 = pneg %p240
        $region22: #{tpu_custom_call.1} parent=11 // pred_check_branch
          %291 = sbr.rel (%p289) target = $region24
        $region23: #{tpu_custom_call.1} parent=11 // pred_region
          _
        $region24: #{tpu_custom_call.1} parent=11 // pred_fallthru
          _
      $region12: #{tpu_custom_call.1} parent=5 // pred_fallthru
        _
      %p292 = scmp.lt.s32.totalorder %s17, 2
      // Predicated region
      $region25: #{tpu_custom_call.1} parent=5 // pred_check
        %p293 = pneg %p292
      $region26: #{tpu_custom_call.1} parent=5 // pred_check_branch
        %295 = sbr.rel (%p293) target = $region28
      $region27: #{tpu_custom_call.1} parent=5 // pred_region
        // Predicated region
        $region29: #{tpu_custom_call.1} parent=27 // pred_check
          %p296 = pneg %p51
        $region30: #{tpu_custom_call.1} parent=27 // pred_check_branch
          %298 = sbr.rel (%p296) target = $region32
        $region31: #{tpu_custom_call.1} parent=27 // pred_region
          %s299 = smul.u32 16, %s25
          %s300 = ssub.s32 18, %s299
          %p301 = scmp.lt.s32.totalorder %s300, 16
          %s302 = scalar_select %p301, %s300, 16
          %s303 = smul.u32 128, %s302
          %s304 = smul.u32 %s303, 3
          %p305 = scmp.lt.s32.totalorder %s24, 1
          %s306 = scalar_select %p305, %s24, 1
          %p307 = scmp.lt.s32.totalorder %s299, 17
          %s308 = scalar_select %p307, %s299, 17
          %s309 = smul.addr %s308, 3
          %s310 = smul.addr %s306, 54
          %s311 = sadd.s32 %s309, %s310
          %s312 = smul.addr %s311, 8
          %s313 = scalar_lea.vmem %s0, %s312
          %s314 = smul.u32 16, %s25
          %s315 = ssub.s32 18, %s314
          %p316 = scmp.lt.s32.totalorder %s315, 16
          %s317 = scalar_select %p316, %s315, 16
          %s318 = smul.u32 128, %s317
          %s319 = smul.u32 %s318, 3
        $region32: #{tpu_custom_call.1} parent=27 // pred_fallthru
          _
        // Predicated region
        $region33: #{tpu_custom_call.1} parent=27 // pred_check
          %p320 = pneg %p83
        $region34: #{tpu_custom_call.1} parent=27 // pred_check_branch
          %322 = sbr.rel (%p320) target = $region36
        $region35: #{tpu_custom_call.1} parent=27 // pred_region
          %s323 = sadd.s32 %s25, 1
          %s324 = smul.u32 %s323, 16
          %p325 = scmp.lt.s32.totalorder %s24, 1
          %s326 = scalar_select %p325, %s24, 1
          %p327 = scmp.lt.s32.totalorder %s324, 17
          %s328 = scalar_select %p327, %s324, 17
          %s329 = smul.addr %s328, 3
          %s330 = smul.addr %s326, 54
          %s331 = sadd.s32 %s329, %s330
          %s332 = smul.addr %s331, 8
          %s333 = scalar_lea.vmem %s1, %s332
          %s334 = sadd.s32 %s25, 1
          %s335 = smul.u32 %s334, 16
        $region36: #{tpu_custom_call.1} parent=27 // pred_fallthru
          _
        // Predicated region
        $region37: #{tpu_custom_call.1} parent=27 // pred_check
          %p336 = pneg %p117
        $region38: #{tpu_custom_call.1} parent=27 // pred_check_branch
          %338 = sbr.rel (%p336) target = $region40
        $region39: #{tpu_custom_call.1} parent=27 // pred_region
          %s339 = sadd.s32 %s25, 1
          %s340 = smul.u32 %s339, 16
          %s341 = sadd.s32 %s340, 1
          %p342 = scmp.lt.s32.totalorder %s24, 1
          %s343 = scalar_select %p342, %s24, 1
          %p344 = scmp.lt.s32.totalorder %s341, 17
          %s345 = scalar_select %p344, %s341, 17
          %s346 = smul.addr %s345, 3
          %s347 = smul.addr %s343, 54
          %s348 = sadd.s32 %s346, %s347
          %s349 = smul.addr %s348, 8
          %s350 = scalar_lea.vmem %s2, %s349
          %s351 = sadd.s32 %s25, 1
          %s352 = smul.u32 %s351, 16
          %s353 = sadd.s32 %s352, 1
        $region40: #{tpu_custom_call.1} parent=27 // pred_fallthru
          _
        // Predicated region
        $region41: #{tpu_custom_call.1} parent=27 // pred_check
          %p354 = pneg %p164
        $region42: #{tpu_custom_call.1} parent=27 // pred_check_branch
          %356 = sbr.rel (%p354) target = $region44
        $region43: #{tpu_custom_call.1} parent=27 // pred_region
          %p357 = scmp.lt.s32.totalorder %s24, 1
          %s358 = scalar_select %p357, %s24, 1
          %s359 = smul.addr %s358, 4
          %s360 = scalar_lea.vmem %s4, %s359
        $region44: #{tpu_custom_call.1} parent=27 // pred_fallthru
          _
        // Predicated region
        $region45: #{tpu_custom_call.1} parent=27 // pred_check
          %p361 = pneg %p192
        $region46: #{tpu_custom_call.1} parent=27 // pred_check_branch
          %363 = sbr.rel (%p361) target = $region48
        $region47: #{tpu_custom_call.1} parent=27 // pred_region
          %s364 = smul.u32 2, %s25
          %p365 = scmp.lt.s32.totalorder %s24, 1
          %s366 = scalar_select %p365, %s24, 1
          %p367 = scmp.lt.s32.totalorder %s364, 1
          %s368 = scalar_select %p367, %s364, 1
          %s369 = smul.addr %s366, 2
          %s370 = sadd.s32 %s368, %s369
          %s371 = smul.addr %s370, 8
          %s372 = scalar_lea.vmem %s5, %s371
          %s373 = smul.u32 2, %s25
        $region48: #{tpu_custom_call.1} parent=27 // pred_fallthru
          _
      $region28: #{tpu_custom_call.1} parent=5 // pred_fallthru
        _
      %p374 = scmp.le.s32.totalorder 1, %s17
      %p375 = scmp.lt.s32.totalorder %s17, 3
      %p376 = pnand %p374, %p375
      %p377 = pneg %p376
      // Predicated region
      $region49: #{tpu_custom_call.1} parent=5 // pred_check
        _
      $region50: #{tpu_custom_call.1} parent=5 // pred_check_branch
        %379 = sbr.rel (%p376) target = $region52
      $region51: #{tpu_custom_call.1} parent=5 // pred_region
        %s380 = ssub.s32 %s17, 1
        %s381 = smul.u32 16, %s27
        %s382 = ssub.s32 18, %s381
        %p383 = scmp.lt.s32.totalorder %s382, 16
        %s384 = scalar_select %p383, %s382, 16
        %s385 = smul.u32 128, %s384
        %s386 = smul.u32 %s385, 3
        %p387 = scmp.lt.s32.totalorder %s26, 1
        %s388 = scalar_select %p387, %s26, 1
        %p389 = scmp.lt.s32.totalorder %s381, 17
        %s390 = scalar_select %p389, %s381, 17
        %s391 = smul.addr %s390, 3
        %s392 = smul.addr %s388, 54
        %s393 = sadd.s32 %s391, %s392
        %s394 = smul.addr %s393, 8
        %s395 = scalar_lea.vmem %s0, %s394
        %p396 = pneg %p57
        %p397 = pneg %p54
        %s398 = sadd.s32 %s27, 1
        %s399 = smul.u32 %s398, 16
        %p400 = scmp.lt.s32.totalorder %s26, 1
        %s401 = scalar_select %p400, %s26, 1
        %p402 = scmp.lt.s32.totalorder %s399, 17
        %s403 = scalar_select %p402, %s399, 17
        %s404 = smul.addr %s403, 3
        %s405 = smul.addr %s401, 54
        %s406 = sadd.s32 %s404, %s405
        %s407 = smul.addr %s406, 8
        %s408 = scalar_lea.vmem %s1, %s407
        %p409 = pneg %p89
        %p410 = pneg %p86
        %s411 = sadd.s32 %s27, 1
        %s412 = smul.u32 %s411, 16
        %s413 = sadd.s32 %s412, 1
        %p414 = scmp.lt.s32.totalorder %s26, 1
        %s415 = scalar_select %p414, %s26, 1
        %p416 = scmp.lt.s32.totalorder %s413, 17
        %s417 = scalar_select %p416, %s413, 17
        %s418 = smul.addr %s417, 3
        %s419 = smul.addr %s415, 54
        %s420 = sadd.s32 %s418, %s419
        %s421 = smul.addr %s420, 8
        %s422 = scalar_lea.vmem %s2, %s421
        %p423 = pneg %p123
        %p424 = pneg %p120
        %p425 = pneg %p144
        %p426 = pneg %p141
        %p427 = scmp.lt.s32.totalorder %s26, 1
        %s428 = scalar_select %p427, %s26, 1
        %s429 = smul.addr %s428, 4
        %s430 = scalar_lea.vmem %s4, %s429
        %p431 = pneg %p170
        %p432 = pneg %p167
        %s433 = smul.u32 2, %s27
        %p434 = scmp.lt.s32.totalorder %s26, 1
        %s435 = scalar_select %p434, %s26, 1
        %p436 = scmp.lt.s32.totalorder %s433, 1
        %s437 = scalar_select %p436, %s433, 1
        %s438 = smul.addr %s435, 2
        %s439 = sadd.s32 %s437, %s438
        %s440 = smul.addr %s439, 8
        %s441 = scalar_lea.vmem %s5, %s440
        %p442 = pneg %p198
        %p443 = pneg %p195
        %p444 = pneg %p219
        %p445 = pneg %p216
        %p446 = pneg %p240
        %p447 = pneg %p237
        %p448 = pneg %p268
        %p449 = pneg %p265
        %s450 = sand.u32 %s255, 1
        %s451 = scalar_lea.sflag [#allocation5], %s450
        %s452 = sand.u32 %s255, 1
        %s453 = smul.addr %s452, 128
        %s454 = scalar_lea.vmem [#allocation4], %s453
        %s455 = smul.u32 16, %s27
        %s456 = ssub.s32 18, %s455
        %p457 = scmp.lt.s32.totalorder %s456, 16
        %s458 = scalar_select %p457, %s456, 16
        %s459 = smul.u32 128, %s458
        %s460 = smul.u32 %s459, 3
        %p461 = scmp.lt.s32.totalorder %s26, 1
        %s462 = scalar_select %p461, %s26, 1
        %p463 = scmp.lt.s32.totalorder %s455, 17
        %s464 = scalar_select %p463, %s455, 17
        %s465 = smul.addr %s464, 3
        %s466 = smul.addr %s462, 54
        %s467 = sadd.s32 %s465, %s466
        %s468 = smul.addr %s467, 8
        %s469 = scalar_lea.vmem %s0, %s468
        %s470 = smul.u32 16, %s27
        %s471 = ssub.s32 18, %s470
        %p472 = scmp.lt.s32.totalorder %s471, 16
        %s473 = scalar_select %p472, %s471, 16
        %s474 = smul.u32 128, %s473
        %s475 = smul.u32 %s474, 3
        %s476 = sadd.s32 %s27, 1
        %s477 = smul.u32 %s476, 16
        %p478 = scmp.lt.s32.totalorder %s26, 1
        %s479 = scalar_select %p478, %s26, 1
        %p480 = scmp.lt.s32.totalorder %s477, 17
        %s481 = scalar_select %p480, %s477, 17
        %s482 = smul.addr %s481, 3
        %s483 = smul.addr %s479, 54
        %s484 = sadd.s32 %s482, %s483
        %s485 = smul.addr %s484, 8
        %s486 = scalar_lea.vmem %s1, %s485
        %s487 = sadd.s32 %s27, 1
        %s488 = smul.u32 %s487, 16
        %s489 = sadd.s32 %s27, 1
        %s490 = smul.u32 %s489, 16
        %s491 = sadd.s32 %s490, 1
        %p492 = scmp.lt.s32.totalorder %s26, 1
        %s493 = scalar_select %p492, %s26, 1
        %p494 = scmp.lt.s32.totalorder %s491, 17
        %s495 = scalar_select %p494, %s491, 17
        %s496 = smul.addr %s495, 3
        %s497 = smul.addr %s493, 54
        %s498 = sadd.s32 %s496, %s497
        %s499 = smul.addr %s498, 8
        %s500 = scalar_lea.vmem %s2, %s499
        %s501 = sadd.s32 %s27, 1
        %s502 = smul.u32 %s501, 16
        %s503 = sadd.s32 %s502, 1
        %p504 = scmp.lt.s32.totalorder %s26, 1
        %s505 = scalar_select %p504, %s26, 1
        %s506 = smul.addr %s505, 4
        %s507 = scalar_lea.vmem %s4, %s506
        %s508 = smul.u32 2, %s27
        %p509 = scmp.lt.s32.totalorder %s26, 1
        %s510 = scalar_select %p509, %s26, 1
        %p511 = scmp.lt.s32.totalorder %s508, 1
        %s512 = scalar_select %p511, %s508, 1
        %s513 = smul.addr %s510, 2
        %s514 = sadd.s32 %s512, %s513
        %s515 = smul.addr %s514, 8
        %s516 = scalar_lea.vmem %s5, %s515
        %s517 = smul.u32 2, %s27
        %s518 = smul.u32 32, %s27
        %p520 = scmp.eq.s32.totalorder %s27, 0
        // Predicated region
        $region53: #{tpu_custom_call.1} parent=51 // pred_check
          %p521 = pneg %p520
        $region54: #{tpu_custom_call.1} parent=51 // pred_check_branch
          %523 = sbr.rel (%p521) target = $region56
        $region55: #{tpu_custom_call.1} parent=51 // pred_region
          %v524 = vld [vmem:[%s3] sm:$0x3]
          %v525 = vld [vmem:[%s3 + $0x2] sm:$0x3]
          %v526 = vld [vmem:[%s3 + $0x4] sm:$0x3]
          %v527 = vld [vmem:[%s3 + $0x6] sm:$0x3]
          %v528 = vld [vmem:[%s3 + $0x8] sm:$0x3]
          %v529 = vld [vmem:[%s3 + $0xa] sm:$0x3]
          %v530 = vld [vmem:[%s3 + $0xc] sm:$0x3]
          %v531 = vld [vmem:[%s3 + $0xe] sm:$0x3]
          %v532 = vld [vmem:[%s3 + $0x10] sm:$0x3]
          %v533 = vunpack.c.l.bf16 %v524
          %v534 = vunpack.c.l.bf16 %v525
          %v535 = vunpack.c.l.bf16 %v526
          %v536 = vunpack.c.l.bf16 %v527
          %v537 = vunpack.c.l.bf16 %v528
          %v538 = vunpack.c.l.bf16 %v529
          %v539 = vunpack.c.l.bf16 %v530
          %v540 = vunpack.c.l.bf16 %v531
          %v541 = vunpack.c.l.bf16 %v532
          %v542 = vld [vmem:[%s507] sm:$0xf]
          %v543 = vadd.f32 %v542, 1.0
          %545 = vset.pattern.permute.xlu0 0
          %546 = vperm.xlu0 %545, %v543
          %v547 = vpop.permute.xlu0 %546
          %v549 = vmul.f32 %v533, %v547
          %v550 = vmul.f32 %v534, %v547
          %v551 = vmul.f32 %v535, %v547
          %v552 = vmul.f32 %v536, %v547
          %v553 = vmul.f32 %v537, %v547
          %v554 = vmul.f32 %v538, %v547
          %v555 = vmul.f32 %v539, %v547
          %v556 = vmul.f32 %v540, %v547
          %v557 = vmul.f32 %v541, %v547
          %v558 = vmul.f32 %v549, %v549
          %v559 = vmul.f32 %v550, %v550
          %v560 = vmul.f32 %v551, %v551
          %v561 = vmul.f32 %v552, %v552
          %v562 = vmul.f32 %v553, %v553
          %v563 = vmul.f32 %v554, %v554
          %v564 = vmul.f32 %v555, %v555
          %v565 = vmul.f32 %v556, %v556
          %v566 = vmul.f32 %v557, %v557
          %vm567 = vcmask 1043456
          %v568 = vsel %vm567, %v558, 0.0
          %v569 = vsel %vm567, %v559, 0.0
          %v570 = vadd.f32 %v568, %v569
          %v571 = vsel %vm567, %v560, 0.0
          %v572 = vadd.f32 %v570, %v571
          %v573 = vsel %vm567, %v561, 0.0
          %v574 = vadd.f32 %v572, %v573
          %v575 = vsel %vm567, %v562, 0.0
          %v576 = vadd.f32 %v574, %v575
          %v577 = vsel %vm567, %v563, 0.0
          %v578 = vadd.f32 %v576, %v577
          %v579 = vsel %vm567, %v564, 0.0
          %v580 = vadd.f32 %v578, %v579
          %v581 = vsel %vm567, %v565, 0.0
          %v582 = vadd.f32 %v580, %v581
          %v583 = vsel %vm567, %v566, 0.0
          %v584 = vadd.f32 %v582, %v583
          %v585 = vsel %vm567, %v584, 0.0
          %v586 = vrot.slane %v585, 4
          %v587 = vadd.f32 %v585, %v586
          %v588 = vrot.slane %v587, 2
          %v589 = vadd.f32 %v587, %v588
          %v590 = vrot.slane %v589, 1
          %v591 = vadd.f32 %v589, %v590
          %v592 = vadd.f32 %v591, 1e-08
          %v593 = vrsqrt.pop %v592
          %v594 = vmul.f32 %v549, %v593
          %v595 = vmul.f32 %v550, %v593
          %v596 = vmul.f32 %v551, %v593
          %v597 = vmul.f32 %v552, %v593
          %v598 = vmul.f32 %v553, %v593
          %v599 = vmul.f32 %v554, %v593
          %v600 = vmul.f32 %v555, %v593
          %v601 = vmul.f32 %v556, %v593
          %v602 = vmul.f32 %v557, %v593
          %v603 = vpack.c.bf16 %v594, %v594
          %v604 = vpack.c.bf16 %v595, %v595
          %v605 = vpack.c.bf16 %v596, %v596
          %v606 = vpack.c.bf16 %v597, %v597
          %v607 = vpack.c.bf16 %v598, %v598
          %v608 = vpack.c.bf16 %v599, %v599
          %v609 = vpack.c.bf16 %v600, %v600
          %v610 = vpack.c.bf16 %v601, %v601
          %v611 = vpack.c.bf16 %v602, %v602
          %612 = vst [vmem:[#allocation2] sm:$0x3] %v603
          %v614 = vunpack.c.l.b16 %v604
          %v615 = vpack.c.b16 %v614, %v614
          %v616 = vrot.slane %v615, 6
          %618 = vst [vmem:[#allocation2] sm:$0xc] %v616
          %619 = vst [vmem:[#allocation2 + $0x4] sm:$0x3] %v605
          %v621 = vunpack.c.l.b16 %v606
          %v622 = vpack.c.b16 %v621, %v621
          %v623 = vrot.slane %v622, 6
          %625 = vst [vmem:[#allocation2 + $0x4] sm:$0xc] %v623
          %626 = vst [vmem:[#allocation2 + $0x8] sm:$0x3] %v607
          %v628 = vunpack.c.l.b16 %v608
          %v629 = vpack.c.b16 %v628, %v628
          %v630 = vrot.slane %v629, 6
          %632 = vst [vmem:[#allocation2 + $0x8] sm:$0xc] %v630
          %633 = vst [vmem:[#allocation2 + $0xc] sm:$0x3] %v609
          %v635 = vunpack.c.l.b16 %v610
          %v636 = vpack.c.b16 %v635, %v635
          %v637 = vrot.slane %v636, 6
          %639 = vst [vmem:[#allocation2 + $0xc] sm:$0xc] %v637
          %640 = vst [vmem:[#allocation2 + $0x10] sm:$0x3] %v611
        $region56: #{tpu_custom_call.1} parent=51 // pred_fallthru
          _
        %v641 = vld [vmem:[%s469] sm:$0xff]
        %v642 = vld [vmem:[%s469 + $0x8] sm:$0xff]
        %v643 = vld [vmem:[%s469 + $0x18] sm:$0xff]
        %v644 = vld [vmem:[%s469 + $0x20] sm:$0xff]
        %v645 = vld [vmem:[%s469 + $0x30] sm:$0xff]
        %v646 = vld [vmem:[%s469 + $0x38] sm:$0xff]
        %v647 = vld [vmem:[%s469 + $0x48] sm:$0xff]
        %v648 = vld [vmem:[%s469 + $0x50] sm:$0xff]
        %v649 = vld [vmem:[%s469 + $0x60] sm:$0xff]
        %v650 = vld [vmem:[%s469 + $0x68] sm:$0xff]
        %v651 = vld [vmem:[%s469 + $0x78] sm:$0xff]
        %v652 = vld [vmem:[%s469 + $0x80] sm:$0xff]
        %v653 = vld [vmem:[%s469 + $0x90] sm:$0xff]
        %v654 = vld [vmem:[%s469 + $0x98] sm:$0xff]
        %v655 = vld [vmem:[%s469 + $0xa8] sm:$0xff]
        %v656 = vld [vmem:[%s469 + $0xb0] sm:$0xff]
        %v657 = vld [vmem:[%s469 + $0xc0] sm:$0xff]
        %v658 = vld [vmem:[%s469 + $0xc8] sm:$0xff]
        %v659 = vld [vmem:[%s469 + $0xd8] sm:$0xff]
        %v660 = vld [vmem:[%s469 + $0xe0] sm:$0xff]
        %v661 = vld [vmem:[%s469 + $0xf0] sm:$0xff]
        %v662 = vld [vmem:[%s469 + $0xf8] sm:$0xff]
        %v663 = vld [vmem:[%s469 + $0x108] sm:$0xff]
        %v664 = vld [vmem:[%s469 + $0x110] sm:$0xff]
        %v665 = vld [vmem:[%s469 + $0x120] sm:$0xff]
        %v666 = vld [vmem:[%s469 + $0x128] sm:$0xff]
        %v667 = vld [vmem:[%s469 + $0x138] sm:$0xff]
        %v668 = vld [vmem:[%s469 + $0x140] sm:$0xff]
        %v669 = vld [vmem:[%s469 + $0x150] sm:$0xff]
        %v670 = vld [vmem:[%s469 + $0x158] sm:$0xff]
        %v671 = vld [vmem:[%s469 + $0x168] sm:$0xff]
        %v672 = vld [vmem:[%s469 + $0x170] sm:$0xff]
        %v673 = vpack.c.bf16 %v642, %v641
        %v674 = vpack.c.bf16 %v644, %v643
        %v675 = vpack.c.bf16 %v646, %v645
        %v676 = vpack.c.bf16 %v648, %v647
        %v677 = vpack.c.bf16 %v650, %v649
        %v678 = vpack.c.bf16 %v652, %v651
        %v679 = vpack.c.bf16 %v654, %v653
        %v680 = vpack.c.bf16 %v656, %v655
        %v681 = vpack.c.bf16 %v658, %v657
        %v682 = vpack.c.bf16 %v660, %v659
        %v683 = vpack.c.bf16 %v662, %v661
        %v684 = vpack.c.bf16 %v664, %v663
        %v685 = vpack.c.bf16 %v666, %v665
        %v686 = vpack.c.bf16 %v668, %v667
        %v687 = vpack.c.bf16 %v670, %v669
        %v688 = vpack.c.bf16 %v672, %v671
        %vm689 = vcmask 31744
        %690 = vst.msk [vmem:[#allocation3] sm:$0xff] %vm689, %v673
        %691 = vst.msk [vmem:[#allocation3 + $0x8] sm:$0xff] %vm689, %v674
        %692 = vst.msk [vmem:[#allocation3 + $0x10] sm:$0xff] %vm689, %v675
        %693 = vst.msk [vmem:[#allocation3 + $0x18] sm:$0xff] %vm689, %v676
        %694 = vst.msk [vmem:[#allocation3 + $0x20] sm:$0xff] %vm689, %v677
        %695 = vst.msk [vmem:[#allocation3 + $0x28] sm:$0xff] %vm689, %v678
        %696 = vst.msk [vmem:[#allocation3 + $0x30] sm:$0xff] %vm689, %v679
        %697 = vst.msk [vmem:[#allocation3 + $0x38] sm:$0xff] %vm689, %v680
        %698 = vst.msk [vmem:[#allocation3 + $0x40] sm:$0xff] %vm689, %v681
        %699 = vst.msk [vmem:[#allocation3 + $0x48] sm:$0xff] %vm689, %v682
        %700 = vst.msk [vmem:[#allocation3 + $0x50] sm:$0xff] %vm689, %v683
        %701 = vst.msk [vmem:[#allocation3 + $0x58] sm:$0xff] %vm689, %v684
        %702 = vst.msk [vmem:[#allocation3 + $0x60] sm:$0xff] %vm689, %v685
        %703 = vst.msk [vmem:[#allocation3 + $0x68] sm:$0xff] %vm689, %v686
        %704 = vst.msk [vmem:[#allocation3 + $0x70] sm:$0xff] %vm689, %v687
        %705 = vst.msk [vmem:[#allocation3 + $0x78] sm:$0xff] %vm689, %v688
        %v706 = vld [vmem:[%s469 + $0x1] sm:$0xff]
        %v707 = vld [vmem:[%s469 + $0x9] sm:$0xff]
        %v708 = vld [vmem:[%s469 + $0x19] sm:$0xff]
        %v709 = vld [vmem:[%s469 + $0x21] sm:$0xff]
        %v710 = vld [vmem:[%s469 + $0x31] sm:$0xff]
        %v711 = vld [vmem:[%s469 + $0x39] sm:$0xff]
        %v712 = vld [vmem:[%s469 + $0x49] sm:$0xff]
        %v713 = vld [vmem:[%s469 + $0x51] sm:$0xff]
        %v714 = vld [vmem:[%s469 + $0x61] sm:$0xff]
        %v715 = vld [vmem:[%s469 + $0x69] sm:$0xff]
        %v716 = vld [vmem:[%s469 + $0x79] sm:$0xff]
        %v717 = vld [vmem:[%s469 + $0x81] sm:$0xff]
        %v718 = vld [vmem:[%s469 + $0x91] sm:$0xff]
        %v719 = vld [vmem:[%s469 + $0x99] sm:$0xff]
        %v720 = vld [vmem:[%s469 + $0xa9] sm:$0xff]
        %v721 = vld [vmem:[%s469 + $0xb1] sm:$0xff]
        %v722 = vld [vmem:[%s469 + $0xc1] sm:$0xff]
        %v723 = vld [vmem:[%s469 + $0xc9] sm:$0xff]
        %v724 = vld [vmem:[%s469 + $0xd9] sm:$0xff]
        %v725 = vld [vmem:[%s469 + $0xe1] sm:$0xff]
        %v726 = vld [vmem:[%s469 + $0xf1] sm:$0xff]
        %v727 = vld [vmem:[%s469 + $0xf9] sm:$0xff]
        %v728 = vld [vmem:[%s469 + $0x109] sm:$0xff]
        %v729 = vld [vmem:[%s469 + $0x111] sm:$0xff]
        %v730 = vld [vmem:[%s469 + $0x121] sm:$0xff]
        %v731 = vld [vmem:[%s469 + $0x129] sm:$0xff]
        %v732 = vld [vmem:[%s469 + $0x139] sm:$0xff]
        %v733 = vld [vmem:[%s469 + $0x141] sm:$0xff]
        %v734 = vld [vmem:[%s469 + $0x151] sm:$0xff]
        %v735 = vld [vmem:[%s469 + $0x159] sm:$0xff]
        %v736 = vld [vmem:[%s469 + $0x169] sm:$0xff]
        %v737 = vld [vmem:[%s469 + $0x171] sm:$0xff]
        %v738 = vpack.c.bf16 %v707, %v706
        %v739 = vpack.c.bf16 %v709, %v708
        %v740 = vpack.c.bf16 %v711, %v710
        %v741 = vpack.c.bf16 %v713, %v712
        %v742 = vpack.c.bf16 %v715, %v714
        %v743 = vpack.c.bf16 %v717, %v716
        %v744 = vpack.c.bf16 %v719, %v718
        %v745 = vpack.c.bf16 %v721, %v720
        %v746 = vpack.c.bf16 %v723, %v722
        %v747 = vpack.c.bf16 %v725, %v724
        %v748 = vpack.c.bf16 %v727, %v726
        %v749 = vpack.c.bf16 %v729, %v728
        %v750 = vpack.c.bf16 %v731, %v730
        %v751 = vpack.c.bf16 %v733, %v732
        %v752 = vpack.c.bf16 %v735, %v734
        %v753 = vpack.c.bf16 %v737, %v736
        %770 = vrot.lane.b32.xlu0 %v738, 4
        %v771 = vpop.permute.xlu0 %770
        %772 = vrot.lane.b32.xlu0 %v739, 4
        %v773 = vpop.permute.xlu0 %772
        %774 = vrot.lane.b32.xlu0 %v740, 4
        %v775 = vpop.permute.xlu0 %774
        %776 = vrot.lane.b32.xlu0 %v741, 4
        %v777 = vpop.permute.xlu0 %776
        %778 = vrot.lane.b32.xlu0 %v742, 4
        %v779 = vpop.permute.xlu0 %778
        %780 = vrot.lane.b32.xlu0 %v743, 4
        %v781 = vpop.permute.xlu0 %780
        %782 = vrot.lane.b32.xlu0 %v744, 4
        %v783 = vpop.permute.xlu0 %782
        %784 = vrot.lane.b32.xlu0 %v745, 4
        %v785 = vpop.permute.xlu0 %784
        %786 = vrot.lane.b32.xlu0 %v746, 4
        %v787 = vpop.permute.xlu0 %786
        %788 = vrot.lane.b32.xlu0 %v747, 4
        %v789 = vpop.permute.xlu0 %788
        %790 = vrot.lane.b32.xlu0 %v748, 4
        %v791 = vpop.permute.xlu0 %790
        %792 = vrot.lane.b32.xlu0 %v749, 4
        %v793 = vpop.permute.xlu0 %792
        %794 = vrot.lane.b32.xlu0 %v750, 4
        %v795 = vpop.permute.xlu0 %794
        %796 = vrot.lane.b32.xlu0 %v751, 4
        %v797 = vpop.permute.xlu0 %796
        %798 = vrot.lane.b32.xlu0 %v752, 4
        %v799 = vpop.permute.xlu0 %798
        %800 = vrot.lane.b32.xlu0 %v753, 4
        %v801 = vpop.permute.xlu0 %800
        %vm818 = vcmask 64544
        %819 = vst.msk [vmem:[#allocation3] sm:$0xff] %vm818, %v771
        %820 = vst.msk [vmem:[#allocation3 + $0x8] sm:$0xff] %vm818, %v773
        %821 = vst.msk [vmem:[#allocation3 + $0x10] sm:$0xff] %vm818, %v775
        %822 = vst.msk [vmem:[#allocation3 + $0x18] sm:$0xff] %vm818, %v777
        %823 = vst.msk [vmem:[#allocation3 + $0x20] sm:$0xff] %vm818, %v779
        %824 = vst.msk [vmem:[#allocation3 + $0x28] sm:$0xff] %vm818, %v781
        %825 = vst.msk [vmem:[#allocation3 + $0x30] sm:$0xff] %vm818, %v783
        %826 = vst.msk [vmem:[#allocation3 + $0x38] sm:$0xff] %vm818, %v785
        %827 = vst.msk [vmem:[#allocation3 + $0x40] sm:$0xff] %vm818, %v787
        %828 = vst.msk [vmem:[#allocation3 + $0x48] sm:$0xff] %vm818, %v789
        %829 = vst.msk [vmem:[#allocation3 + $0x50] sm:$0xff] %vm818, %v791
        %830 = vst.msk [vmem:[#allocation3 + $0x58] sm:$0xff] %vm818, %v793
        %831 = vst.msk [vmem:[#allocation3 + $0x60] sm:$0xff] %vm818, %v795
        %832 = vst.msk [vmem:[#allocation3 + $0x68] sm:$0xff] %vm818, %v797
        %833 = vst.msk [vmem:[#allocation3 + $0x70] sm:$0xff] %vm818, %v799
        %834 = vst.msk [vmem:[#allocation3 + $0x78] sm:$0xff] %vm818, %v801
        %v835 = vld [vmem:[%s469 + $0x2] sm:$0xff]
        %v836 = vld [vmem:[%s469 + $0xa] sm:$0xff]
        %v837 = vld [vmem:[%s469 + $0x1a] sm:$0xff]
        %v838 = vld [vmem:[%s469 + $0x22] sm:$0xff]
        %v839 = vld [vmem:[%s469 + $0x32] sm:$0xff]
        %v840 = vld [vmem:[%s469 + $0x3a] sm:$0xff]
        %v841 = vld [vmem:[%s469 + $0x4a] sm:$0xff]
        %v842 = vld [vmem:[%s469 + $0x52] sm:$0xff]
        %v843 = vld [vmem:[%s469 + $0x62] sm:$0xff]
        %v844 = vld [vmem:[%s469 + $0x6a] sm:$0xff]
        %v845 = vld [vmem:[%s469 + $0x7a] sm:$0xff]
        %v846 = vld [vmem:[%s469 + $0x82] sm:$0xff]
        %v847 = vld [vmem:[%s469 + $0x92] sm:$0xff]
        %v848 = vld [vmem:[%s469 + $0x9a] sm:$0xff]
        %v849 = vld [vmem:[%s469 + $0xaa] sm:$0xff]
        %v850 = vld [vmem:[%s469 + $0xb2] sm:$0xff]
        %v851 = vld [vmem:[%s469 + $0xc2] sm:$0xff]
        %v852 = vld [vmem:[%s469 + $0xca] sm:$0xff]
        %v853 = vld [vmem:[%s469 + $0xda] sm:$0xff]
        %v854 = vld [vmem:[%s469 + $0xe2] sm:$0xff]
        %v855 = vld [vmem:[%s469 + $0xf2] sm:$0xff]
        %v856 = vld [vmem:[%s469 + $0xfa] sm:$0xff]
        %v857 = vld [vmem:[%s469 + $0x10a] sm:$0xff]
        %v858 = vld [vmem:[%s469 + $0x112] sm:$0xff]
        %v859 = vld [vmem:[%s469 + $0x122] sm:$0xff]
        %v860 = vld [vmem:[%s469 + $0x12a] sm:$0xff]
        %v861 = vld [vmem:[%s469 + $0x13a] sm:$0xff]
        %v862 = vld [vmem:[%s469 + $0x142] sm:$0xff]
        %v863 = vld [vmem:[%s469 + $0x152] sm:$0xff]
        %v864 = vld [vmem:[%s469 + $0x15a] sm:$0xff]
        %v865 = vld [vmem:[%s469 + $0x16a] sm:$0xff]
        %v866 = vld [vmem:[%s469 + $0x172] sm:$0xff]
        %v867 = vpack.c.bf16 %v836, %v835
        %v868 = vpack.c.bf16 %v838, %v837
        %v869 = vpack.c.bf16 %v840, %v839
        %v870 = vpack.c.bf16 %v842, %v841
        %v871 = vpack.c.bf16 %v844, %v843
        %v872 = vpack.c.bf16 %v846, %v845
        %v873 = vpack.c.bf16 %v848, %v847
        %v874 = vpack.c.bf16 %v850, %v849
        %v875 = vpack.c.bf16 %v852, %v851
        %v876 = vpack.c.bf16 %v854, %v853
        %v877 = vpack.c.bf16 %v856, %v855
        %v878 = vpack.c.bf16 %v858, %v857
        %v879 = vpack.c.bf16 %v860, %v859
        %v880 = vpack.c.bf16 %v862, %v861
        %v881 = vpack.c.bf16 %v864, %v863
        %v882 = vpack.c.bf16 %v866, %v865
        %899 = vrot.lane.b32.xlu0 %v867, 8
        %v900 = vpop.permute.xlu0 %899
        %901 = vrot.lane.b32.xlu0 %v868, 8
        %v902 = vpop.permute.xlu0 %901
        %903 = vrot.lane.b32.xlu0 %v869, 8
        %v904 = vpop.permute.xlu0 %903
        %905 = vrot.lane.b32.xlu0 %v870, 8
        %v906 = vpop.permute.xlu0 %905
        %907 = vrot.lane.b32.xlu0 %v871, 8
        %v908 = vpop.permute.xlu0 %907
        %909 = vrot.lane.b32.xlu0 %v872, 8
        %v910 = vpop.permute.xlu0 %909
        %911 = vrot.lane.b32.xlu0 %v873, 8
        %v912 = vpop.permute.xlu0 %911
        %913 = vrot.lane.b32.xlu0 %v874, 8
        %v914 = vpop.permute.xlu0 %913
        %915 = vrot.lane.b32.xlu0 %v875, 8
        %v916 = vpop.permute.xlu0 %915
        %917 = vrot.lane.b32.xlu0 %v876, 8
        %v918 = vpop.permute.xlu0 %917
        %919 = vrot.lane.b32.xlu0 %v877, 8
        %v920 = vpop.permute.xlu0 %919
        %921 = vrot.lane.b32.xlu0 %v878, 8
        %v922 = vpop.permute.xlu0 %921
        %923 = vrot.lane.b32.xlu0 %v879, 8
        %v924 = vpop.permute.xlu0 %923
        %925 = vrot.lane.b32.xlu0 %v880, 8
        %v926 = vpop.permute.xlu0 %925
        %927 = vrot.lane.b32.xlu0 %v881, 8
        %v928 = vpop.permute.xlu0 %927
        %929 = vrot.lane.b32.xlu0 %v882, 8
        %v930 = vpop.permute.xlu0 %929
        %vm947 = vcmask 97344
        %948 = vst.msk [vmem:[#allocation3] sm:$0xff] %vm947, %v900
        %949 = vst.msk [vmem:[#allocation3 + $0x8] sm:$0xff] %vm947, %v902
        %950 = vst.msk [vmem:[#allocation3 + $0x10] sm:$0xff] %vm947, %v904
        %951 = vst.msk [vmem:[#allocation3 + $0x18] sm:$0xff] %vm947, %v906
        %952 = vst.msk [vmem:[#allocation3 + $0x20] sm:$0xff] %vm947, %v908
        %953 = vst.msk [vmem:[#allocation3 + $0x28] sm:$0xff] %vm947, %v910
        %954 = vst.msk [vmem:[#allocation3 + $0x30] sm:$0xff] %vm947, %v912
        %955 = vst.msk [vmem:[#allocation3 + $0x38] sm:$0xff] %vm947, %v914
        %956 = vst.msk [vmem:[#allocation3 + $0x40] sm:$0xff] %vm947, %v916
        %957 = vst.msk [vmem:[#allocation3 + $0x48] sm:$0xff] %vm947, %v918
        %958 = vst.msk [vmem:[#allocation3 + $0x50] sm:$0xff] %vm947, %v920
        %959 = vst.msk [vmem:[#allocation3 + $0x58] sm:$0xff] %vm947, %v922
        %960 = vst.msk [vmem:[#allocation3 + $0x60] sm:$0xff] %vm947, %v924
        %961 = vst.msk [vmem:[#allocation3 + $0x68] sm:$0xff] %vm947, %v926
        %962 = vst.msk [vmem:[#allocation3 + $0x70] sm:$0xff] %vm947, %v928
        %963 = vst.msk [vmem:[#allocation3 + $0x78] sm:$0xff] %vm947, %v930
        %s964 = scalar_lea.vmem %s469, 24
        %v965 = vld [vmem:[%s964] sm:$0xff]
        %v966 = vld [vmem:[%s964 + $0x8] sm:$0xff]
        %v967 = vld [vmem:[%s964 + $0x18] sm:$0xff]
        %v968 = vld [vmem:[%s964 + $0x20] sm:$0xff]
        %v969 = vld [vmem:[%s964 + $0x30] sm:$0xff]
        %v970 = vld [vmem:[%s964 + $0x38] sm:$0xff]
        %v971 = vld [vmem:[%s964 + $0x48] sm:$0xff]
        %v972 = vld [vmem:[%s964 + $0x50] sm:$0xff]
        %v973 = vld [vmem:[%s964 + $0x60] sm:$0xff]
        %v974 = vld [vmem:[%s964 + $0x68] sm:$0xff]
        %v975 = vld [vmem:[%s964 + $0x78] sm:$0xff]
        %v976 = vld [vmem:[%s964 + $0x80] sm:$0xff]
        %v977 = vld [vmem:[%s964 + $0x90] sm:$0xff]
        %v978 = vld [vmem:[%s964 + $0x98] sm:$0xff]
        %v979 = vld [vmem:[%s964 + $0xa8] sm:$0xff]
        %v980 = vld [vmem:[%s964 + $0xb0] sm:$0xff]
        %v981 = vld [vmem:[%s964 + $0xc0] sm:$0xff]
        %v982 = vld [vmem:[%s964 + $0xc8] sm:$0xff]
        %v983 = vld [vmem:[%s964 + $0xd8] sm:$0xff]
        %v984 = vld [vmem:[%s964 + $0xe0] sm:$0xff]
        %v985 = vld [vmem:[%s964 + $0xf0] sm:$0xff]
        %v986 = vld [vmem:[%s964 + $0xf8] sm:$0xff]
        %v987 = vld [vmem:[%s964 + $0x108] sm:$0xff]
        %v988 = vld [vmem:[%s964 + $0x110] sm:$0xff]
        %v989 = vld [vmem:[%s964 + $0x120] sm:$0xff]
        %v990 = vld [vmem:[%s964 + $0x128] sm:$0xff]
        %v991 = vld [vmem:[%s964 + $0x138] sm:$0xff]
        %v992 = vld [vmem:[%s964 + $0x140] sm:$0xff]
        %v993 = vld [vmem:[%s964 + $0x150] sm:$0xff]
        %v994 = vld [vmem:[%s964 + $0x158] sm:$0xff]
        %v995 = vpack.c.bf16 %v966, %v965
        %v996 = vpack.c.bf16 %v968, %v967
        %v997 = vpack.c.bf16 %v970, %v969
        %v998 = vpack.c.bf16 %v972, %v971
        %v999 = vpack.c.bf16 %v974, %v973
        %v1000 = vpack.c.bf16 %v976, %v975
        %v1001 = vpack.c.bf16 %v978, %v977
        %v1002 = vpack.c.bf16 %v980, %v979
        %v1003 = vpack.c.bf16 %v982, %v981
        %v1004 = vpack.c.bf16 %v984, %v983
        %v1005 = vpack.c.bf16 %v986, %v985
        %v1006 = vpack.c.bf16 %v988, %v987
        %v1007 = vpack.c.bf16 %v990, %v989
        %v1008 = vpack.c.bf16 %v992, %v991
        %v1009 = vpack.c.bf16 %v994, %v993
        %1025 = vrot.lane.b32.xlu0 %v995, 12
        %v1026 = vpop.permute.xlu0 %1025
        %1027 = vrot.lane.b32.xlu0 %v996, 12
        %v1028 = vpop.permute.xlu0 %1027
        %1029 = vrot.lane.b32.xlu0 %v997, 12
        %v1030 = vpop.permute.xlu0 %1029
        %1031 = vrot.lane.b32.xlu0 %v998, 12
        %v1032 = vpop.permute.xlu0 %1031
        %1033 = vrot.lane.b32.xlu0 %v999, 12
        %v1034 = vpop.permute.xlu0 %1033
        %1035 = vrot.lane.b32.xlu0 %v1000, 12
        %v1036 = vpop.permute.xlu0 %1035
        %1037 = vrot.lane.b32.xlu0 %v1001, 12
        %v1038 = vpop.permute.xlu0 %1037
        %1039 = vrot.lane.b32.xlu0 %v1002, 12
        %v1040 = vpop.permute.xlu0 %1039
        %1041 = vrot.lane.b32.xlu0 %v1003, 12
        %v1042 = vpop.permute.xlu0 %1041
        %1043 = vrot.lane.b32.xlu0 %v1004, 12
        %v1044 = vpop.permute.xlu0 %1043
        %1045 = vrot.lane.b32.xlu0 %v1005, 12
        %v1046 = vpop.permute.xlu0 %1045
        %1047 = vrot.lane.b32.xlu0 %v1006, 12
        %v1048 = vpop.permute.xlu0 %1047
        %1049 = vrot.lane.b32.xlu0 %v1007, 12
        %v1050 = vpop.permute.xlu0 %1049
        %1051 = vrot.lane.b32.xlu0 %v1008, 12
        %v1052 = vpop.permute.xlu0 %1051
        %1053 = vrot.lane.b32.xlu0 %v1009, 12
        %v1054 = vpop.permute.xlu0 %1053
        %vm1070 = vcmask 130144
        %1071 = vst.msk [vmem:[#allocation3] sm:$0xff] %vm1070, %v1026
        %1072 = vst.msk [vmem:[#allocation3 + $0x8] sm:$0xff] %vm1070, %v1028
        %1073 = vst.msk [vmem:[#allocation3 + $0x10] sm:$0xff] %vm1070, %v1030
        %1074 = vst.msk [vmem:[#allocation3 + $0x18] sm:$0xff] %vm1070, %v1032
        %1075 = vst.msk [vmem:[#allocation3 + $0x20] sm:$0xff] %vm1070, %v1034
        %1076 = vst.msk [vmem:[#allocation3 + $0x28] sm:$0xff] %vm1070, %v1036
        %1077 = vst.msk [vmem:[#allocation3 + $0x30] sm:$0xff] %vm1070, %v1038
        %1078 = vst.msk [vmem:[#allocation3 + $0x38] sm:$0xff] %vm1070, %v1040
        %1079 = vst.msk [vmem:[#allocation3 + $0x40] sm:$0xff] %vm1070, %v1042
        %1080 = vst.msk [vmem:[#allocation3 + $0x48] sm:$0xff] %vm1070, %v1044
        %1081 = vst.msk [vmem:[#allocation3 + $0x50] sm:$0xff] %vm1070, %v1046
        %1082 = vst.msk [vmem:[#allocation3 + $0x58] sm:$0xff] %vm1070, %v1048
        %1083 = vst.msk [vmem:[#allocation3 + $0x60] sm:$0xff] %vm1070, %v1050
        %1084 = vst.msk [vmem:[#allocation3 + $0x68] sm:$0xff] %vm1070, %v1052
        %1085 = vst.msk [vmem:[#allocation3 + $0x70] sm:$0xff] %vm1070, %v1054
        %v1086 = vld [vmem:[%s486] sm:$0xff]
        %v1087 = vld [vmem:[%s486 + $0x8] sm:$0xff]
        %v1088 = vpack.c.bf16 %v1087, %v1086
        %1090 = vrot.lane.b32.xlu0 %v1088, 12
        %v1091 = vpop.permute.xlu0 %1090
        %1093 = vst.msk [vmem:[#allocation3 + $0x78] sm:$0xff] %vm1070, %v1091
        %v1094 = vld [vmem:[%s964 + $0x1] sm:$0xff]
        %v1095 = vld [vmem:[%s964 + $0x9] sm:$0xff]
        %v1096 = vld [vmem:[%s964 + $0x19] sm:$0xff]
        %v1097 = vld [vmem:[%s964 + $0x21] sm:$0xff]
        %v1098 = vld [vmem:[%s964 + $0x31] sm:$0xff]
        %v1099 = vld [vmem:[%s964 + $0x39] sm:$0xff]
        %v1100 = vld [vmem:[%s964 + $0x49] sm:$0xff]
        %v1101 = vld [vmem:[%s964 + $0x51] sm:$0xff]
        %v1102 = vld [vmem:[%s964 + $0x61] sm:$0xff]
        %v1103 = vld [vmem:[%s964 + $0x69] sm:$0xff]
        %v1104 = vld [vmem:[%s964 + $0x79] sm:$0xff]
        %v1105 = vld [vmem:[%s964 + $0x81] sm:$0xff]
        %v1106 = vld [vmem:[%s964 + $0x91] sm:$0xff]
        %v1107 = vld [vmem:[%s964 + $0x99] sm:$0xff]
        %v1108 = vld [vmem:[%s964 + $0xa9] sm:$0xff]
        %v1109 = vld [vmem:[%s964 + $0xb1] sm:$0xff]
        %v1110 = vld [vmem:[%s964 + $0xc1] sm:$0xff]
        %v1111 = vld [vmem:[%s964 + $0xc9] sm:$0xff]
        %v1112 = vld [vmem:[%s964 + $0xd9] sm:$0xff]
        %v1113 = vld [vmem:[%s964 + $0xe1] sm:$0xff]
        %v1114 = vld [vmem:[%s964 + $0xf1] sm:$0xff]
        %v1115 = vld [vmem:[%s964 + $0xf9] sm:$0xff]
        %v1116 = vld [vmem:[%s964 + $0x109] sm:$0xff]
        %v1117 = vld [vmem:[%s964 + $0x111] sm:$0xff]
        %v1118 = vld [vmem:[%s964 + $0x121] sm:$0xff]
        %v1119 = vld [vmem:[%s964 + $0x129] sm:$0xff]
        %v1120 = vld [vmem:[%s964 + $0x139] sm:$0xff]
        %v1121 = vld [vmem:[%s964 + $0x141] sm:$0xff]
        %v1122 = vld [vmem:[%s964 + $0x151] sm:$0xff]
        %v1123 = vld [vmem:[%s964 + $0x159] sm:$0xff]
        %v1124 = vpack.c.bf16 %v1095, %v1094
        %v1125 = vpack.c.bf16 %v1097, %v1096
        %v1126 = vpack.c.bf16 %v1099, %v1098
        %v1127 = vpack.c.bf16 %v1101, %v1100
        %v1128 = vpack.c.bf16 %v1103, %v1102
        %v1129 = vpack.c.bf16 %v1105, %v1104
        %v1130 = vpack.c.bf16 %v1107, %v1106
        %v1131 = vpack.c.bf16 %v1109, %v1108
        %v1132 = vpack.c.bf16 %v1111, %v1110
        %v1133 = vpack.c.bf16 %v1113, %v1112
        %v1134 = vpack.c.bf16 %v1115, %v1114
        %v1135 = vpack.c.bf16 %v1117, %v1116
        %v1136 = vpack.c.bf16 %v1119, %v1118
        %v1137 = vpack.c.bf16 %v1121, %v1120
        %v1138 = vpack.c.bf16 %v1123, %v1122
        %1154 = vrot.lane.b32.xlu0 %v1124, 16
        %v1155 = vpop.permute.xlu0 %1154
        %1156 = vrot.lane.b32.xlu0 %v1125, 16
        %v1157 = vpop.permute.xlu0 %1156
        %1158 = vrot.lane.b32.xlu0 %v1126, 16
        %v1159 = vpop.permute.xlu0 %1158
        %1160 = vrot.lane.b32.xlu0 %v1127, 16
        %v1161 = vpop.permute.xlu0 %1160
        %1162 = vrot.lane.b32.xlu0 %v1128, 16
        %v1163 = vpop.permute.xlu0 %1162
        %1164 = vrot.lane.b32.xlu0 %v1129, 16
        %v1165 = vpop.permute.xlu0 %1164
        %1166 = vrot.lane.b32.xlu0 %v1130, 16
        %v1167 = vpop.permute.xlu0 %1166
        %1168 = vrot.lane.b32.xlu0 %v1131, 16
        %v1169 = vpop.permute.xlu0 %1168
        %1170 = vrot.lane.b32.xlu0 %v1132, 16
        %v1171 = vpop.permute.xlu0 %1170
        %1172 = vrot.lane.b32.xlu0 %v1133, 16
        %v1173 = vpop.permute.xlu0 %1172
        %1174 = vrot.lane.b32.xlu0 %v1134, 16
        %v1175 = vpop.permute.xlu0 %1174
        %1176 = vrot.lane.b32.xlu0 %v1135, 16
        %v1177 = vpop.permute.xlu0 %1176
        %1178 = vrot.lane.b32.xlu0 %v1136, 16
        %v1179 = vpop.permute.xlu0 %1178
        %1180 = vrot.lane.b32.xlu0 %v1137, 16
        %v1181 = vpop.permute.xlu0 %1180
        %1182 = vrot.lane.b32.xlu0 %v1138, 16
        %v1183 = vpop.permute.xlu0 %1182
        %vm1199 = vcmask 162944
        %1200 = vst.msk [vmem:[#allocation3] sm:$0xff] %vm1199, %v1155
        %1201 = vst.msk [vmem:[#allocation3 + $0x8] sm:$0xff] %vm1199, %v1157
        %1202 = vst.msk [vmem:[#allocation3 + $0x10] sm:$0xff] %vm1199, %v1159
        %1203 = vst.msk [vmem:[#allocation3 + $0x18] sm:$0xff] %vm1199, %v1161
        %1204 = vst.msk [vmem:[#allocation3 + $0x20] sm:$0xff] %vm1199, %v1163
        %1205 = vst.msk [vmem:[#allocation3 + $0x28] sm:$0xff] %vm1199, %v1165
        %1206 = vst.msk [vmem:[#allocation3 + $0x30] sm:$0xff] %vm1199, %v1167
        %1207 = vst.msk [vmem:[#allocation3 + $0x38] sm:$0xff] %vm1199, %v1169
        %1208 = vst.msk [vmem:[#allocation3 + $0x40] sm:$0xff] %vm1199, %v1171
        %1209 = vst.msk [vmem:[#allocation3 + $0x48] sm:$0xff] %vm1199, %v1173
        %1210 = vst.msk [vmem:[#allocation3 + $0x50] sm:$0xff] %vm1199, %v1175
        %1211 = vst.msk [vmem:[#allocation3 + $0x58] sm:$0xff] %vm1199, %v1177
        %1212 = vst.msk [vmem:[#allocation3 + $0x60] sm:$0xff] %vm1199, %v1179
        %1213 = vst.msk [vmem:[#allocation3 + $0x68] sm:$0xff] %vm1199, %v1181
        %1214 = vst.msk [vmem:[#allocation3 + $0x70] sm:$0xff] %vm1199, %v1183
        %v1215 = vld [vmem:[%s486 + $0x1] sm:$0xff]
        %v1216 = vld [vmem:[%s486 + $0x9] sm:$0xff]
        %v1217 = vpack.c.bf16 %v1216, %v1215
        %1219 = vrot.lane.b32.xlu0 %v1217, 16
        %v1220 = vpop.permute.xlu0 %1219
        %1222 = vst.msk [vmem:[#allocation3 + $0x78] sm:$0xff] %vm1199, %v1220
        %v1223 = vld [vmem:[%s964 + $0x2] sm:$0xff]
        %v1224 = vld [vmem:[%s964 + $0xa] sm:$0xff]
        %v1225 = vld [vmem:[%s964 + $0x1a] sm:$0xff]
        %v1226 = vld [vmem:[%s964 + $0x22] sm:$0xff]
        %v1227 = vld [vmem:[%s964 + $0x32] sm:$0xff]
        %v1228 = vld [vmem:[%s964 + $0x3a] sm:$0xff]
        %v1229 = vld [vmem:[%s964 + $0x4a] sm:$0xff]
        %v1230 = vld [vmem:[%s964 + $0x52] sm:$0xff]
        %v1231 = vld [vmem:[%s964 + $0x62] sm:$0xff]
        %v1232 = vld [vmem:[%s964 + $0x6a] sm:$0xff]
        %v1233 = vld [vmem:[%s964 + $0x7a] sm:$0xff]
        %v1234 = vld [vmem:[%s964 + $0x82] sm:$0xff]
        %v1235 = vld [vmem:[%s964 + $0x92] sm:$0xff]
        %v1236 = vld [vmem:[%s964 + $0x9a] sm:$0xff]
        %v1237 = vld [vmem:[%s964 + $0xaa] sm:$0xff]
        %v1238 = vld [vmem:[%s964 + $0xb2] sm:$0xff]
        %v1239 = vld [vmem:[%s964 + $0xc2] sm:$0xff]
        %v1240 = vld [vmem:[%s964 + $0xca] sm:$0xff]
        %v1241 = vld [vmem:[%s964 + $0xda] sm:$0xff]
        %v1242 = vld [vmem:[%s964 + $0xe2] sm:$0xff]
        %v1243 = vld [vmem:[%s964 + $0xf2] sm:$0xff]
        %v1244 = vld [vmem:[%s964 + $0xfa] sm:$0xff]
        %v1245 = vld [vmem:[%s964 + $0x10a] sm:$0xff]
        %v1246 = vld [vmem:[%s964 + $0x112] sm:$0xff]
        %v1247 = vld [vmem:[%s964 + $0x122] sm:$0xff]
        %v1248 = vld [vmem:[%s964 + $0x12a] sm:$0xff]
        %v1249 = vld [vmem:[%s964 + $0x13a] sm:$0xff]
        %v1250 = vld [vmem:[%s964 + $0x142] sm:$0xff]
        %v1251 = vld [vmem:[%s964 + $0x152] sm:$0xff]
        %v1252 = vld [vmem:[%s964 + $0x15a] sm:$0xff]
        %v1253 = vpack.c.bf16 %v1224, %v1223
        %v1254 = vpack.c.bf16 %v1226, %v1225
        %v1255 = vpack.c.bf16 %v1228, %v1227
        %v1256 = vpack.c.bf16 %v1230, %v1229
        %v1257 = vpack.c.bf16 %v1232, %v1231
        %v1258 = vpack.c.bf16 %v1234, %v1233
        %v1259 = vpack.c.bf16 %v1236, %v1235
        %v1260 = vpack.c.bf16 %v1238, %v1237
        %v1261 = vpack.c.bf16 %v1240, %v1239
        %v1262 = vpack.c.bf16 %v1242, %v1241
        %v1263 = vpack.c.bf16 %v1244, %v1243
        %v1264 = vpack.c.bf16 %v1246, %v1245
        %v1265 = vpack.c.bf16 %v1248, %v1247
        %v1266 = vpack.c.bf16 %v1250, %v1249
        %v1267 = vpack.c.bf16 %v1252, %v1251
        %1283 = vrot.lane.b32.xlu0 %v1253, 20
        %v1284 = vpop.permute.xlu0 %1283
        %1285 = vrot.lane.b32.xlu0 %v1254, 20
        %v1286 = vpop.permute.xlu0 %1285
        %1287 = vrot.lane.b32.xlu0 %v1255, 20
        %v1288 = vpop.permute.xlu0 %1287
        %1289 = vrot.lane.b32.xlu0 %v1256, 20
        %v1290 = vpop.permute.xlu0 %1289
        %1291 = vrot.lane.b32.xlu0 %v1257, 20
        %v1292 = vpop.permute.xlu0 %1291
        %1293 = vrot.lane.b32.xlu0 %v1258, 20
        %v1294 = vpop.permute.xlu0 %1293
        %1295 = vrot.lane.b32.xlu0 %v1259, 20
        %v1296 = vpop.permute.xlu0 %1295
        %1297 = vrot.lane.b32.xlu0 %v1260, 20
        %v1298 = vpop.permute.xlu0 %1297
        %1299 = vrot.lane.b32.xlu0 %v1261, 20
        %v1300 = vpop.permute.xlu0 %1299
        %1301 = vrot.lane.b32.xlu0 %v1262, 20
        %v1302 = vpop.permute.xlu0 %1301
        %1303 = vrot.lane.b32.xlu0 %v1263, 20
        %v1304 = vpop.permute.xlu0 %1303
        %1305 = vrot.lane.b32.xlu0 %v1264, 20
        %v1306 = vpop.permute.xlu0 %1305
        %1307 = vrot.lane.b32.xlu0 %v1265, 20
        %v1308 = vpop.permute.xlu0 %1307
        %1309 = vrot.lane.b32.xlu0 %v1266, 20
        %v1310 = vpop.permute.xlu0 %1309
        %1311 = vrot.lane.b32.xlu0 %v1267, 20
        %v1312 = vpop.permute.xlu0 %1311
        %vm1328 = vcmask 195744
        %1329 = vst.msk [vmem:[#allocation3] sm:$0xff] %vm1328, %v1284
        %1330 = vst.msk [vmem:[#allocation3 + $0x8] sm:$0xff] %vm1328, %v1286
        %1331 = vst.msk [vmem:[#allocation3 + $0x10] sm:$0xff] %vm1328, %v1288
        %1332 = vst.msk [vmem:[#allocation3 + $0x18] sm:$0xff] %vm1328, %v1290
        %1333 = vst.msk [vmem:[#allocation3 + $0x20] sm:$0xff] %vm1328, %v1292
        %1334 = vst.msk [vmem:[#allocation3 + $0x28] sm:$0xff] %vm1328, %v1294
        %1335 = vst.msk [vmem:[#allocation3 + $0x30] sm:$0xff] %vm1328, %v1296
        %1336 = vst.msk [vmem:[#allocation3 + $0x38] sm:$0xff] %vm1328, %v1298
        %1337 = vst.msk [vmem:[#allocation3 + $0x40] sm:$0xff] %vm1328, %v1300
        %1338 = vst.msk [vmem:[#allocation3 + $0x48] sm:$0xff] %vm1328, %v1302
        %1339 = vst.msk [vmem:[#allocation3 + $0x50] sm:$0xff] %vm1328, %v1304
        %1340 = vst.msk [vmem:[#allocation3 + $0x58] sm:$0xff] %vm1328, %v1306
        %1341 = vst.msk [vmem:[#allocation3 + $0x60] sm:$0xff] %vm1328, %v1308
        %1342 = vst.msk [vmem:[#allocation3 + $0x68] sm:$0xff] %vm1328, %v1310
        %1343 = vst.msk [vmem:[#allocation3 + $0x70] sm:$0xff] %vm1328, %v1312
        %v1344 = vld [vmem:[%s486 + $0x2] sm:$0xff]
        %v1345 = vld [vmem:[%s486 + $0xa] sm:$0xff]
        %v1346 = vpack.c.bf16 %v1345, %v1344
        %1348 = vrot.lane.b32.xlu0 %v1346, 20
        %v1349 = vpop.permute.xlu0 %1348
        %1351 = vst.msk [vmem:[#allocation3 + $0x78] sm:$0xff] %vm1328, %v1349
        %s1352 = scalar_lea.vmem %s469, 48
        %v1353 = vld [vmem:[%s1352] sm:$0xff]
        %v1354 = vld [vmem:[%s1352 + $0x8] sm:$0xff]
        %v1355 = vld [vmem:[%s1352 + $0x18] sm:$0xff]
        %v1356 = vld [vmem:[%s1352 + $0x20] sm:$0xff]
        %v1357 = vld [vmem:[%s1352 + $0x30] sm:$0xff]
        %v1358 = vld [vmem:[%s1352 + $0x38] sm:$0xff]
        %v1359 = vld [vmem:[%s1352 + $0x48] sm:$0xff]
        %v1360 = vld [vmem:[%s1352 + $0x50] sm:$0xff]
        %v1361 = vld [vmem:[%s1352 + $0x60] sm:$0xff]
        %v1362 = vld [vmem:[%s1352 + $0x68] sm:$0xff]
        %v1363 = vld [vmem:[%s1352 + $0x78] sm:$0xff]
        %v1364 = vld [vmem:[%s1352 + $0x80] sm:$0xff]
        %v1365 = vld [vmem:[%s1352 + $0x90] sm:$0xff]
        %v1366 = vld [vmem:[%s1352 + $0x98] sm:$0xff]
        %v1367 = vld [vmem:[%s1352 + $0xa8] sm:$0xff]
        %v1368 = vld [vmem:[%s1352 + $0xb0] sm:$0xff]
        %v1369 = vld [vmem:[%s1352 + $0xc0] sm:$0xff]
        %v1370 = vld [vmem:[%s1352 + $0xc8] sm:$0xff]
        %v1371 = vld [vmem:[%s1352 + $0xd8] sm:$0xff]
        %v1372 = vld [vmem:[%s1352 + $0xe0] sm:$0xff]
        %v1373 = vld [vmem:[%s1352 + $0xf0] sm:$0xff]
        %v1374 = vld [vmem:[%s1352 + $0xf8] sm:$0xff]
        %v1375 = vld [vmem:[%s1352 + $0x108] sm:$0xff]
        %v1376 = vld [vmem:[%s1352 + $0x110] sm:$0xff]
        %v1377 = vld [vmem:[%s1352 + $0x120] sm:$0xff]
        %v1378 = vld [vmem:[%s1352 + $0x128] sm:$0xff]
        %v1379 = vld [vmem:[%s1352 + $0x138] sm:$0xff]
        %v1380 = vld [vmem:[%s1352 + $0x140] sm:$0xff]
        %v1381 = vpack.c.bf16 %v1354, %v1353
        %v1382 = vpack.c.bf16 %v1356, %v1355
        %v1383 = vpack.c.bf16 %v1358, %v1357
        %v1384 = vpack.c.bf16 %v1360, %v1359
        %v1385 = vpack.c.bf16 %v1362, %v1361
        %v1386 = vpack.c.bf16 %v1364, %v1363
        %v1387 = vpack.c.bf16 %v1366, %v1365
        %v1388 = vpack.c.bf16 %v1368, %v1367
        %v1389 = vpack.c.bf16 %v1370, %v1369
        %v1390 = vpack.c.bf16 %v1372, %v1371
        %v1391 = vpack.c.bf16 %v1374, %v1373
        %v1392 = vpack.c.bf16 %v1376, %v1375
        %v1393 = vpack.c.bf16 %v1378, %v1377
        %v1394 = vpack.c.bf16 %v1380, %v1379
        %1409 = vrot.lane.b32.xlu0 %v1381, 24
        %v1410 = vpop.permute.xlu0 %1409
        %1411 = vrot.lane.b32.xlu0 %v1382, 24
        %v1412 = vpop.permute.xlu0 %1411
        %1413 = vrot.lane.b32.xlu0 %v1383, 24
        %v1414 = vpop.permute.xlu0 %1413
        %1415 = vrot.lane.b32.xlu0 %v1384, 24
        %v1416 = vpop.permute.xlu0 %1415
        %1417 = vrot.lane.b32.xlu0 %v1385, 24
        %v1418 = vpop.permute.xlu0 %1417
        %1419 = vrot.lane.b32.xlu0 %v1386, 24
        %v1420 = vpop.permute.xlu0 %1419
        %1421 = vrot.lane.b32.xlu0 %v1387, 24
        %v1422 = vpop.permute.xlu0 %1421
        %1423 = vrot.lane.b32.xlu0 %v1388, 24
        %v1424 = vpop.permute.xlu0 %1423
        %1425 = vrot.lane.b32.xlu0 %v1389, 24
        %v1426 = vpop.permute.xlu0 %1425
        %1427 = vrot.lane.b32.xlu0 %v1390, 24
        %v1428 = vpop.permute.xlu0 %1427
        %1429 = vrot.lane.b32.xlu0 %v1391, 24
        %v1430 = vpop.permute.xlu0 %1429
        %1431 = vrot.lane.b32.xlu0 %v1392, 24
        %v1432 = vpop.permute.xlu0 %1431
        %1433 = vrot.lane.b32.xlu0 %v1393, 24
        %v1434 = vpop.permute.xlu0 %1433
        %1435 = vrot.lane.b32.xlu0 %v1394, 24
        %v1436 = vpop.permute.xlu0 %1435
        %vm1451 = vcmask 228544
        %1452 = vst.msk [vmem:[#allocation3] sm:$0xff] %vm1451, %v1410
        %1453 = vst.msk [vmem:[#allocation3 + $0x8] sm:$0xff] %vm1451, %v1412
        %1454 = vst.msk [vmem:[#allocation3 + $0x10] sm:$0xff] %vm1451, %v1414
        %1455 = vst.msk [vmem:[#allocation3 + $0x18] sm:$0xff] %vm1451, %v1416
        %1456 = vst.msk [vmem:[#allocation3 + $0x20] sm:$0xff] %vm1451, %v1418
        %1457 = vst.msk [vmem:[#allocation3 + $0x28] sm:$0xff] %vm1451, %v1420
        %1458 = vst.msk [vmem:[#allocation3 + $0x30] sm:$0xff] %vm1451, %v1422
        %1459 = vst.msk [vmem:[#allocation3 + $0x38] sm:$0xff] %vm1451, %v1424
        %1460 = vst.msk [vmem:[#allocation3 + $0x40] sm:$0xff] %vm1451, %v1426
        %1461 = vst.msk [vmem:[#allocation3 + $0x48] sm:$0xff] %vm1451, %v1428
        %1462 = vst.msk [vmem:[#allocation3 + $0x50] sm:$0xff] %vm1451, %v1430
        %1463 = vst.msk [vmem:[#allocation3 + $0x58] sm:$0xff] %vm1451, %v1432
        %1464 = vst.msk [vmem:[#allocation3 + $0x60] sm:$0xff] %vm1451, %v1434
        %1465 = vst.msk [vmem:[#allocation3 + $0x68] sm:$0xff] %vm1451, %v1436
        %v1466 = vld [vmem:[%s486] sm:$0xff]
        %v1467 = vld [vmem:[%s486 + $0x8] sm:$0xff]
        %v1468 = vpack.c.bf16 %v1467, %v1466
        %1470 = vrot.lane.b32.xlu0 %v1468, 24
        %v1471 = vpop.permute.xlu0 %1470
        %1473 = vst.msk [vmem:[#allocation3 + $0x70] sm:$0xff] %vm1451, %v1471
        %v1474 = vld [vmem:[%s500] sm:$0xff]
        %v1475 = vld [vmem:[%s500 + $0x8] sm:$0xff]
        %v1476 = vpack.c.bf16 %v1475, %v1474
        %1478 = vrot.lane.b32.xlu0 %v1476, 24
        %v1479 = vpop.permute.xlu0 %1478
        %1481 = vst.msk [vmem:[#allocation3 + $0x78] sm:$0xff] %vm1451, %v1479
        %v1482 = vld [vmem:[%s1352 + $0x1] sm:$0xff]
        %v1483 = vld [vmem:[%s1352 + $0x9] sm:$0xff]
        %v1484 = vld [vmem:[%s1352 + $0x19] sm:$0xff]
        %v1485 = vld [vmem:[%s1352 + $0x21] sm:$0xff]
        %v1486 = vld [vmem:[%s1352 + $0x31] sm:$0xff]
        %v1487 = vld [vmem:[%s1352 + $0x39] sm:$0xff]
        %v1488 = vld [vmem:[%s1352 + $0x49] sm:$0xff]
        %v1489 = vld [vmem:[%s1352 + $0x51] sm:$0xff]
        %v1490 = vld [vmem:[%s1352 + $0x61] sm:$0xff]
        %v1491 = vld [vmem:[%s1352 + $0x69] sm:$0xff]
        %v1492 = vld [vmem:[%s1352 + $0x79] sm:$0xff]
        %v1493 = vld [vmem:[%s1352 + $0x81] sm:$0xff]
        %v1494 = vld [vmem:[%s1352 + $0x91] sm:$0xff]
        %v1495 = vld [vmem:[%s1352 + $0x99] sm:$0xff]
        %v1496 = vld [vmem:[%s1352 + $0xa9] sm:$0xff]
        %v1497 = vld [vmem:[%s1352 + $0xb1] sm:$0xff]
        %v1498 = vld [vmem:[%s1352 + $0xc1] sm:$0xff]
        %v1499 = vld [vmem:[%s1352 + $0xc9] sm:$0xff]
        %v1500 = vld [vmem:[%s1352 + $0xd9] sm:$0xff]
        %v1501 = vld [vmem:[%s1352 + $0xe1] sm:$0xff]
        %v1502 = vld [vmem:[%s1352 + $0xf1] sm:$0xff]
        %v1503 = vld [vmem:[%s1352 + $0xf9] sm:$0xff]
        %v1504 = vld [vmem:[%s1352 + $0x109] sm:$0xff]
        %v1505 = vld [vmem:[%s1352 + $0x111] sm:$0xff]
        %v1506 = vld [vmem:[%s1352 + $0x121] sm:$0xff]
        %v1507 = vld [vmem:[%s1352 + $0x129] sm:$0xff]
        %v1508 = vld [vmem:[%s1352 + $0x139] sm:$0xff]
        %v1509 = vld [vmem:[%s1352 + $0x141] sm:$0xff]
        %v1510 = vpack.c.bf16 %v1483, %v1482
        %v1511 = vpack.c.bf16 %v1485, %v1484
        %v1512 = vpack.c.bf16 %v1487, %v1486
        %v1513 = vpack.c.bf16 %v1489, %v1488
        %v1514 = vpack.c.bf16 %v1491, %v1490
        %v1515 = vpack.c.bf16 %v1493, %v1492
        %v1516 = vpack.c.bf16 %v1495, %v1494
        %v1517 = vpack.c.bf16 %v1497, %v1496
        %v1518 = vpack.c.bf16 %v1499, %v1498
        %v1519 = vpack.c.bf16 %v1501, %v1500
        %v1520 = vpack.c.bf16 %v1503, %v1502
        %v1521 = vpack.c.bf16 %v1505, %v1504
        %v1522 = vpack.c.bf16 %v1507, %v1506
        %v1523 = vpack.c.bf16 %v1509, %v1508
        %1538 = vrot.lane.b32.xlu0 %v1510, 28
        %v1539 = vpop.permute.xlu0 %1538
        %1540 = vrot.lane.b32.xlu0 %v1511, 28
        %v1541 = vpop.permute.xlu0 %1540
        %1542 = vrot.lane.b32.xlu0 %v1512, 28
        %v1543 = vpop.permute.xlu0 %1542
        %1544 = vrot.lane.b32.xlu0 %v1513, 28
        %v1545 = vpop.permute.xlu0 %1544
        %1546 = vrot.lane.b32.xlu0 %v1514, 28
        %v1547 = vpop.permute.xlu0 %1546
        %1548 = vrot.lane.b32.xlu0 %v1515, 28
        %v1549 = vpop.permute.xlu0 %1548
        %1550 = vrot.lane.b32.xlu0 %v1516, 28
        %v1551 = vpop.permute.xlu0 %1550
        %1552 = vrot.lane.b32.xlu0 %v1517, 28
        %v1553 = vpop.permute.xlu0 %1552
        %1554 = vrot.lane.b32.xlu0 %v1518, 28
        %v1555 = vpop.permute.xlu0 %1554
        %1556 = vrot.lane.b32.xlu0 %v1519, 28
        %v1557 = vpop.permute.xlu0 %1556
        %1558 = vrot.lane.b32.xlu0 %v1520, 28
        %v1559 = vpop.permute.xlu0 %1558
        %1560 = vrot.lane.b32.xlu0 %v1521, 28
        %v1561 = vpop.permute.xlu0 %1560
        %1562 = vrot.lane.b32.xlu0 %v1522, 28
        %v1563 = vpop.permute.xlu0 %1562
        %1564 = vrot.lane.b32.xlu0 %v1523, 28
        %v1565 = vpop.permute.xlu0 %1564
        %vm1580 = vcmask 261344
        %1581 = vst.msk [vmem:[#allocation3] sm:$0xff] %vm1580, %v1539
        %1582 = vst.msk [vmem:[#allocation3 + $0x8] sm:$0xff] %vm1580, %v1541
        %1583 = vst.msk [vmem:[#allocation3 + $0x10] sm:$0xff] %vm1580, %v1543
        %1584 = vst.msk [vmem:[#allocation3 + $0x18] sm:$0xff] %vm1580, %v1545
        %1585 = vst.msk [vmem:[#allocation3 + $0x20] sm:$0xff] %vm1580, %v1547
        %1586 = vst.msk [vmem:[#allocation3 + $0x28] sm:$0xff] %vm1580, %v1549
        %1587 = vst.msk [vmem:[#allocation3 + $0x30] sm:$0xff] %vm1580, %v1551
        %1588 = vst.msk [vmem:[#allocation3 + $0x38] sm:$0xff] %vm1580, %v1553
        %1589 = vst.msk [vmem:[#allocation3 + $0x40] sm:$0xff] %vm1580, %v1555
        %1590 = vst.msk [vmem:[#allocation3 + $0x48] sm:$0xff] %vm1580, %v1557
        %1591 = vst.msk [vmem:[#allocation3 + $0x50] sm:$0xff] %vm1580, %v1559
        %1592 = vst.msk [vmem:[#allocation3 + $0x58] sm:$0xff] %vm1580, %v1561
        %1593 = vst.msk [vmem:[#allocation3 + $0x60] sm:$0xff] %vm1580, %v1563
        %1594 = vst.msk [vmem:[#allocation3 + $0x68] sm:$0xff] %vm1580, %v1565
        %v1595 = vld [vmem:[%s486 + $0x1] sm:$0xff]
        %v1596 = vld [vmem:[%s486 + $0x9] sm:$0xff]
        %v1597 = vpack.c.bf16 %v1596, %v1595
        %1599 = vrot.lane.b32.xlu0 %v1597, 28
        %v1600 = vpop.permute.xlu0 %1599
        %1602 = vst.msk [vmem:[#allocation3 + $0x70] sm:$0xff] %vm1580, %v1600
        %v1603 = vld [vmem:[%s500 + $0x1] sm:$0xff]
        %v1604 = vld [vmem:[%s500 + $0x9] sm:$0xff]
        %v1605 = vpack.c.bf16 %v1604, %v1603
        %1607 = vrot.lane.b32.xlu0 %v1605, 28
        %v1608 = vpop.permute.xlu0 %1607
        %1610 = vst.msk [vmem:[#allocation3 + $0x78] sm:$0xff] %vm1580, %v1608
        %v1611 = vld [vmem:[%s1352 + $0x2] sm:$0xff]
        %v1612 = vld [vmem:[%s1352 + $0xa] sm:$0xff]
        %v1613 = vld [vmem:[%s1352 + $0x1a] sm:$0xff]
        %v1614 = vld [vmem:[%s1352 + $0x22] sm:$0xff]
        %v1615 = vld [vmem:[%s1352 + $0x32] sm:$0xff]
        %v1616 = vld [vmem:[%s1352 + $0x3a] sm:$0xff]
        %v1617 = vld [vmem:[%s1352 + $0x4a] sm:$0xff]
        %v1618 = vld [vmem:[%s1352 + $0x52] sm:$0xff]
        %v1619 = vld [vmem:[%s1352 + $0x62] sm:$0xff]
        %v1620 = vld [vmem:[%s1352 + $0x6a] sm:$0xff]
        %v1621 = vld [vmem:[%s1352 + $0x7a] sm:$0xff]
        %v1622 = vld [vmem:[%s1352 + $0x82] sm:$0xff]
        %v1623 = vld [vmem:[%s1352 + $0x92] sm:$0xff]
        %v1624 = vld [vmem:[%s1352 + $0x9a] sm:$0xff]
        %v1625 = vld [vmem:[%s1352 + $0xaa] sm:$0xff]
        %v1626 = vld [vmem:[%s1352 + $0xb2] sm:$0xff]
        %v1627 = vld [vmem:[%s1352 + $0xc2] sm:$0xff]
        %v1628 = vld [vmem:[%s1352 + $0xca] sm:$0xff]
        %v1629 = vld [vmem:[%s1352 + $0xda] sm:$0xff]
        %v1630 = vld [vmem:[%s1352 + $0xe2] sm:$0xff]
        %v1631 = vld [vmem:[%s1352 + $0xf2] sm:$0xff]
        %v1632 = vld [vmem:[%s1352 + $0xfa] sm:$0xff]
        %v1633 = vld [vmem:[%s1352 + $0x10a] sm:$0xff]
        %v1634 = vld [vmem:[%s1352 + $0x112] sm:$0xff]
        %v1635 = vld [vmem:[%s1352 + $0x122] sm:$0xff]
        %v1636 = vld [vmem:[%s1352 + $0x12a] sm:$0xff]
        %v1637 = vld [vmem:[%s1352 + $0x13a] sm:$0xff]
        %v1638 = vld [vmem:[%s1352 + $0x142] sm:$0xff]
        %v1639 = vpack.c.bf16 %v1612, %v1611
        %v1640 = vpack.c.bf16 %v1614, %v1613
        %v1641 = vpack.c.bf16 %v1616, %v1615
        %v1642 = vpack.c.bf16 %v1618, %v1617
        %v1643 = vpack.c.bf16 %v1620, %v1619
        %v1644 = vpack.c.bf16 %v1622, %v1621
        %v1645 = vpack.c.bf16 %v1624, %v1623
        %v1646 = vpack.c.bf16 %v1626, %v1625
        %v1647 = vpack.c.bf16 %v1628, %v1627
        %v1648 = vpack.c.bf16 %v1630, %v1629
        %v1649 = vpack.c.bf16 %v1632, %v1631
        %v1650 = vpack.c.bf16 %v1634, %v1633
        %v1651 = vpack.c.bf16 %v1636, %v1635
        %v1652 = vpack.c.bf16 %v1638, %v1637
        %1667 = vrot.lane.b32.xlu0 %v1639, 32
        %v1668 = vpop.permute.xlu0 %1667
        %1669 = vrot.lane.b32.xlu0 %v1640, 32
        %v1670 = vpop.permute.xlu0 %1669
        %1671 = vrot.lane.b32.xlu0 %v1641, 32
        %v1672 = vpop.permute.xlu0 %1671
        %1673 = vrot.lane.b32.xlu0 %v1642, 32
        %v1674 = vpop.permute.xlu0 %1673
        %1675 = vrot.lane.b32.xlu0 %v1643, 32
        %v1676 = vpop.permute.xlu0 %1675
        %1677 = vrot.lane.b32.xlu0 %v1644, 32
        %v1678 = vpop.permute.xlu0 %1677
        %1679 = vrot.lane.b32.xlu0 %v1645, 32
        %v1680 = vpop.permute.xlu0 %1679
        %1681 = vrot.lane.b32.xlu0 %v1646, 32
        %v1682 = vpop.permute.xlu0 %1681
        %1683 = vrot.lane.b32.xlu0 %v1647, 32
        %v1684 = vpop.permute.xlu0 %1683
        %1685 = vrot.lane.b32.xlu0 %v1648, 32
        %v1686 = vpop.permute.xlu0 %1685
        %1687 = vrot.lane.b32.xlu0 %v1649, 32
        %v1688 = vpop.permute.xlu0 %1687
        %1689 = vrot.lane.b32.xlu0 %v1650, 32
        %v1690 = vpop.permute.xlu0 %1689
        %1691 = vrot.lane.b32.xlu0 %v1651, 32
        %v1692 = vpop.permute.xlu0 %1691
        %1693 = vrot.lane.b32.xlu0 %v1652, 32
        %v1694 = vpop.permute.xlu0 %1693
        %vm1709 = vcmask 294144
        %1710 = vst.msk [vmem:[#allocation3] sm:$0xff] %vm1709, %v1668
        %1711 = vst.msk [vmem:[#allocation3 + $0x8] sm:$0xff] %vm1709, %v1670
        %1712 = vst.msk [vmem:[#allocation3 + $0x10] sm:$0xff] %vm1709, %v1672
        %1713 = vst.msk [vmem:[#allocation3 + $0x18] sm:$0xff] %vm1709, %v1674
        %1714 = vst.msk [vmem:[#allocation3 + $0x20] sm:$0xff] %vm1709, %v1676
        %1715 = vst.msk [vmem:[#allocation3 + $0x28] sm:$0xff] %vm1709, %v1678
        %1716 = vst.msk [vmem:[#allocation3 + $0x30] sm:$0xff] %vm1709, %v1680
        %1717 = vst.msk [vmem:[#allocation3 + $0x38] sm:$0xff] %vm1709, %v1682
        %1718 = vst.msk [vmem:[#allocation3 + $0x40] sm:$0xff] %vm1709, %v1684
        %1719 = vst.msk [vmem:[#allocation3 + $0x48] sm:$0xff] %vm1709, %v1686
        %1720 = vst.msk [vmem:[#allocation3 + $0x50] sm:$0xff] %vm1709, %v1688
        %1721 = vst.msk [vmem:[#allocation3 + $0x58] sm:$0xff] %vm1709, %v1690
        %1722 = vst.msk [vmem:[#allocation3 + $0x60] sm:$0xff] %vm1709, %v1692
        %1723 = vst.msk [vmem:[#allocation3 + $0x68] sm:$0xff] %vm1709, %v1694
        %v1724 = vld [vmem:[%s486 + $0x2] sm:$0xff]
        %v1725 = vld [vmem:[%s486 + $0xa] sm:$0xff]
        %v1726 = vpack.c.bf16 %v1725, %v1724
        %1728 = vrot.lane.b32.xlu0 %v1726, 32
        %v1729 = vpop.permute.xlu0 %1728
        %1731 = vst.msk [vmem:[#allocation3 + $0x70] sm:$0xff] %vm1709, %v1729
        %v1732 = vld [vmem:[%s500 + $0x2] sm:$0xff]
        %v1733 = vld [vmem:[%s500 + $0xa] sm:$0xff]
        %v1734 = vpack.c.bf16 %v1733, %v1732
        %1736 = vrot.lane.b32.xlu0 %v1734, 32
        %v1737 = vpop.permute.xlu0 %1736
        %1739 = vst.msk [vmem:[#allocation3 + $0x78] sm:$0xff] %vm1709, %v1737
        %v1740 = vld [vmem:[#allocation3] sm:$0xff]
        %v1741 = vld [vmem:[#allocation3 + $0x8] sm:$0xff]
        %v1742 = vld [vmem:[#allocation3 + $0x10] sm:$0xff]
        %v1743 = vld [vmem:[#allocation3 + $0x18] sm:$0xff]
        %v1744 = vld [vmem:[#allocation3 + $0x20] sm:$0xff]
        %v1745 = vld [vmem:[#allocation3 + $0x28] sm:$0xff]
        %v1746 = vld [vmem:[#allocation3 + $0x30] sm:$0xff]
        %v1747 = vld [vmem:[#allocation3 + $0x38] sm:$0xff]
        %v1748 = vld [vmem:[#allocation3 + $0x40] sm:$0xff]
        %v1749 = vld [vmem:[#allocation3 + $0x48] sm:$0xff]
        %v1750 = vld [vmem:[#allocation3 + $0x50] sm:$0xff]
        %v1751 = vld [vmem:[#allocation3 + $0x58] sm:$0xff]
        %v1752 = vld [vmem:[#allocation3 + $0x60] sm:$0xff]
        %v1753 = vld [vmem:[#allocation3 + $0x68] sm:$0xff]
        %v1754 = vld [vmem:[#allocation3 + $0x70] sm:$0xff]
        %v1755 = vld [vmem:[#allocation3 + $0x78] sm:$0xff]
        %v1756 = vld [vmem:[#allocation2] sm:$0xf]
        %v1757 = vld [vmem:[#allocation2 + $0x4] sm:$0xf]
        %v1758 = vld [vmem:[#allocation2 + $0x8] sm:$0xf]
        %v1759 = vld [vmem:[#allocation2 + $0xc] sm:$0xf]
        %v1760 = vld [vmem:[#allocation2 + $0x10] sm:$0x3]
        %v1761 = vld [vmem:[%s516] sm:$0xff]
        %v1762 = vld [vmem:[%s516 + $0x8] sm:$0xff]
        %v1763 = vlaneseq
        %v1764 = vshrl.u32 %v1763, 7
        %v1765 = vsub.s32 0, %v1764
        %v1766 = vrot.slane %v1761, %v1765
        %1768 = vbcast.lane.b32.xlu0 %v1766, 256
        %v1769 = vpop.permute.xlu0 %1768
        %s1771 = sor.u32 256, 8
        %1772 = vbcast.lane.b32.xlu0 %v1766, %s1771
        %v1773 = vpop.permute.xlu0 %1772
        %v1774 = vlaneseq
        %v1775 = vshrl.u32 %v1774, 7
        %v1776 = vsub.s32 1, %v1775
        %v1777 = vrot.slane %v1761, %v1776
        %1779 = vbcast.lane.b32.xlu0 %v1777, 256
        %v1780 = vpop.permute.xlu0 %1779
        %s1782 = sor.u32 256, 8
        %1783 = vbcast.lane.b32.xlu0 %v1777, %s1782
        %v1784 = vpop.permute.xlu0 %1783
        %v1785 = vlaneseq
        %v1786 = vshrl.u32 %v1785, 7
        %v1787 = vsub.s32 2, %v1786
        %v1788 = vrot.slane %v1761, %v1787
        %1790 = vbcast.lane.b32.xlu0 %v1788, 256
        %v1791 = vpop.permute.xlu0 %1790
        %s1793 = sor.u32 256, 8
        %1794 = vbcast.lane.b32.xlu0 %v1788, %s1793
        %v1795 = vpop.permute.xlu0 %1794
        %v1796 = vlaneseq
        %v1797 = vshrl.u32 %v1796, 7
        %v1798 = vsub.s32 3, %v1797
        %v1799 = vrot.slane %v1761, %v1798
        %1801 = vbcast.lane.b32.xlu0 %v1799, 256
        %v1802 = vpop.permute.xlu0 %1801
        %s1804 = sor.u32 256, 8
        %1805 = vbcast.lane.b32.xlu0 %v1799, %s1804
        %v1806 = vpop.permute.xlu0 %1805
        %v1807 = vlaneseq
        %v1808 = vshrl.u32 %v1807, 7
        %v1809 = vsub.s32 4, %v1808
        %v1810 = vrot.slane %v1761, %v1809
        %1812 = vbcast.lane.b32.xlu0 %v1810, 256
        %v1813 = vpop.permute.xlu0 %1812
        %s1815 = sor.u32 256, 8
        %1816 = vbcast.lane.b32.xlu0 %v1810, %s1815
        %v1817 = vpop.permute.xlu0 %1816
        %v1818 = vlaneseq
        %v1819 = vshrl.u32 %v1818, 7
        %v1820 = vsub.s32 5, %v1819
        %v1821 = vrot.slane %v1761, %v1820
        %1823 = vbcast.lane.b32.xlu0 %v1821, 256
        %v1824 = vpop.permute.xlu0 %1823
        %s1826 = sor.u32 256, 8
        %1827 = vbcast.lane.b32.xlu0 %v1821, %s1826
        %v1828 = vpop.permute.xlu0 %1827
        %v1829 = vlaneseq
        %v1830 = vshrl.u32 %v1829, 7
        %v1831 = vsub.s32 6, %v1830
        %v1832 = vrot.slane %v1761, %v1831
        %1834 = vbcast.lane.b32.xlu0 %v1832, 256
        %v1835 = vpop.permute.xlu0 %1834
        %s1837 = sor.u32 256, 8
        %1838 = vbcast.lane.b32.xlu0 %v1832, %s1837
        %v1839 = vpop.permute.xlu0 %1838
        %v1840 = vlaneseq
        %v1841 = vshrl.u32 %v1840, 7
        %v1842 = vsub.s32 7, %v1841
        %v1843 = vrot.slane %v1761, %v1842
        %1845 = vbcast.lane.b32.xlu0 %v1843, 256
        %v1846 = vpop.permute.xlu0 %1845
        %s1848 = sor.u32 256, 8
        %1849 = vbcast.lane.b32.xlu0 %v1843, %s1848
        %v1850 = vpop.permute.xlu0 %1849
        %v1851 = vlaneseq
        %v1852 = vshrl.u32 %v1851, 7
        %v1853 = vsub.s32 0, %v1852
        %v1854 = vrot.slane %v1762, %v1853
        %1856 = vbcast.lane.b32.xlu0 %v1854, 256
        %v1857 = vpop.permute.xlu0 %1856
        %s1859 = sor.u32 256, 8
        %1860 = vbcast.lane.b32.xlu0 %v1854, %s1859
        %v1861 = vpop.permute.xlu0 %1860
        %v1862 = vlaneseq
        %v1863 = vshrl.u32 %v1862, 7
        %v1864 = vsub.s32 1, %v1863
        %v1865 = vrot.slane %v1762, %v1864
        %1867 = vbcast.lane.b32.xlu0 %v1865, 256
        %v1868 = vpop.permute.xlu0 %1867
        %s1870 = sor.u32 256, 8
        %1871 = vbcast.lane.b32.xlu0 %v1865, %s1870
        %v1872 = vpop.permute.xlu0 %1871
        %v1873 = vlaneseq
        %v1874 = vshrl.u32 %v1873, 7
        %v1875 = vsub.s32 2, %v1874
        %v1876 = vrot.slane %v1762, %v1875
        %1878 = vbcast.lane.b32.xlu0 %v1876, 256
        %v1879 = vpop.permute.xlu0 %1878
        %s1881 = sor.u32 256, 8
        %1882 = vbcast.lane.b32.xlu0 %v1876, %s1881
        %v1883 = vpop.permute.xlu0 %1882
        %v1884 = vlaneseq
        %v1885 = vshrl.u32 %v1884, 7
        %v1886 = vsub.s32 3, %v1885
        %v1887 = vrot.slane %v1762, %v1886
        %1889 = vbcast.lane.b32.xlu0 %v1887, 256
        %v1890 = vpop.permute.xlu0 %1889
        %s1892 = sor.u32 256, 8
        %1893 = vbcast.lane.b32.xlu0 %v1887, %s1892
        %v1894 = vpop.permute.xlu0 %1893
        %v1895 = vlaneseq
        %v1896 = vshrl.u32 %v1895, 7
        %v1897 = vsub.s32 4, %v1896
        %v1898 = vrot.slane %v1762, %v1897
        %1900 = vbcast.lane.b32.xlu0 %v1898, 256
        %v1901 = vpop.permute.xlu0 %1900
        %s1903 = sor.u32 256, 8
        %1904 = vbcast.lane.b32.xlu0 %v1898, %s1903
        %v1905 = vpop.permute.xlu0 %1904
        %v1906 = vlaneseq
        %v1907 = vshrl.u32 %v1906, 7
        %v1908 = vsub.s32 5, %v1907
        %v1909 = vrot.slane %v1762, %v1908
        %1911 = vbcast.lane.b32.xlu0 %v1909, 256
        %v1912 = vpop.permute.xlu0 %1911
        %s1914 = sor.u32 256, 8
        %1915 = vbcast.lane.b32.xlu0 %v1909, %s1914
        %v1916 = vpop.permute.xlu0 %1915
        %v1917 = vlaneseq
        %v1918 = vshrl.u32 %v1917, 7
        %v1919 = vsub.s32 6, %v1918
        %v1920 = vrot.slane %v1762, %v1919
        %1922 = vbcast.lane.b32.xlu0 %v1920, 256
        %v1923 = vpop.permute.xlu0 %1922
        %s1925 = sor.u32 256, 8
        %1926 = vbcast.lane.b32.xlu0 %v1920, %s1925
        %v1927 = vpop.permute.xlu0 %1926
        %v1928 = vlaneseq
        %v1929 = vshrl.u32 %v1928, 7
        %v1930 = vsub.s32 7, %v1929
        %v1931 = vrot.slane %v1762, %v1930
        %1933 = vbcast.lane.b32.xlu0 %v1931, 256
        %v1934 = vpop.permute.xlu0 %1933
        %s1936 = sor.u32 256, 8
        %1937 = vbcast.lane.b32.xlu0 %v1931, %s1936
        %v1938 = vpop.permute.xlu0 %1937
        %v1939 = vld [vmem:[%s6] sm:$0x1]
        %v1941 = vlaneseq
        %v1942 = vshrl.u32 %v1941, 7
        %v1943 = vsub.s32 0, %v1942
        %v1944 = vrot.slane %v1939, %v1943
        %v1946 = vmul.f32 %v1769, %v1944
        %v1947 = vmul.f32 %v1773, %v1944
        %v1948 = vmul.f32 %v1780, %v1944
        %v1949 = vmul.f32 %v1784, %v1944
        %v1950 = vmul.f32 %v1791, %v1944
        %v1951 = vmul.f32 %v1795, %v1944
        %v1952 = vmul.f32 %v1802, %v1944
        %v1953 = vmul.f32 %v1806, %v1944
        %v1954 = vmul.f32 %v1813, %v1944
        %v1955 = vmul.f32 %v1817, %v1944
        %v1956 = vmul.f32 %v1824, %v1944
        %v1957 = vmul.f32 %v1828, %v1944
        %v1958 = vmul.f32 %v1835, %v1944
        %v1959 = vmul.f32 %v1839, %v1944
        %v1960 = vmul.f32 %v1846, %v1944
        %v1961 = vmul.f32 %v1850, %v1944
        %v1962 = vmul.f32 %v1857, %v1944
        %v1963 = vmul.f32 %v1861, %v1944
        %v1964 = vmul.f32 %v1868, %v1944
        %v1965 = vmul.f32 %v1872, %v1944
        %v1966 = vmul.f32 %v1879, %v1944
        %v1967 = vmul.f32 %v1883, %v1944
        %v1968 = vmul.f32 %v1890, %v1944
        %v1969 = vmul.f32 %v1894, %v1944
        %v1970 = vmul.f32 %v1901, %v1944
        %v1971 = vmul.f32 %v1905, %v1944
        %v1972 = vmul.f32 %v1912, %v1944
        %v1973 = vmul.f32 %v1916, %v1944
        %v1974 = vmul.f32 %v1923, %v1944
        %v1975 = vmul.f32 %v1927, %v1944
        %v1976 = vmul.f32 %v1934, %v1944
        %v1977 = vmul.f32 %v1938, %v1944
        %v1978 = vld [vmem:[%s7] sm:$0x1]
        %v1980 = vlaneseq
        %v1981 = vshrl.u32 %v1980, 7
        %v1982 = vsub.s32 0, %v1981
        %v1983 = vrot.slane %v1978, %v1982
        %v1985 = vadd.f32 %v1946, %v1983
        %v1986 = vadd.f32 %v1947, %v1983
        %v1987 = vadd.f32 %v1948, %v1983
        %v1988 = vadd.f32 %v1949, %v1983
        %v1989 = vadd.f32 %v1950, %v1983
        %v1990 = vadd.f32 %v1951, %v1983
        %v1991 = vadd.f32 %v1952, %v1983
        %v1992 = vadd.f32 %v1953, %v1983
        %v1993 = vadd.f32 %v1954, %v1983
        %v1994 = vadd.f32 %v1955, %v1983
        %v1995 = vadd.f32 %v1956, %v1983
        %v1996 = vadd.f32 %v1957, %v1983
        %v1997 = vadd.f32 %v1958, %v1983
        %v1998 = vadd.f32 %v1959, %v1983
        %v1999 = vadd.f32 %v1960, %v1983
        %v2000 = vadd.f32 %v1961, %v1983
        %v2001 = vadd.f32 %v1962, %v1983
        %v2002 = vadd.f32 %v1963, %v1983
        %v2003 = vadd.f32 %v1964, %v1983
        %v2004 = vadd.f32 %v1965, %v1983
        %v2005 = vadd.f32 %v1966, %v1983
        %v2006 = vadd.f32 %v1967, %v1983
        %v2007 = vadd.f32 %v1968, %v1983
        %v2008 = vadd.f32 %v1969, %v1983
        %v2009 = vadd.f32 %v1970, %v1983
        %v2010 = vadd.f32 %v1971, %v1983
        %v2011 = vadd.f32 %v1972, %v1983
        %v2012 = vadd.f32 %v1973, %v1983
        %v2013 = vadd.f32 %v1974, %v1983
        %v2014 = vadd.f32 %v1975, %v1983
        %v2015 = vadd.f32 %v1976, %v1983
        %v2016 = vadd.f32 %v1977, %v1983
        %v2022 = vunpack.c.l.b16 %v1756
        %v2023 = vunpack.c.l.b16 %v1757
        %v2024 = vunpack.c.l.b16 %v1758
        %v2025 = vunpack.c.l.b16 %v1759
        %v2026 = vunpack.c.l.b16 %v1760
        %v2027 = vpack.c.b16 %v2023, %v2022
        %v2028 = vpack.c.b16 %v2025, %v2024
        %v2029 = vpack.c.b16 %v2026, %v2026
        %vm2032 = vcmask 293888
        %v2034 = vsel %vm2032, %v1740, 0
        %v2037 = vsel %vm2032, %v1741, 0
        %v2040 = vsel %vm2032, %v1742, 0
        %v2043 = vsel %vm2032, %v1743, 0
        %v2046 = vsel %vm2032, %v1744, 0
        %v2049 = vsel %vm2032, %v1745, 0
        %v2052 = vsel %vm2032, %v1746, 0
        %v2055 = vsel %vm2032, %v1747, 0
        %v2058 = vsel %vm2032, %v1748, 0
        %v2061 = vsel %vm2032, %v1749, 0
        %v2064 = vsel %vm2032, %v1750, 0
        %v2067 = vsel %vm2032, %v1751, 0
        %v2070 = vsel %vm2032, %v1752, 0
        %v2073 = vsel %vm2032, %v1753, 0
        %v2076 = vsel %vm2032, %v1754, 0
        %v2079 = vsel %vm2032, %v1755, 0
        %vm2081 = vcmask 1041408
        %v2083 = vsel %vm2081, %v2029, 0
        %2085 = vmatprep.subr.bf16.mxu0 0
        %2086 = vmatpush1.bf16.msra.mxu0 %v2027
        %2087 = vmatprep.subr.bf16.mxu0 0
        %2088 = vmatpush1.bf16.msra.mxu0 %v2028
        %2089 = vmatprep.subr.bf16.mxu0 0
        %2090 = vmatpush1.bf16.msra.mxu0 %v2083
        %2091 = vmatprep.subr.bf16.mxu0 0
        %2092 = vmatpush1.bf16.msra.mxu0 0
        %2093 = vmatprep.subr.bf16.mxu0 0
        %2094 = vmatpush1.bf16.msra.mxu0 0
        %2095 = vmatprep.subr.bf16.mxu0 0
        %2096 = vmatpush1.bf16.msra.mxu0 0
        %2097 = vmatprep.subr.bf16.mxu0 0
        %2098 = vmatpush1.bf16.msra.mxu0 0
        %2099 = vmatprep.subr.bf16.mxu0 0
        %2100 = vmatpush1.bf16.msra.mxu0 0
        %2101 = vmatprep.subr.bf16.mxu0 0
        %2102 = vmatpush1.bf16.msra.mxu0 0
        %2103 = vmatprep.subr.bf16.mxu0 0
        %2104 = vmatpush1.bf16.msra.mxu0 0
        %2105 = vmatprep.subr.bf16.mxu0 0
        %2106 = vmatpush1.bf16.msra.mxu0 0
        %2107 = vmatprep.subr.bf16.mxu0 0
        %2108 = vmatpush1.bf16.msra.mxu0 0
        %2109 = vmatprep.subr.bf16.mxu0 0
        %2110 = vmatpush1.bf16.msra.mxu0 0
        %2111 = vmatprep.subr.bf16.mxu0 0
        %2112 = vmatpush1.bf16.msra.mxu0 0
        %2113 = vmatprep.subr.bf16.mxu0 0
        %2114 = vmatpush1.bf16.msra.mxu0 0
        %2115 = vmatprep.subr.bf16.mxu0 0
        %2116 = vmatpush1.bf16.msra.mxu0 0
        %2117 = vmatprep.mubr.bf16.mxu0 0
        %2118 = vmatmul.mubr.bf16.gmra.mrb[0].mxu0 %v2034
        %v2119 = vpop.f32.mrb[0].mxu0
        %v2120 = vadd.f32 %v1985, %v2119
        %v2121 = vpop.f32.mrb[0].mxu0
        %v2122 = vpop.f32.mrb[0].mxu0
        %v2123 = vadd.f32 %v1986, %v2122
        %v2124 = vpop.f32.mrb[0].mxu0
        %2125 = vmatprep.mubr.bf16.mxu0 0
        %2126 = vmatmul.mubr.bf16.gmra.mrb[0].mxu0 %v2037
        %v2127 = vpop.f32.mrb[0].mxu0
        %v2128 = vadd.f32 %v1987, %v2127
        %v2129 = vpop.f32.mrb[0].mxu0
        %v2130 = vpop.f32.mrb[0].mxu0
        %v2131 = vadd.f32 %v1988, %v2130
        %v2132 = vpop.f32.mrb[0].mxu0
        %2133 = vmatprep.mubr.bf16.mxu0 0
        %2134 = vmatmul.mubr.bf16.gmra.mrb[0].mxu0 %v2040
        %v2135 = vpop.f32.mrb[0].mxu0
        %v2136 = vadd.f32 %v1989, %v2135
        %v2137 = vpop.f32.mrb[0].mxu0
        %v2138 = vpop.f32.mrb[0].mxu0
        %v2139 = vadd.f32 %v1990, %v2138
        %v2140 = vpop.f32.mrb[0].mxu0
        %2141 = vmatprep.mubr.bf16.mxu0 0
        %2142 = vmatmul.mubr.bf16.gmra.mrb[0].mxu0 %v2043
        %v2143 = vpop.f32.mrb[0].mxu0
        %v2144 = vadd.f32 %v1991, %v2143
        %v2145 = vpop.f32.mrb[0].mxu0
        %v2146 = vpop.f32.mrb[0].mxu0
        %v2147 = vadd.f32 %v1992, %v2146
        %v2148 = vpop.f32.mrb[0].mxu0
        %2149 = vmatprep.mubr.bf16.mxu0 0
        %2150 = vmatmul.mubr.bf16.gmra.mrb[0].mxu0 %v2046
        %v2151 = vpop.f32.mrb[0].mxu0
        %v2152 = vadd.f32 %v1993, %v2151
        %v2153 = vpop.f32.mrb[0].mxu0
        %v2154 = vpop.f32.mrb[0].mxu0
        %v2155 = vadd.f32 %v1994, %v2154
        %v2156 = vpop.f32.mrb[0].mxu0
        %2157 = vmatprep.mubr.bf16.mxu0 0
        %2158 = vmatmul.mubr.bf16.gmra.mrb[0].mxu0 %v2049
        %v2159 = vpop.f32.mrb[0].mxu0
        %v2160 = vadd.f32 %v1995, %v2159
        %v2161 = vpop.f32.mrb[0].mxu0
        %v2162 = vpop.f32.mrb[0].mxu0
        %v2163 = vadd.f32 %v1996, %v2162
        %v2164 = vpop.f32.mrb[0].mxu0
        %2165 = vmatprep.mubr.bf16.mxu0 0
        %2166 = vmatmul.mubr.bf16.gmra.mrb[0].mxu0 %v2052
        %v2167 = vpop.f32.mrb[0].mxu0
        %v2168 = vadd.f32 %v1997, %v2167
        %v2169 = vpop.f32.mrb[0].mxu0
        %v2170 = vpop.f32.mrb[0].mxu0
        %v2171 = vadd.f32 %v1998, %v2170
        %v2172 = vpop.f32.mrb[0].mxu0
        %2173 = vmatprep.mubr.bf16.mxu0 0
        %2174 = vmatmul.mubr.bf16.gmra.mrb[0].mxu0 %v2055
        %v2175 = vpop.f32.mrb[0].mxu0
        %v2176 = vadd.f32 %v1999, %v2175
        %v2177 = vpop.f32.mrb[0].mxu0
        %v2178 = vpop.f32.mrb[0].mxu0
        %v2179 = vadd.f32 %v2000, %v2178
        %v2180 = vpop.f32.mrb[0].mxu0
        %2181 = vmatprep.mubr.bf16.mxu0 0
        %2182 = vmatmul.mubr.bf16.gmra.mrb[0].mxu0 %v2058
        %v2183 = vpop.f32.mrb[0].mxu0
        %v2184 = vadd.f32 %v2001, %v2183
        %v2185 = vpop.f32.mrb[0].mxu0
        %v2186 = vpop.f32.mrb[0].mxu0
        %v2187 = vadd.f32 %v2002, %v2186
        %v2188 = vpop.f32.mrb[0].mxu0
        %2189 = vmatprep.mubr.bf16.mxu0 0
        %2190 = vmatmul.mubr.bf16.gmra.mrb[0].mxu0 %v2061
        %v2191 = vpop.f32.mrb[0].mxu0
        %v2192 = vadd.f32 %v2003, %v2191
        %v2193 = vpop.f32.mrb[0].mxu0
        %v2194 = vpop.f32.mrb[0].mxu0
        %v2195 = vadd.f32 %v2004, %v2194
        %v2196 = vpop.f32.mrb[0].mxu0
        %2197 = vmatprep.mubr.bf16.mxu0 0
        %2198 = vmatmul.mubr.bf16.gmra.mrb[0].mxu0 %v2064
        %v2199 = vpop.f32.mrb[0].mxu0
        %v2200 = vadd.f32 %v2005, %v2199
        %v2201 = vpop.f32.mrb[0].mxu0
        %v2202 = vpop.f32.mrb[0].mxu0
        %v2203 = vadd.f32 %v2006, %v2202
        %v2204 = vpop.f32.mrb[0].mxu0
        %2205 = vmatprep.mubr.bf16.mxu0 0
        %2206 = vmatmul.mubr.bf16.gmra.mrb[0].mxu0 %v2067
        %v2207 = vpop.f32.mrb[0].mxu0
        %v2208 = vadd.f32 %v2007, %v2207
        %v2209 = vpop.f32.mrb[0].mxu0
        %v2210 = vpop.f32.mrb[0].mxu0
        %v2211 = vadd.f32 %v2008, %v2210
        %v2212 = vpop.f32.mrb[0].mxu0
        %2213 = vmatprep.mubr.bf16.mxu0 0
        %2214 = vmatmul.mubr.bf16.gmra.mrb[0].mxu0 %v2070
        %v2215 = vpop.f32.mrb[0].mxu0
        %v2216 = vadd.f32 %v2009, %v2215
        %v2217 = vpop.f32.mrb[0].mxu0
        %v2218 = vpop.f32.mrb[0].mxu0
        %v2219 = vadd.f32 %v2010, %v2218
        %v2220 = vpop.f32.mrb[0].mxu0
        %2221 = vmatprep.mubr.bf16.mxu0 0
        %2222 = vmatmul.mubr.bf16.gmra.mrb[0].mxu0 %v2073
        %v2223 = vpop.f32.mrb[0].mxu0
        %v2224 = vadd.f32 %v2011, %v2223
        %v2225 = vpop.f32.mrb[0].mxu0
        %v2226 = vpop.f32.mrb[0].mxu0
        %v2227 = vadd.f32 %v2012, %v2226
        %v2228 = vpop.f32.mrb[0].mxu0
        %2229 = vmatprep.mubr.bf16.mxu0 0
        %2230 = vmatmul.mubr.bf16.gmra.mrb[0].mxu0 %v2076
        %v2231 = vpop.f32.mrb[0].mxu0
        %v2232 = vadd.f32 %v2013, %v2231
        %v2233 = vpop.f32.mrb[0].mxu0
        %v2234 = vpop.f32.mrb[0].mxu0
        %v2235 = vadd.f32 %v2014, %v2234
        %v2236 = vpop.f32.mrb[0].mxu0
        %2237 = vmatprep.mubr.bf16.mxu0 0
        %2238 = vmatmul.mubr.bf16.gmra.mrb[0].mxu0 %v2079
        %v2239 = vpop.f32.mrb[0].mxu0
        %v2240 = vadd.f32 %v2015, %v2239
        %v2241 = vpop.f32.mrb[0].mxu0
        %v2242 = vpop.f32.mrb[0].mxu0
        %v2243 = vadd.f32 %v2016, %v2242
        %v2244 = vpop.f32.mrb[0].mxu0
        %2245 = vdwg.mxu0
        %vm2246 = vcmp.ge.f32.partialorder %v2120, 0.0
        %vm2247 = vcmp.ge.f32.partialorder %v2123, 0.0
        %vm2248 = vcmp.ge.f32.partialorder %v2128, 0.0
        %vm2249 = vcmp.ge.f32.partialorder %v2131, 0.0
        %vm2250 = vcmp.ge.f32.partialorder %v2136, 0.0
        %vm2251 = vcmp.ge.f32.partialorder %v2139, 0.0
        %vm2252 = vcmp.ge.f32.partialorder %v2144, 0.0
        %vm2253 = vcmp.ge.f32.partialorder %v2147, 0.0
        %vm2254 = vcmp.ge.f32.partialorder %v2152, 0.0
        %vm2255 = vcmp.ge.f32.partialorder %v2155, 0.0
        %vm2256 = vcmp.ge.f32.partialorder %v2160, 0.0
        %vm2257 = vcmp.ge.f32.partialorder %v2163, 0.0
        %vm2258 = vcmp.ge.f32.partialorder %v2168, 0.0
        %vm2259 = vcmp.ge.f32.partialorder %v2171, 0.0
        %vm2260 = vcmp.ge.f32.partialorder %v2176, 0.0
        %vm2261 = vcmp.ge.f32.partialorder %v2179, 0.0
        %vm2262 = vcmp.ge.f32.partialorder %v2184, 0.0
        %vm2263 = vcmp.ge.f32.partialorder %v2187, 0.0
        %vm2264 = vcmp.ge.f32.partialorder %v2192, 0.0
        %vm2265 = vcmp.ge.f32.partialorder %v2195, 0.0
        %vm2266 = vcmp.ge.f32.partialorder %v2200, 0.0
        %vm2267 = vcmp.ge.f32.partialorder %v2203, 0.0
        %vm2268 = vcmp.ge.f32.partialorder %v2208, 0.0
        %vm2269 = vcmp.ge.f32.partialorder %v2211, 0.0
        %vm2270 = vcmp.ge.f32.partialorder %v2216, 0.0
        %vm2271 = vcmp.ge.f32.partialorder %v2219, 0.0
        %vm2272 = vcmp.ge.f32.partialorder %v2224, 0.0
        %vm2273 = vcmp.ge.f32.partialorder %v2227, 0.0
        %vm2274 = vcmp.ge.f32.partialorder %v2232, 0.0
        %vm2275 = vcmp.ge.f32.partialorder %v2235, 0.0
        %vm2276 = vcmp.ge.f32.partialorder %v2240, 0.0
        %vm2277 = vcmp.ge.f32.partialorder %v2243, 0.0
        %v2278 = vmul.f32 %v2120, 0.2
        %v2279 = vmul.f32 %v2123, 0.2
        %v2280 = vmul.f32 %v2128, 0.2
        %v2281 = vmul.f32 %v2131, 0.2
        %v2282 = vmul.f32 %v2136, 0.2
        %v2283 = vmul.f32 %v2139, 0.2
        %v2284 = vmul.f32 %v2144, 0.2
        %v2285 = vmul.f32 %v2147, 0.2
        %v2286 = vmul.f32 %v2152, 0.2
        %v2287 = vmul.f32 %v2155, 0.2
        %v2288 = vmul.f32 %v2160, 0.2
        %v2289 = vmul.f32 %v2163, 0.2
        %v2290 = vmul.f32 %v2168, 0.2
        %v2291 = vmul.f32 %v2171, 0.2
        %v2292 = vmul.f32 %v2176, 0.2
        %v2293 = vmul.f32 %v2179, 0.2
        %v2294 = vmul.f32 %v2184, 0.2
        %v2295 = vmul.f32 %v2187, 0.2
        %v2296 = vmul.f32 %v2192, 0.2
        %v2297 = vmul.f32 %v2195, 0.2
        %v2298 = vmul.f32 %v2200, 0.2
        %v2299 = vmul.f32 %v2203, 0.2
        %v2300 = vmul.f32 %v2208, 0.2
        %v2301 = vmul.f32 %v2211, 0.2
        %v2302 = vmul.f32 %v2216, 0.2
        %v2303 = vmul.f32 %v2219, 0.2
        %v2304 = vmul.f32 %v2224, 0.2
        %v2305 = vmul.f32 %v2227, 0.2
        %v2306 = vmul.f32 %v2232, 0.2
        %v2307 = vmul.f32 %v2235, 0.2
        %v2308 = vmul.f32 %v2240, 0.2
        %v2309 = vmul.f32 %v2243, 0.2
        %v2310 = vsel %vm2246, %v2120, %v2278
        %v2311 = vsel %vm2247, %v2123, %v2279
        %v2312 = vsel %vm2248, %v2128, %v2280
        %v2313 = vsel %vm2249, %v2131, %v2281
        %v2314 = vsel %vm2250, %v2136, %v2282
        %v2315 = vsel %vm2251, %v2139, %v2283
        %v2316 = vsel %vm2252, %v2144, %v2284
        %v2317 = vsel %vm2253, %v2147, %v2285
        %v2318 = vsel %vm2254, %v2152, %v2286
        %v2319 = vsel %vm2255, %v2155, %v2287
        %v2320 = vsel %vm2256, %v2160, %v2288
        %v2321 = vsel %vm2257, %v2163, %v2289
        %v2322 = vsel %vm2258, %v2168, %v2290
        %v2323 = vsel %vm2259, %v2171, %v2291
        %v2324 = vsel %vm2260, %v2176, %v2292
        %v2325 = vsel %vm2261, %v2179, %v2293
        %v2326 = vsel %vm2262, %v2184, %v2294
        %v2327 = vsel %vm2263, %v2187, %v2295
        %v2328 = vsel %vm2264, %v2192, %v2296
        %v2329 = vsel %vm2265, %v2195, %v2297
        %v2330 = vsel %vm2266, %v2200, %v2298
        %v2331 = vsel %vm2267, %v2203, %v2299
        %v2332 = vsel %vm2268, %v2208, %v2300
        %v2333 = vsel %vm2269, %v2211, %v2301
        %v2334 = vsel %vm2270, %v2216, %v2302
        %v2335 = vsel %vm2271, %v2219, %v2303
        %v2336 = vsel %vm2272, %v2224, %v2304
        %v2337 = vsel %vm2273, %v2227, %v2305
        %v2338 = vsel %vm2274, %v2232, %v2306
        %v2339 = vsel %vm2275, %v2235, %v2307
        %v2340 = vsel %vm2276, %v2240, %v2308
        %v2341 = vsel %vm2277, %v2243, %v2309
        %v2342 = vpack.c.bf16 %v2311, %v2310
        %v2343 = vpack.c.bf16 %v2313, %v2312
        %v2344 = vpack.c.bf16 %v2315, %v2314
        %v2345 = vpack.c.bf16 %v2317, %v2316
        %v2346 = vpack.c.bf16 %v2319, %v2318
        %v2347 = vpack.c.bf16 %v2321, %v2320
        %v2348 = vpack.c.bf16 %v2323, %v2322
        %v2349 = vpack.c.bf16 %v2325, %v2324
        %v2350 = vpack.c.bf16 %v2327, %v2326
        %v2351 = vpack.c.bf16 %v2329, %v2328
        %v2352 = vpack.c.bf16 %v2331, %v2330
        %v2353 = vpack.c.bf16 %v2333, %v2332
        %v2354 = vpack.c.bf16 %v2335, %v2334
        %v2355 = vpack.c.bf16 %v2337, %v2336
        %v2356 = vpack.c.bf16 %v2339, %v2338
        %v2357 = vpack.c.bf16 %v2341, %v2340
        %v2374 = vunpack.c.l.b16 %v2342
        %v2375 = vunpack.c.h.b16 %v2342
        %v2376 = vunpack.c.l.b16 %v2343
        %v2377 = vunpack.c.h.b16 %v2343
        %v2378 = vunpack.c.l.b16 %v2344
        %v2379 = vunpack.c.h.b16 %v2344
        %v2380 = vunpack.c.l.b16 %v2345
        %v2381 = vunpack.c.h.b16 %v2345
        %v2382 = vunpack.c.l.b16 %v2346
        %v2383 = vunpack.c.h.b16 %v2346
        %v2384 = vunpack.c.l.b16 %v2347
        %v2385 = vunpack.c.h.b16 %v2347
        %v2386 = vunpack.c.l.b16 %v2348
        %v2387 = vunpack.c.h.b16 %v2348
        %v2388 = vunpack.c.l.b16 %v2349
        %v2389 = vunpack.c.h.b16 %v2349
        %v2390 = vunpack.c.l.b16 %v2350
        %v2391 = vunpack.c.h.b16 %v2350
        %v2392 = vunpack.c.l.b16 %v2351
        %v2393 = vunpack.c.h.b16 %v2351
        %v2394 = vunpack.c.l.b16 %v2352
        %v2395 = vunpack.c.h.b16 %v2352
        %v2396 = vunpack.c.l.b16 %v2353
        %v2397 = vunpack.c.h.b16 %v2353
        %v2398 = vunpack.c.l.b16 %v2354
        %v2399 = vunpack.c.h.b16 %v2354
        %v2400 = vunpack.c.l.b16 %v2355
        %v2401 = vunpack.c.h.b16 %v2355
        %v2402 = vunpack.c.l.b16 %v2356
        %v2403 = vunpack.c.h.b16 %v2356
        %v2404 = vunpack.c.l.b16 %v2357
        %v2405 = vunpack.c.h.b16 %v2357
        %v2406 = vpack.c.b16 %v2374, %v2374
        %v2407 = vpack.c.b16 %v2375, %v2375
        %v2408 = vpack.c.b16 %v2376, %v2376
        %v2409 = vpack.c.b16 %v2377, %v2377
        %v2410 = vpack.c.b16 %v2378, %v2378
        %v2411 = vpack.c.b16 %v2379, %v2379
        %v2412 = vpack.c.b16 %v2380, %v2380
        %v2413 = vpack.c.b16 %v2381, %v2381
        %v2414 = vpack.c.b16 %v2382, %v2382
        %v2415 = vpack.c.b16 %v2383, %v2383
        %v2416 = vpack.c.b16 %v2384, %v2384
        %v2417 = vpack.c.b16 %v2385, %v2385
        %v2418 = vpack.c.b16 %v2386, %v2386
        %v2419 = vpack.c.b16 %v2387, %v2387
        %v2420 = vpack.c.b16 %v2388, %v2388
        %v2421 = vpack.c.b16 %v2389, %v2389
        %v2422 = vpack.c.b16 %v2390, %v2390
        %v2423 = vpack.c.b16 %v2391, %v2391
        %v2424 = vpack.c.b16 %v2392, %v2392
        %v2425 = vpack.c.b16 %v2393, %v2393
        %v2426 = vpack.c.b16 %v2394, %v2394
        %v2427 = vpack.c.b16 %v2395, %v2395
        %v2428 = vpack.c.b16 %v2396, %v2396
        %v2429 = vpack.c.b16 %v2397, %v2397
        %v2430 = vpack.c.b16 %v2398, %v2398
        %v2431 = vpack.c.b16 %v2399, %v2399
        %v2432 = vpack.c.b16 %v2400, %v2400
        %v2433 = vpack.c.b16 %v2401, %v2401
        %v2434 = vpack.c.b16 %v2402, %v2402
        %v2435 = vpack.c.b16 %v2403, %v2403
        %v2436 = vpack.c.b16 %v2404, %v2404
        %v2437 = vpack.c.b16 %v2405, %v2405
        %2470 = vst [vmem:[%s454] sm:$0xf] %v2406
        %2471 = vst [vmem:[%s454 + $0x4] sm:$0xf] %v2407
        %2472 = vst [vmem:[%s454 + $0x8] sm:$0xf] %v2408
        %2473 = vst [vmem:[%s454 + $0xc] sm:$0xf] %v2409
        %2474 = vst [vmem:[%s454 + $0x10] sm:$0xf] %v2410
        %2475 = vst [vmem:[%s454 + $0x14] sm:$0xf] %v2411
        %2476 = vst [vmem:[%s454 + $0x18] sm:$0xf] %v2412
        %2477 = vst [vmem:[%s454 + $0x1c] sm:$0xf] %v2413
        %2478 = vst [vmem:[%s454 + $0x20] sm:$0xf] %v2414
        %2479 = vst [vmem:[%s454 + $0x24] sm:$0xf] %v2415
        %2480 = vst [vmem:[%s454 + $0x28] sm:$0xf] %v2416
        %2481 = vst [vmem:[%s454 + $0x2c] sm:$0xf] %v2417
        %2482 = vst [vmem:[%s454 + $0x30] sm:$0xf] %v2418
        %2483 = vst [vmem:[%s454 + $0x34] sm:$0xf] %v2419
        %2484 = vst [vmem:[%s454 + $0x38] sm:$0xf] %v2420
        %2485 = vst [vmem:[%s454 + $0x3c] sm:$0xf] %v2421
        %2486 = vst [vmem:[%s454 + $0x40] sm:$0xf] %v2422
        %2487 = vst [vmem:[%s454 + $0x44] sm:$0xf] %v2423
        %2488 = vst [vmem:[%s454 + $0x48] sm:$0xf] %v2424
        %2489 = vst [vmem:[%s454 + $0x4c] sm:$0xf] %v2425
        %2490 = vst [vmem:[%s454 + $0x50] sm:$0xf] %v2426
        %2491 = vst [vmem:[%s454 + $0x54] sm:$0xf] %v2427
        %2492 = vst [vmem:[%s454 + $0x58] sm:$0xf] %v2428
        %2493 = vst [vmem:[%s454 + $0x5c] sm:$0xf] %v2429
        %2494 = vst [vmem:[%s454 + $0x60] sm:$0xf] %v2430
        %2495 = vst [vmem:[%s454 + $0x64] sm:$0xf] %v2431
        %2496 = vst [vmem:[%s454 + $0x68] sm:$0xf] %v2432
        %2497 = vst [vmem:[%s454 + $0x6c] sm:$0xf] %v2433
        %2498 = vst [vmem:[%s454 + $0x70] sm:$0xf] %v2434
        %2499 = vst [vmem:[%s454 + $0x74] sm:$0xf] %v2435
        %2500 = vst [vmem:[%s454 + $0x78] sm:$0xf] %v2436
        %2501 = vst [vmem:[%s454 + $0x7c] sm:$0xf] %v2437
        %s2502 = sand.u32 %s255, 1
        %s2503 = scalar_lea.sflag [#allocation5], %s2502
        %s2504 = sand.u32 %s255, 1
        %s2505 = smul.addr %s2504, 128
        %s2506 = scalar_lea.vmem [#allocation4], %s2505
        // Predicated region
        $region57: #{tpu_custom_call.1} parent=51 // pred_check
          %p2507 = pneg %p265
        $region58: #{tpu_custom_call.1} parent=51 // pred_check_branch
          %2509 = sbr.rel (%p2507) target = $region60
        $region59: #{tpu_custom_call.1} parent=51 // pred_region
          %s2510 = smul.u32 32, %s27
          %s2512 = ssub.s32 2048, 2048
          %2513 = vsyncadd %s2503, %s2512
          %s2514 = smul.addr %s26, 32
          %s2515 = sadd.s32 %s2510, %s2514
          %s2516 = smul.addr %s2515, 64
          %s2517 = scalar_lea.hbm %s8, %s2516
          %s2518 = sshll.u32 %s2506, 4
          %s2519 = int_to_ptr.vmem [resolvable:$true] %s2518
          %2524 = dma.vmem_to_hbm [thread:$0]  %s2519, 2048, %s2517, %s2503, 64, 64, 4
        $region60: #{tpu_custom_call.1} parent=51 // pred_fallthru
          _
      $region52: #{tpu_custom_call.1} parent=5 // pred_fallthru
        _
      %p2525 = scmp.le.s32.totalorder 2, %s17
      // Predicated region
      $region61: #{tpu_custom_call.1} parent=5 // pred_check
        %p2526 = pneg %p2525
      $region62: #{tpu_custom_call.1} parent=5 // pred_check_branch
        %2528 = sbr.rel (%p2526) target = $region64
      $region63: #{tpu_custom_call.1} parent=5 // pred_region
        %s2529 = ssub.s32 %s17, 2
        // Predicated region
        $region65: #{tpu_custom_call.1} parent=63 // pred_check
          %p2530 = pneg %p271
        $region66: #{tpu_custom_call.1} parent=63 // pred_check_branch
          %2532 = sbr.rel (%p2530) target = $region68
        $region67: #{tpu_custom_call.1} parent=63 // pred_region
          %s2533 = sand.u32 %s256, 1
          %s2534 = scalar_lea.sflag [#allocation5], %s2533
          %s2535 = sand.u32 %s256, 1
          %s2536 = smul.addr %s2535, 128
          %s2537 = scalar_lea.vmem [#allocation4], %s2536
          %2538 = dma.done %s2534, 2048
        $region68: #{tpu_custom_call.1} parent=63 // pred_fallthru
          _
      $region64: #{tpu_custom_call.1} parent=5 // pred_fallthru
        _
    $region6: #{tpu_custom_call.1} parent=1 // loop_footer
      %s21 = sadd.s32 1, %s17
    $region7: #{tpu_custom_call.1} parent=1 // loop_footer_branch
      %16 = sbr.rel target = $region3
    $region8: #{tpu_custom_call.1} parent=1 // loop_exit
      _
    %2539 = vsyncpa [#allocation5], 1
    %s2540 = scalar_lea.sflag [#allocation5], 1
    %2541 = vsyncpa %s2540, 1

</llo_original>
